<compile_context>
chip_gen: v6e
topology: v6e:2x2x1
jax: 0.10.0
libtpu: 0.0.40
codegen_flags: <defaults>
</compile_context>

<pallas_src>
import functools

import jax
import jax.numpy as jnp
from jax.experimental import pallas as pl
from jax.experimental.pallas import tpu as pltpu


def _round_up(x, m):
    return (x + m - 1) // m * m


def _pad_to(x, shape):
    return jnp.pad(x, [(0, s - d) for d, s in zip(x.shape, shape)])


# --------------------------- Pallas kernels -------------------------------- #

def _conv_mm_kernel(a_ref, w_ref, b_ref, o_ref):
    """(TM, Kp) bf16 @ (Kp, 128) bf16 + bias -> ReLU -> bf16 store."""
    acc = jnp.dot(a_ref[...], w_ref[...], preferred_element_type=jnp.float32)
    acc = jnp.maximum(acc + b_ref[...], 0.0)
    o_ref[...] = acc.astype(o_ref.dtype)


def _head_kernel(h_ref, w4_ref, b4_ref, w5_ref, b5_ref, o_ref, acc_ref):
    """Fused fc1 (K-tiled, f32 accumulator) + ReLU + fc2 + bias."""
    k = pl.program_id(0)

    @pl.when(k == 0)
    def _():
        acc_ref[...] = jnp.zeros_like(acc_ref)

    acc_ref[...] += jnp.dot(h_ref[...], w4_ref[...],
                            preferred_element_type=jnp.float32)

    @pl.when(k == pl.num_programs(0) - 1)
    def _():
        h1 = jnp.maximum(acc_ref[...] + b4_ref[...], 0.0).astype(jnp.bfloat16)
        q = jnp.dot(h1, w5_ref[...], preferred_element_type=jnp.float32)
        o_ref[...] = q + b5_ref[...]


# --------------------------- Pallas wrappers -------------------------------- #

def conv_mm(patches, w_p, b_p):
    """patches: (M, Kp) bf16, w_p: (Kp, 128) bf16, b_p: (1, 128) f32.

    Returns (M, 128) bf16 = relu(patches @ w_p + b_p). M-tiled "parallel" grid.
    """
    M, Kp = patches.shape
    TM = min(256, _round_up(M, 8))
    Mp = _round_up(M, TM)
    a = _pad_to(patches, (Mp, Kp))

    out = pl.pallas_call(
        _conv_mm_kernel,
        out_shape=jax.ShapeDtypeStruct((Mp, 128), jnp.bfloat16),
        grid=(Mp // TM,),
        in_specs=[
            pl.BlockSpec((TM, Kp), lambda i: (i, 0)),
            pl.BlockSpec((Kp, 128), lambda i: (0, 0)),
            pl.BlockSpec((1, 128), lambda i: (0, 0)),
        ],
        out_specs=pl.BlockSpec((TM, 128), lambda i: (i, 0)),
        compiler_params=pltpu.CompilerParams(
            dimension_semantics=("parallel",)),
    )(a, w_p, b_p)
    return out[:M]


def head_mm(h, w4_p, b4_p, w5_p, b5_p):
    """Fused fc1+ReLU+fc2.  h: (N, 3200) bf16 -> (N, 128) f32 (padded actions)."""
    N, Kp = h.shape
    TK = 640
    assert Kp % TK == 0

    return pl.pallas_call(
        _head_kernel,
        out_shape=jax.ShapeDtypeStruct((N, 128), jnp.float32),
        grid=(Kp // TK,),
        in_specs=[
            pl.BlockSpec((N, TK), lambda k: (0, k)),
            pl.BlockSpec((TK, 512), lambda k: (k, 0)),
            pl.BlockSpec((1, 512), lambda k: (0, 0)),
            pl.BlockSpec((512, 128), lambda k: (0, 0)),
            pl.BlockSpec((1, 128), lambda k: (0, 0)),
        ],
        out_specs=pl.BlockSpec((N, 128), lambda k: (0, 0)),
        scratch_shapes=[pltpu.VMEM((N, 512), jnp.float32)],
        compiler_params=pltpu.CompilerParams(
            dimension_semantics=("arbitrary",)),
    )(h, w4_p, b4_p, w5_p, b5_p)


# --------------------------- im2col (NHWC order) ---------------------------- #

def _im2col_nhwc(x, kh, kw, stride):
    """x: (N, H, W, C) -> (N*OH*OW, kh*kw*C), column order (i, j, c)."""
    N, H, W, C = x.shape
    OH = (H - kh) // stride + 1
    OW = (W - kw) // stride + 1
    slices = []
    for i in range(kh):
        for j in range(kw):
            slices.append(x[:, i:i + stride * (OH - 1) + 1:stride,
                              j:j + stride * (OW - 1) + 1:stride, :])
    p = jnp.stack(slices, axis=3)                     # (N, OH, OW, kh*kw, C)
    return p.reshape(N * OH * OW, kh * kw * C), OH, OW


# ------------------------------- parameters --------------------------------- #

def init_dqn_params(key, in_channels, num_actions):
    """PyTorch-default-style init (uniform +/- 1/sqrt(fan_in)), f32 NCHW/OC-major."""
    def uniform(k, shape, fan_in):
        bound = 1.0 / jnp.sqrt(jnp.float32(fan_in))
        return jax.random.uniform(k, shape, jnp.float32, -bound, bound)

    keys = jax.random.split(key, 10)
    p = {}
    fi = in_channels * 8 * 8
    p["w1"] = uniform(keys[0], (32, in_channels, 8, 8), fi)
    p["b1"] = uniform(keys[1], (32,), fi)
    fi = 32 * 4 * 4
    p["w2"] = uniform(keys[2], (64, 32, 4, 4), fi)
    p["b2"] = uniform(keys[3], (64,), fi)
    fi = 64 * 3 * 3
    p["w3"] = uniform(keys[4], (64, 64, 3, 3), fi)
    p["b3"] = uniform(keys[5], (64,), fi)
    p["w4"] = uniform(keys[6], (512, 3136), 3136)
    p["b4"] = uniform(keys[7], (512,), 3136)
    p["w5"] = uniform(keys[8], (num_actions, 512), 512)
    p["b5"] = uniform(keys[9], (num_actions,), 512)
    return p


def prepare_params(params):
    """One-time weight prep: transpose to matmul layout, pad to MXU tiles, cast bf16."""
    def conv_wb(w, b):
        oc, c, kh, kw = w.shape
        k = kh * kw * c
        kp = _round_up(k, 128)
        # (OC, C, KH, KW) -> rows ordered (i, j, c) to match NHWC im2col columns.
        wm = w.transpose(2, 3, 1, 0).reshape(k, oc)
        w_p = jnp.zeros((kp, 128), jnp.bfloat16).at[:k, :oc].set(
            wm.astype(jnp.bfloat16))
        b_p = jnp.zeros((1, 128), jnp.float32).at[0, :oc].set(
            b.astype(jnp.float32))
        return w_p, b_p

    prep = {}
    prep["w1"], prep["b1"] = conv_wb(params["w1"], params["b1"])
    prep["w2"], prep["b2"] = conv_wb(params["w2"], params["b2"])
    prep["w3"], prep["b3"] = conv_wb(params["w3"], params["b3"])

    # fc1: PyTorch flatten of NCHW (c*49 + h*7 + w) -> our (h*7 + w)*64 + c order.
    w4 = params["w4"].reshape(512, 64, 7, 7).transpose(0, 2, 3, 1)
    w4 = w4.reshape(512, 3136).T                               # (3136, 512)
    prep["w4"] = jnp.zeros((3200, 512), jnp.bfloat16).at[:3136, :].set(
        w4.astype(jnp.bfloat16))
    prep["b4"] = params["b4"].astype(jnp.float32).reshape(1, 512)

    a = params["w5"].shape[0]
    w5 = params["w5"].T                                        # (512, A)
    prep["w5"] = jnp.zeros((512, 128), jnp.bfloat16).at[:, :a].set(
        w5.astype(jnp.bfloat16))
    prep["b5"] = jnp.zeros((1, 128), jnp.float32).at[0, :a].set(
        params["b5"].astype(jnp.float32))
    return prep


# ------------------------------- forward ------------------------------------ #

def dqn_forward(prep, x, *, num_actions):
    """x: (N, C, 84, 84) NCHW f32 -> (N, num_actions) f32."""
    N = x.shape[0]
    h = x.transpose(0, 2, 3, 1).astype(jnp.bfloat16)           # NHWC bf16

    # conv1: 8x8 stride 4 -> (N, 20, 20, 32)
    p, OH, OW = _im2col_nhwc(h, 8, 8, 4)                       # (N*400, 256)
    out = conv_mm(p, prep["w1"], prep["b1"])
    h = out[:, :32].reshape(N, OH, OW, 32)

    # conv2: 4x4 stride 2 -> (N, 9, 9, 64)
    p, OH, OW = _im2col_nhwc(h, 4, 4, 2)                       # (N*81, 512)
    out = conv_mm(p, prep["w2"], prep["b2"])
    h = out[:, :64].reshape(N, OH, OW, 64)

    # conv3: 3x3 stride 1 -> (N, 7, 7, 64)
    p, OH, OW = _im2col_nhwc(h, 3, 3, 1)                       # (N*49, 576)
    p = _pad_to(p, (p.shape[0], 640))
    out = conv_mm(p, prep["w3"], prep["b3"])
    h = out[:, :64].reshape(N, OH * OW * 64)                   # (N, 3136), (h,w,c) order
    h = _pad_to(h, (N, 3200))

    # fused fc1 + ReLU + fc2
    q = head_mm(h, prep["w4"], prep["b4"], prep["w5"], prep["b5"])
    return q[:, :num_actions]


# --------------------------------- main -------------------------------------- #

if __name__ == "__main__":
    key = jax.random.PRNGKey(0)
    k_params, k_x = jax.random.split(key)

    batch, in_channels, num_actions = 2, 4, 4
    # 84x84 is implied by the module: Flatten -> Linear(3136, 512) with 64*7*7 = 3136.
    x = jax.random.normal(k_x, (batch, in_channels, 84, 84), jnp.float32)

    params = init_dqn_params(k_params, in_channels, num_actions)
    prep = prepare_params(params)          # one-time weight layout/pad/bf16 prep

    fwd = jax.jit(functools.partial(dqn_forward, num_actions=num_actions))
    q_values = fwd(prep, x)
    jax.block_until_ready(q_values)

    assert q_values.shape == (batch, num_actions)
    assert q_values.dtype == jnp.float32
    assert bool(jnp.all(jnp.isfinite(q_values)))
    print("KERNEL_OK")
</pallas_src>

<mosaic_0001>
module attributes {stable_mosaic.version = 11 : i64} {
  func.func @_conv_mm_kernel(%arg0: i32, %arg1: memref<256x256xbf16, #tpu.memory_space<vmem>>, %arg2: memref<256x128xbf16, #tpu.memory_space<vmem>>, %arg3: memref<1x128xf32, #tpu.memory_space<vmem>>, %arg4: memref<256x128xbf16, #tpu.memory_space<vmem>>) attributes {dimension_semantics = [#tpu.dimension_semantics<parallel>], iteration_bounds = array<i64: 4>, scalar_prefetch = 0 : i64, scratch_operands = 0 : i64, tpu.core_type = #tpu.core_type<tc>, window_params = [{transform_indices = @transform_0, window_bounds = array<i64: 256, 256>}, {pipeline_mode = #tpu.pipeline_mode<synchronous>, transform_indices = @transform_1, window_bounds = array<i64: 256, 128>}, {pipeline_mode = #tpu.pipeline_mode<synchronous>, transform_indices = @transform_2, window_bounds = array<i64: 1, 128>}, {transform_indices = @transform_3, window_bounds = array<i64: 256, 128>}]} {
    %c0 = arith.constant 0 : index
    %c0_0 = arith.constant 0 : index
    %0 = vector.load %arg1[%c0, %c0_0] : memref<256x256xbf16, #tpu.memory_space<vmem>>, vector<256x256xbf16>
    %c0_1 = arith.constant 0 : index
    %c0_2 = arith.constant 0 : index
    %1 = vector.load %arg2[%c0_1, %c0_2] : memref<256x128xbf16, #tpu.memory_space<vmem>>, vector<256x128xbf16>
    %cst = arith.constant dense<0.000000e+00> : vector<256x128xf32>
    %2 = tpu.matmul %0, %1, %cst {dimension_numbers = #tpu.dot_dimension_numbers<[1], [0], [0], [1], [0, 0, 1, 1], [], []>} : vector<256x256xbf16>, vector<256x128xbf16>, vector<256x128xf32> -> vector<256x128xf32>
    %c0_3 = arith.constant 0 : index
    %c0_4 = arith.constant 0 : index
    %3 = vector.load %arg3[%c0_3, %c0_4] : memref<1x128xf32, #tpu.memory_space<vmem>>, vector<1x128xf32>
    %4 = vector.broadcast %3 : vector<1x128xf32> to vector<256x128xf32>
    %5 = arith.addf %2, %4 : vector<256x128xf32>
    %cst_5 = arith.constant 0.000000e+00 : f32
    %6 = vector.broadcast %cst_5 : f32 to vector<256x128xf32>
    %7 = arith.maximumf %5, %6 : vector<256x128xf32>
    %8 = arith.truncf %7 : vector<256x128xf32> to vector<256x128xbf16>
    %c0_6 = arith.constant 0 : index
    %c0_7 = arith.constant 0 : index
    %9 = vector.load %arg4[%c0_6, %c0_7] : memref<256x128xbf16, #tpu.memory_space<vmem>>, vector<256x128xbf16>
    tpu.vector_store %arg4[%c0_6, %c0_7], %8 {strides = array<i32>} : memref<256x128xbf16, #tpu.memory_space<vmem>>, vector<256x128xbf16>,
    return
  }
  func.func @transform_0(%arg0: i32) -> (i32, i32) {
    %c0_i32 = arith.constant 0 : i32
    %c0_i32_0 = arith.constant 0 : i32
    return %arg0, %c0_i32 : i32, i32
  }
  func.func @transform_1(%arg0: i32) -> (i32, i32) {
    %c0_i32 = arith.constant 0 : i32
    %c0_i32_0 = arith.constant 0 : i32
    %c0_i32_1 = arith.constant 0 : i32
    return %c0_i32, %c0_i32_0 : i32, i32
  }
  func.func @transform_2(%arg0: i32) -> (i32, i32) {
    %c0_i32 = arith.constant 0 : i32
    %c0_i32_0 = arith.constant 0 : i32
    %c0_i32_1 = arith.constant 0 : i32
    return %c0_i32, %c0_i32_0 : i32, i32
  }
  func.func @transform_3(%arg0: i32) -> (i32, i32) {
    %c0_i32 = arith.constant 0 : i32
    %c0_i32_0 = arith.constant 0 : i32
    return %arg0, %c0_i32 : i32, i32
  }
}

module attributes {stable_mosaic.version = 11 : i64} {
  func.func @_conv_mm_kernel(%arg0: i32, %arg1: memref<168x512xbf16, #tpu.memory_space<vmem>>, %arg2: memref<512x128xbf16, #tpu.memory_space<vmem>>, %arg3: memref<1x128xf32, #tpu.memory_space<vmem>>, %arg4: memref<168x128xbf16, #tpu.memory_space<vmem>>) attributes {dimension_semantics = [#tpu.dimension_semantics<parallel>], iteration_bounds = array<i64: 1>, scalar_prefetch = 0 : i64, scratch_operands = 0 : i64, tpu.core_type = #tpu.core_type<tc>, window_params = [{transform_indices = @transform_0, window_bounds = array<i64: 168, 512>}, {pipeline_mode = #tpu.pipeline_mode<synchronous>, transform_indices = @transform_1, window_bounds = array<i64: 512, 128>}, {pipeline_mode = #tpu.pipeline_mode<synchronous>, transform_indices = @transform_2, window_bounds = array<i64: 1, 128>}, {transform_indices = @transform_3, window_bounds = array<i64: 168, 128>}]} {
    %c0 = arith.constant 0 : index
    %c0_0 = arith.constant 0 : index
    %0 = vector.load %arg1[%c0, %c0_0] : memref<168x512xbf16, #tpu.memory_space<vmem>>, vector<168x512xbf16>
    %c0_1 = arith.constant 0 : index
    %c0_2 = arith.constant 0 : index
    %1 = vector.load %arg2[%c0_1, %c0_2] : memref<512x128xbf16, #tpu.memory_space<vmem>>, vector<512x128xbf16>
    %cst = arith.constant dense<0.000000e+00> : vector<168x128xf32>
    %2 = tpu.matmul %0, %1, %cst {dimension_numbers = #tpu.dot_dimension_numbers<[1], [0], [0], [1], [0, 0, 1, 1], [], []>} : vector<168x512xbf16>, vector<512x128xbf16>, vector<168x128xf32> -> vector<168x128xf32>
    %c0_3 = arith.constant 0 : index
    %c0_4 = arith.constant 0 : index
    %3 = vector.load %arg3[%c0_3, %c0_4] : memref<1x128xf32, #tpu.memory_space<vmem>>, vector<1x128xf32>
    %4 = vector.broadcast %3 : vector<1x128xf32> to vector<168x128xf32>
    %5 = arith.addf %2, %4 : vector<168x128xf32>
    %cst_5 = arith.constant 0.000000e+00 : f32
    %6 = vector.broadcast %cst_5 : f32 to vector<168x128xf32>
    %7 = arith.maximumf %5, %6 : vector<168x128xf32>
    %8 = arith.truncf %7 : vector<168x128xf32> to vector<168x128xbf16>
    %c0_6 = arith.constant 0 : index
    %c0_7 = arith.constant 0 : index
    %9 = vector.load %arg4[%c0_6, %c0_7] : memref<168x128xbf16, #tpu.memory_space<vmem>>, vector<168x128xbf16>
    tpu.vector_store %arg4[%c0_6, %c0_7], %8 {strides = array<i32>} : memref<168x128xbf16, #tpu.memory_space<vmem>>, vector<168x128xbf16>,
    return
  }
  func.func @transform_0(%arg0: i32) -> (i32, i32) {
    %c0_i32 = arith.constant 0 : i32
    %c0_i32_0 = arith.constant 0 : i32
    return %arg0, %c0_i32 : i32, i32
  }
  func.func @transform_1(%arg0: i32) -> (i32, i32) {
    %c0_i32 = arith.constant 0 : i32
    %c0_i32_0 = arith.constant 0 : i32
    %c0_i32_1 = arith.constant 0 : i32
    return %c0_i32, %c0_i32_0 : i32, i32
  }
  func.func @transform_2(%arg0: i32) -> (i32, i32) {
    %c0_i32 = arith.constant 0 : i32
    %c0_i32_0 = arith.constant 0 : i32
    %c0_i32_1 = arith.constant 0 : i32
    return %c0_i32, %c0_i32_0 : i32, i32
  }
  func.func @transform_3(%arg0: i32) -> (i32, i32) {
    %c0_i32 = arith.constant 0 : i32
    %c0_i32_0 = arith.constant 0 : i32
    return %arg0, %c0_i32 : i32, i32
  }
}

module attributes {stable_mosaic.version = 11 : i64} {
  func.func @_conv_mm_kernel(%arg0: i32, %arg1: memref<104x640xbf16, #tpu.memory_space<vmem>>, %arg2: memref<640x128xbf16, #tpu.memory_space<vmem>>, %arg3: memref<1x128xf32, #tpu.memory_space<vmem>>, %arg4: memref<104x128xbf16, #tpu.memory_space<vmem>>) attributes {dimension_semantics = [#tpu.dimension_semantics<parallel>], iteration_bounds = array<i64: 1>, scalar_prefetch = 0 : i64, scratch_operands = 0 : i64, tpu.core_type = #tpu.core_type<tc>, window_params = [{transform_indices = @transform_0, window_bounds = array<i64: 104, 640>}, {pipeline_mode = #tpu.pipeline_mode<synchronous>, transform_indices = @transform_1, window_bounds = array<i64: 640, 128>}, {pipeline_mode = #tpu.pipeline_mode<synchronous>, transform_indices = @transform_2, window_bounds = array<i64: 1, 128>}, {transform_indices = @transform_3, window_bounds = array<i64: 104, 128>}]} {
    %c0 = arith.constant 0 : index
    %c0_0 = arith.constant 0 : index
    %0 = vector.load %arg1[%c0, %c0_0] : memref<104x640xbf16, #tpu.memory_space<vmem>>, vector<104x640xbf16>
    %c0_1 = arith.constant 0 : index
    %c0_2 = arith.constant 0 : index
    %1 = vector.load %arg2[%c0_1, %c0_2] : memref<640x128xbf16, #tpu.memory_space<vmem>>, vector<640x128xbf16>
    %cst = arith.constant dense<0.000000e+00> : vector<104x128xf32>
    %2 = tpu.matmul %0, %1, %cst {dimension_numbers = #tpu.dot_dimension_numbers<[1], [0], [0], [1], [0, 0, 1, 1], [], []>} : vector<104x640xbf16>, vector<640x128xbf16>, vector<104x128xf32> -> vector<104x128xf32>
    %c0_3 = arith.constant 0 : index
    %c0_4 = arith.constant 0 : index
    %3 = vector.load %arg3[%c0_3, %c0_4] : memref<1x128xf32, #tpu.memory_space<vmem>>, vector<1x128xf32>
    %4 = vector.broadcast %3 : vector<1x128xf32> to vector<104x128xf32>
    %5 = arith.addf %2, %4 : vector<104x128xf32>
    %cst_5 = arith.constant 0.000000e+00 : f32
    %6 = vector.broadcast %cst_5 : f32 to vector<104x128xf32>
    %7 = arith.maximumf %5, %6 : vector<104x128xf32>
    %8 = arith.truncf %7 : vector<104x128xf32> to vector<104x128xbf16>
    %c0_6 = arith.constant 0 : index
    %c0_7 = arith.constant 0 : index
    %9 = vector.load %arg4[%c0_6, %c0_7] : memref<104x128xbf16, #tpu.memory_space<vmem>>, vector<104x128xbf16>
    tpu.vector_store %arg4[%c0_6, %c0_7], %8 {strides = array<i32>} : memref<104x128xbf16, #tpu.memory_space<vmem>>, vector<104x128xbf16>,
    return
  }
  func.func @transform_0(%arg0: i32) -> (i32, i32) {
    %c0_i32 = arith.constant 0 : i32
    %c0_i32_0 = arith.constant 0 : i32
    return %arg0, %c0_i32 : i32, i32
  }
  func.func @transform_1(%arg0: i32) -> (i32, i32) {
    %c0_i32 = arith.constant 0 : i32
    %c0_i32_0 = arith.constant 0 : i32
    %c0_i32_1 = arith.constant 0 : i32
    return %c0_i32, %c0_i32_0 : i32, i32
  }
  func.func @transform_2(%arg0: i32) -> (i32, i32) {
    %c0_i32 = arith.constant 0 : i32
    %c0_i32_0 = arith.constant 0 : i32
    %c0_i32_1 = arith.constant 0 : i32
    return %c0_i32, %c0_i32_0 : i32, i32
  }
  func.func @transform_3(%arg0: i32) -> (i32, i32) {
    %c0_i32 = arith.constant 0 : i32
    %c0_i32_0 = arith.constant 0 : i32
    return %arg0, %c0_i32 : i32, i32
  }
}

module attributes {stable_mosaic.version = 11 : i64} {
  func.func @_head_kernel(%arg0: i32, %arg1: memref<2x640xbf16, #tpu.memory_space<vmem>>, %arg2: memref<640x512xbf16, #tpu.memory_space<vmem>>, %arg3: memref<1x512xf32, #tpu.memory_space<vmem>>, %arg4: memref<512x128xbf16, #tpu.memory_space<vmem>>, %arg5: memref<1x128xf32, #tpu.memory_space<vmem>>, %arg6: memref<2x128xf32, #tpu.memory_space<vmem>>, %arg7: memref<2x512xf32, #tpu.memory_space<vmem>>) attributes {dimension_semantics = [#tpu.dimension_semantics<arbitrary>], iteration_bounds = array<i64: 5>, scalar_prefetch = 0 : i64, scratch_operands = 1 : i64, tpu.core_type = #tpu.core_type<tc>, window_params = [{transform_indices = @transform_0, window_bounds = array<i64: 2, 640>}, {transform_indices = @transform_1, window_bounds = array<i64: 640, 512>}, {pipeline_mode = #tpu.pipeline_mode<synchronous>, transform_indices = @transform_2, window_bounds = array<i64: 1, 512>}, {pipeline_mode = #tpu.pipeline_mode<synchronous>, transform_indices = @transform_3, window_bounds = array<i64: 512, 128>}, {pipeline_mode = #tpu.pipeline_mode<synchronous>, transform_indices = @transform_4, window_bounds = array<i64: 1, 128>}, {pipeline_mode = #tpu.pipeline_mode<synchronous>, transform_indices = @transform_5, window_bounds = array<i64: 2, 128>}]} {
    %c0_i32 = arith.constant 0 : i32
    %0 = arith.cmpi eq, %arg0, %c0_i32 : i32
    %1 = arith.extui %0 : i1 to i32
    %c0_i32_0 = arith.constant 0 : i32
    %2 = arith.cmpi ne, %1, %c0_i32_0 : i32
    scf.if %2 {
      %cst_9 = arith.constant 0.000000e+00 : f32
      %12 = vector.broadcast %cst_9 : f32 to vector<2x512xf32>
      %c0_10 = arith.constant 0 : index
      %c0_11 = arith.constant 0 : index
      %13 = vector.load %arg7[%c0_10, %c0_11] : memref<2x512xf32, #tpu.memory_space<vmem>>, vector<2x512xf32>
      tpu.vector_store %arg7[%c0_10, %c0_11], %12 {strides = array<i32>} : memref<2x512xf32, #tpu.memory_space<vmem>>, vector<2x512xf32>,
    } else {
    }
    %c0 = arith.constant 0 : index
    %c0_1 = arith.constant 0 : index
    %3 = vector.load %arg7[%c0, %c0_1] : memref<2x512xf32, #tpu.memory_space<vmem>>, vector<2x512xf32>
    %c0_2 = arith.constant 0 : index
    %c0_3 = arith.constant 0 : index
    %4 = vector.load %arg1[%c0_2, %c0_3] : memref<2x640xbf16, #tpu.memory_space<vmem>>, vector<2x640xbf16>
    %c0_4 = arith.constant 0 : index
    %c0_5 = arith.constant 0 : index
    %5 = vector.load %arg2[%c0_4, %c0_5] : memref<640x512xbf16, #tpu.memory_space<vmem>>, vector<640x512xbf16>
    %cst = arith.constant dense<0.000000e+00> : vector<2x512xf32>
    %6 = tpu.matmul %4, %5, %cst {dimension_numbers = #tpu.dot_dimension_numbers<[1], [0], [0], [1], [0, 0, 1, 1], [], []>} : vector<2x640xbf16>, vector<640x512xbf16>, vector<2x512xf32> -> vector<2x512xf32>
    %7 = arith.addf %3, %6 : vector<2x512xf32>
    %c0_6 = arith.constant 0 : index
    %c0_7 = arith.constant 0 : index
    %8 = vector.load %arg7[%c0_6, %c0_7] : memref<2x512xf32, #tpu.memory_space<vmem>>, vector<2x512xf32>
    tpu.vector_store %arg7[%c0_6, %c0_7], %7 {strides = array<i32>} : memref<2x512xf32, #tpu.memory_space<vmem>>, vector<2x512xf32>,
    %c4_i32 = arith.constant 4 : i32
    %9 = arith.cmpi eq, %arg0, %c4_i32 : i32
    %10 = arith.extui %9 : i1 to i32
    %c0_i32_8 = arith.constant 0 : i32
    %11 = arith.cmpi ne, %10, %c0_i32_8 : i32
    scf.if %11 {
      %c0_9 = arith.constant 0 : index
      %c0_10 = arith.constant 0 : index
      %12 = vector.load %arg7[%c0_9, %c0_10] : memref<2x512xf32, #tpu.memory_space<vmem>>, vector<2x512xf32>
      %c0_11 = arith.constant 0 : index
      %c0_12 = arith.constant 0 : index
      %13 = vector.load %arg3[%c0_11, %c0_12] : memref<1x512xf32, #tpu.memory_space<vmem>>, vector<1x512xf32>
      %14 = vector.broadcast %13 : vector<1x512xf32> to vector<2x512xf32>
      %15 = arith.addf %12, %14 : vector<2x512xf32>
      %cst_13 = arith.constant 0.000000e+00 : f32
      %16 = vector.broadcast %cst_13 : f32 to vector<2x512xf32>
      %17 = arith.maximumf %15, %16 : vector<2x512xf32>
      %18 = arith.truncf %17 : vector<2x512xf32> to vector<2x512xbf16>
      %c0_14 = arith.constant 0 : index
      %c0_15 = arith.constant 0 : index
      %19 = vector.load %arg4[%c0_14, %c0_15] : memref<512x128xbf16, #tpu.memory_space<vmem>>, vector<512x128xbf16>
      %cst_16 = arith.constant dense<0.000000e+00> : vector<2x128xf32>
      %20 = tpu.matmul %18, %19, %cst_16 {dimension_numbers = #tpu.dot_dimension_numbers<[1], [0], [0], [1], [0, 0, 1, 1], [], []>} : vector<2x512xbf16>, vector<512x128xbf16>, vector<2x128xf32> -> vector<2x128xf32>
      %c0_17 = arith.constant 0 : index
      %c0_18 = arith.constant 0 : index
      %21 = vector.load %arg5[%c0_17, %c0_18] : memref<1x128xf32, #tpu.memory_space<vmem>>, vector<1x128xf32>
      %22 = vector.broadcast %21 : vector<1x128xf32> to vector<2x128xf32>
      %23 = arith.addf %20, %22 : vector<2x128xf32>
      %c0_19 = arith.constant 0 : index
      %c0_20 = arith.constant 0 : index
      %24 = vector.load %arg6[%c0_19, %c0_20] : memref<2x128xf32, #tpu.memory_space<vmem>>, vector<2x128xf32>
      tpu.vector_store %arg6[%c0_19, %c0_20], %23 {strides = array<i32>} : memref<2x128xf32, #tpu.memory_space<vmem>>, vector<2x128xf32>,
    } else {
    }
    return
  }
  func.func @transform_0(%arg0: i32) -> (i32, i32) {
    %c0_i32 = arith.constant 0 : i32
    %c0_i32_0 = arith.constant 0 : i32
    return %c0_i32, %arg0 : i32, i32
  }
  func.func @transform_1(%arg0: i32) -> (i32, i32) {
    %c0_i32 = arith.constant 0 : i32
    %c0_i32_0 = arith.constant 0 : i32
    return %arg0, %c0_i32 : i32, i32
  }
  func.func @transform_2(%arg0: i32) -> (i32, i32) {
    %c0_i32 = arith.constant 0 : i32
    %c0_i32_0 = arith.constant 0 : i32
    %c0_i32_1 = arith.constant 0 : i32
    return %c0_i32, %c0_i32_0 : i32, i32
  }
  func.func @transform_3(%arg0: i32) -> (i32, i32) {
    %c0_i32 = arith.constant 0 : i32
    %c0_i32_0 = arith.constant 0 : i32
    %c0_i32_1 = arith.constant 0 : i32
    return %c0_i32, %c0_i32_0 : i32, i32
  }
  func.func @transform_4(%arg0: i32) -> (i32, i32) {
    %c0_i32 = arith.constant 0 : i32
    %c0_i32_0 = arith.constant 0 : i32
    %c0_i32_1 = arith.constant 0 : i32
    return %c0_i32, %c0_i32_0 : i32, i32
  }
  func.func @transform_5(%arg0: i32) -> (i32, i32) {
    %c0_i32 = arith.constant 0 : i32
    %c0_i32_0 = arith.constant 0 : i32
    %c0_i32_1 = arith.constant 0 : i32
    return %c0_i32, %c0_i32_0 : i32, i32
  }
}

</mosaic_0001>

<llo_original>
// kernel: dqn_forward.4
$region0: #{dqn_forward.4}
  #allocation0 [shape = 'u32[]', space=smem, size = 0x4, offset = 0x4, fixed_abs, tag = 'smem constant byte address 0x4 - core index']
  #allocation1 [shape = 'u32[144,128]{1,0:T(1,128)}', space=vmem, size = 0x12000, scoped, tag = 'internal scratch']
  %s0 = inlined_call_operand.vmem [shape: bf16[1024,256], index: 0, kind: input, shape index: {}]
  %s1 = inlined_call_operand.vmem [shape: bf16[256,128], index: 1, kind: input, shape index: {}]
  %s2 = inlined_call_operand.vmem [shape: f32[1,128], index: 2, kind: input, shape index: {}]
  %s3 = inlined_call_operand.vmem [shape: bf16[1024,128], index: 3, kind: output, shape index: {}]
  %s4 = sld [smem:[#allocation0]]
  $region45: #{dqn_forward.4} parent=0
    _
  %s6 = ssub.s32 1, %s4
  %s7 = scalar_select 0, %s6, %s4
  loop: start=0, step=1, limit=6
  $region2: #{dqn_forward.4} parent=0 // loop_pre_header
    _
  $region3: #{dqn_forward.4} parent=0 // loop_header
    %s9 = sphi 0, %s13
    %p10 = scmp.ge.s32.totalorder %s9, 6
    %s19 = sphi 0, %s21
    %s22 = sphi 0, %s19
    %s23 = sphi 0, %s22
    %s39 = sphi 0, %s23
    %s43 = sphi 0, %s43
    %s45 = sphi 0, %s43
    %s46 = sphi 0, %s45
    %s60 = sphi 0, %s46
    %s64 = sphi 0, %s64
    %s66 = sphi 0, %s64
    %s67 = sphi 0, %s66
    %s81 = sphi 0, %s67
    %s87 = sphi 0, %s89
    %s90 = sphi 0, %s87
    %s91 = sphi 0, %s90
    %s107 = sphi 0, %s91
  $region4: #{dqn_forward.4} parent=0 // loop_header_branch
    %12 = sbr.rel (%p10) target = $region8
  $region5: #{dqn_forward.4} parent=0 // loop_body
    %s14 = ssub.s32 %s9, 1
    %s15 = ssub.s32 %s9, 2
    %s16 = sadd.s32 %s9, 1
    %s17 = ssub.s32 %s9, %s16
    %p18 = scmp.eq.s32.totalorder %s17, 0
    %s20 = sadd.s32 %s19, 1
    %s21 = scalar_select %p18, %s19, %s20
    %p24 = pneg %p18
    %p25 = scmp.eq.s32.totalorder %s9, 3
    %p26 = por %p24, %p25
    %p27 = scmp.ne.s32.totalorder %s19, %s22
    %p28 = scmp.eq.s32.totalorder %s9, 0
    %p29 = por %p27, %p28
    %p30 = scmp.ne.s32.totalorder %s19, %s22
    %p31 = scmp.eq.s32.totalorder %s14, 3
    %p32 = por %p30, %p31
    %p33 = scmp.ne.s32.totalorder %s22, %s23
    %p34 = scmp.eq.s32.totalorder %s14, 0
    %p35 = por %p33, %p34
    %p36 = scmp.ne.s32.totalorder %s22, %s23
    %p37 = scmp.eq.s32.totalorder %s15, 3
    %p38 = por %p36, %p37
    %p40 = scmp.ne.s32.totalorder %s23, %s39
    %p41 = scmp.eq.s32.totalorder %s15, 0
    %p42 = por %p40, %p41
    %s44 = sadd.s32 %s43, 1
    %p47 = scmp.eq.s32.totalorder %s9, 3
    %p48 = scmp.ne.s32.totalorder %s43, %s45
    %p49 = scmp.eq.s32.totalorder %s9, 0
    %p50 = por %p48, %p49
    %p51 = scmp.ne.s32.totalorder %s43, %s45
    %p52 = scmp.eq.s32.totalorder %s14, 3
    %p53 = por %p51, %p52
    %p54 = scmp.ne.s32.totalorder %s45, %s46
    %p55 = scmp.eq.s32.totalorder %s14, 0
    %p56 = por %p54, %p55
    %p57 = scmp.ne.s32.totalorder %s45, %s46
    %p58 = scmp.eq.s32.totalorder %s15, 3
    %p59 = por %p57, %p58
    %p61 = scmp.ne.s32.totalorder %s46, %s60
    %p62 = scmp.eq.s32.totalorder %s15, 0
    %p63 = por %p61, %p62
    %s65 = sadd.s32 %s64, 1
    %p68 = scmp.eq.s32.totalorder %s9, 3
    %p69 = scmp.ne.s32.totalorder %s64, %s66
    %p70 = scmp.eq.s32.totalorder %s9, 0
    %p71 = por %p69, %p70
    %p72 = scmp.ne.s32.totalorder %s64, %s66
    %p73 = scmp.eq.s32.totalorder %s14, 3
    %p74 = por %p72, %p73
    %p75 = scmp.ne.s32.totalorder %s66, %s67
    %p76 = scmp.eq.s32.totalorder %s14, 0
    %p77 = por %p75, %p76
    %p78 = scmp.ne.s32.totalorder %s66, %s67
    %p79 = scmp.eq.s32.totalorder %s15, 3
    %p80 = por %p78, %p79
    %p82 = scmp.ne.s32.totalorder %s67, %s81
    %p83 = scmp.eq.s32.totalorder %s15, 0
    %p84 = por %p82, %p83
    %s85 = ssub.s32 %s9, %s16
    %p86 = scmp.eq.s32.totalorder %s85, 0
    %s88 = sadd.s32 %s87, 1
    %s89 = scalar_select %p86, %s87, %s88
    %p92 = pneg %p86
    %p93 = scmp.eq.s32.totalorder %s9, 3
    %p94 = por %p92, %p93
    %p95 = scmp.ne.s32.totalorder %s87, %s90
    %p96 = scmp.eq.s32.totalorder %s9, 0
    %p97 = por %p95, %p96
    %p98 = scmp.ne.s32.totalorder %s87, %s90
    %p99 = scmp.eq.s32.totalorder %s14, 3
    %p100 = por %p98, %p99
    %p101 = scmp.ne.s32.totalorder %s90, %s91
    %p102 = scmp.eq.s32.totalorder %s14, 0
    %p103 = por %p101, %p102
    %p104 = scmp.ne.s32.totalorder %s90, %s91
    %p105 = scmp.eq.s32.totalorder %s15, 3
    %p106 = por %p104, %p105
    %p108 = scmp.ne.s32.totalorder %s91, %s107
    %p109 = scmp.eq.s32.totalorder %s15, 0
    %p110 = por %p108, %p109
    %p111 = scmp.le.s32.totalorder 1, %s9
    %p112 = scmp.lt.s32.totalorder %s9, 5
    %p113 = pnand %p111, %p112
    %p114 = pneg %p113
    // Predicated region
    $region9: #{dqn_forward.4} parent=5 // pred_check
      _
    $region10: #{dqn_forward.4} parent=5 // pred_check_branch
      %116 = sbr.rel (%p113) target = $region12
    $region11: #{dqn_forward.4} parent=5 // pred_region
      %s117 = ssub.s32 %s9, 1
      // Predicated region
      $region13: #{dqn_forward.4} parent=11 // pred_check
        %p118 = pneg %p56
      $region14: #{dqn_forward.4} parent=11 // pred_check_branch
        %120 = sbr.rel (%p118) target = $region16
      $region15: #{dqn_forward.4} parent=11 // pred_region
        _
      $region16: #{dqn_forward.4} parent=11 // pred_fallthru
        _
      // Predicated region
      $region17: #{dqn_forward.4} parent=11 // pred_check
        %p121 = pneg %p77
      $region18: #{dqn_forward.4} parent=11 // pred_check_branch
        %123 = sbr.rel (%p121) target = $region20
      $region19: #{dqn_forward.4} parent=11 // pred_region
        _
      $region20: #{dqn_forward.4} parent=11 // pred_fallthru
        _
    $region12: #{dqn_forward.4} parent=5 // pred_fallthru
      _
    %p124 = scmp.lt.s32.totalorder %s9, 4
    // Predicated region
    $region21: #{dqn_forward.4} parent=5 // pred_check
      %p125 = pneg %p124
    $region22: #{dqn_forward.4} parent=5 // pred_check_branch
      %127 = sbr.rel (%p125) target = $region24
    $region23: #{dqn_forward.4} parent=5 // pred_region
      // Predicated region
      $region25: #{dqn_forward.4} parent=23 // pred_check
        %p128 = pneg %p29
      $region26: #{dqn_forward.4} parent=23 // pred_check_branch
        %130 = sbr.rel (%p128) target = $region28
      $region27: #{dqn_forward.4} parent=23 // pred_region
        %s131 = smul.u32 32, %s9
        %p132 = scmp.lt.s32.totalorder %s131, 127
        %s133 = scalar_select %p132, %s131, 127
        %s134 = smul.addr %s133, 2
        %s135 = smul.addr %s134, 4
        %s136 = scalar_lea.vmem %s0, %s135
        %s137 = smul.u32 32, %s9
      $region28: #{dqn_forward.4} parent=23 // pred_fallthru
        _
    $region24: #{dqn_forward.4} parent=5 // pred_fallthru
      _
    %p138 = scmp.le.s32.totalorder 1, %s9
    %p139 = scmp.lt.s32.totalorder %s9, 5
    %p140 = pnand %p138, %p139
    %p141 = pneg %p140
    // Predicated region
    $region29: #{dqn_forward.4} parent=5 // pred_check
      _
    $region30: #{dqn_forward.4} parent=5 // pred_check_branch
      %143 = sbr.rel (%p140) target = $region32
    $region31: #{dqn_forward.4} parent=5 // pred_region
      %s144 = ssub.s32 %s9, 1
      %s145 = smul.u32 32, %s14
      %p146 = scmp.lt.s32.totalorder %s145, 127
      %s147 = scalar_select %p146, %s145, 127
      %s148 = smul.addr %s147, 2
      %s149 = smul.addr %s148, 4
      %s150 = scalar_lea.vmem %s0, %s149
      %p151 = pneg %p35
      %p152 = pneg %p32
      %p153 = pneg %p56
      %p154 = pneg %p53
      %p155 = pneg %p77
      %p156 = pneg %p74
      %p157 = pneg %p103
      %p158 = pneg %p100
      %s159 = smul.u32 32, %s14
      %p160 = scmp.lt.s32.totalorder %s159, 127
      %s161 = scalar_select %p160, %s159, 127
      %s162 = smul.addr %s161, 4
      %s163 = scalar_lea.vmem %s3, %s162
      %s164 = smul.u32 32, %s14
      %p165 = scmp.lt.s32.totalorder %s164, 127
      %s166 = scalar_select %p165, %s164, 127
      %s167 = smul.addr %s166, 2
      %s168 = smul.addr %s167, 4
      %s169 = scalar_lea.vmem %s0, %s168
      %s170 = smul.u32 32, %s14
      %s171 = smul.u32 32, %s14
      %p172 = scmp.lt.s32.totalorder %s171, 127
      %s173 = scalar_select %p172, %s171, 127
      %s174 = smul.addr %s173, 4
      %s175 = scalar_lea.vmem %s3, %s174
      %s176 = smul.u32 32, %s14
      %v178 = vld [vmem:[%s169] sm:$0xff]
      %v179 = vld [vmem:[%s169 + $0x8] sm:$0xff]
      %v180 = vld [vmem:[%s169 + $0x10] sm:$0xff]
      %v181 = vld [vmem:[%s169 + $0x18] sm:$0xff]
      %v182 = vld [vmem:[%s169 + $0x20] sm:$0xff]
      %v183 = vld [vmem:[%s169 + $0x28] sm:$0xff]
      %v184 = vld [vmem:[%s169 + $0x30] sm:$0xff]
      %v185 = vld [vmem:[%s169 + $0x38] sm:$0xff]
      %v186 = vld [vmem:[%s169 + $0x40] sm:$0xff]
      %v187 = vld [vmem:[%s169 + $0x48] sm:$0xff]
      %v188 = vld [vmem:[%s169 + $0x50] sm:$0xff]
      %v189 = vld [vmem:[%s169 + $0x58] sm:$0xff]
      %v190 = vld [vmem:[%s169 + $0x60] sm:$0xff]
      %v191 = vld [vmem:[%s169 + $0x68] sm:$0xff]
      %v192 = vld [vmem:[%s169 + $0x70] sm:$0xff]
      %v193 = vld [vmem:[%s169 + $0x78] sm:$0xff]
      %v194 = vld [vmem:[%s169 + $0x80] sm:$0xff]
      %v195 = vld [vmem:[%s169 + $0x88] sm:$0xff]
      %v196 = vld [vmem:[%s169 + $0x90] sm:$0xff]
      %v197 = vld [vmem:[%s169 + $0x98] sm:$0xff]
      %v198 = vld [vmem:[%s169 + $0xa0] sm:$0xff]
      %v199 = vld [vmem:[%s169 + $0xa8] sm:$0xff]
      %v200 = vld [vmem:[%s169 + $0xb0] sm:$0xff]
      %v201 = vld [vmem:[%s169 + $0xb8] sm:$0xff]
      %v202 = vld [vmem:[%s169 + $0xc0] sm:$0xff]
      %v203 = vld [vmem:[%s169 + $0xc8] sm:$0xff]
      %v204 = vld [vmem:[%s169 + $0xd0] sm:$0xff]
      %v205 = vld [vmem:[%s169 + $0xd8] sm:$0xff]
      %v206 = vld [vmem:[%s169 + $0xe0] sm:$0xff]
      %v207 = vld [vmem:[%s169 + $0xe8] sm:$0xff]
      %v208 = vld [vmem:[%s169 + $0xf0] sm:$0xff]
      %v209 = vld [vmem:[%s169 + $0xf8] sm:$0xff]
      %v210 = vld [vmem:[%s1] sm:$0xf]
      %v211 = vld [vmem:[%s1 + $0x4] sm:$0xf]
      %v212 = vld [vmem:[%s1 + $0x8] sm:$0xf]
      %v213 = vld [vmem:[%s1 + $0xc] sm:$0xf]
      %v214 = vld [vmem:[%s1 + $0x10] sm:$0xf]
      %v215 = vld [vmem:[%s1 + $0x14] sm:$0xf]
      %v216 = vld [vmem:[%s1 + $0x18] sm:$0xf]
      %v217 = vld [vmem:[%s1 + $0x1c] sm:$0xf]
      %v218 = vld [vmem:[%s1 + $0x20] sm:$0xf]
      %v219 = vld [vmem:[%s1 + $0x24] sm:$0xf]
      %v220 = vld [vmem:[%s1 + $0x28] sm:$0xf]
      %v221 = vld [vmem:[%s1 + $0x2c] sm:$0xf]
      %v222 = vld [vmem:[%s1 + $0x30] sm:$0xf]
      %v223 = vld [vmem:[%s1 + $0x34] sm:$0xf]
      %v224 = vld [vmem:[%s1 + $0x38] sm:$0xf]
      %v225 = vld [vmem:[%s1 + $0x3c] sm:$0xf]
      %v226 = vld [vmem:[%s1 + $0x40] sm:$0xf]
      %v227 = vld [vmem:[%s1 + $0x44] sm:$0xf]
      %v228 = vld [vmem:[%s1 + $0x48] sm:$0xf]
      %v229 = vld [vmem:[%s1 + $0x4c] sm:$0xf]
      %v230 = vld [vmem:[%s1 + $0x50] sm:$0xf]
      %v231 = vld [vmem:[%s1 + $0x54] sm:$0xf]
      %v232 = vld [vmem:[%s1 + $0x58] sm:$0xf]
      %v233 = vld [vmem:[%s1 + $0x5c] sm:$0xf]
      %v234 = vld [vmem:[%s1 + $0x60] sm:$0xf]
      %v235 = vld [vmem:[%s1 + $0x64] sm:$0xf]
      %v236 = vld [vmem:[%s1 + $0x68] sm:$0xf]
      %v237 = vld [vmem:[%s1 + $0x6c] sm:$0xf]
      %v238 = vld [vmem:[%s1 + $0x70] sm:$0xf]
      %v239 = vld [vmem:[%s1 + $0x74] sm:$0xf]
      %v240 = vld [vmem:[%s1 + $0x78] sm:$0xf]
      %v241 = vld [vmem:[%s1 + $0x7c] sm:$0xf]
      %v242 = vld [vmem:[%s2] sm:$0x1]
      %v244 = vlaneseq
      %v245 = vshrl.u32 %v244, 7
      %v246 = vsub.s32 0, %v245
      %v247 = vrot.slane %v242, %v246
      %v281 = vunpack.c.l.b16 %v178
      %v282 = vunpack.c.h.b16 %v178
      %v283 = vunpack.c.l.b16 %v179
      %v284 = vunpack.c.h.b16 %v179
      %v285 = vunpack.c.l.b16 %v180
      %v286 = vunpack.c.h.b16 %v180
      %v287 = vunpack.c.l.b16 %v181
      %v288 = vunpack.c.h.b16 %v181
      %v289 = vunpack.c.l.b16 %v182
      %v290 = vunpack.c.h.b16 %v182
      %v291 = vunpack.c.l.b16 %v183
      %v292 = vunpack.c.h.b16 %v183
      %v293 = vunpack.c.l.b16 %v184
      %v294 = vunpack.c.h.b16 %v184
      %v295 = vunpack.c.l.b16 %v185
      %v296 = vunpack.c.h.b16 %v185
      %v297 = vunpack.c.l.b16 %v186
      %v298 = vunpack.c.h.b16 %v186
      %v299 = vunpack.c.l.b16 %v187
      %v300 = vunpack.c.h.b16 %v187
      %v301 = vunpack.c.l.b16 %v188
      %v302 = vunpack.c.h.b16 %v188
      %v303 = vunpack.c.l.b16 %v189
      %v304 = vunpack.c.h.b16 %v189
      %v305 = vunpack.c.l.b16 %v190
      %v306 = vunpack.c.h.b16 %v190
      %v307 = vunpack.c.l.b16 %v191
      %v308 = vunpack.c.h.b16 %v191
      %v309 = vunpack.c.l.b16 %v192
      %v310 = vunpack.c.h.b16 %v192
      %v311 = vunpack.c.l.b16 %v193
      %v312 = vunpack.c.h.b16 %v193
      %v313 = vunpack.c.l.b16 %v194
      %v314 = vunpack.c.h.b16 %v194
      %v315 = vunpack.c.l.b16 %v195
      %v316 = vunpack.c.h.b16 %v195
      %v317 = vunpack.c.l.b16 %v196
      %v318 = vunpack.c.h.b16 %v196
      %v319 = vunpack.c.l.b16 %v197
      %v320 = vunpack.c.h.b16 %v197
      %v321 = vunpack.c.l.b16 %v198
      %v322 = vunpack.c.h.b16 %v198
      %v323 = vunpack.c.l.b16 %v199
      %v324 = vunpack.c.h.b16 %v199
      %v325 = vunpack.c.l.b16 %v200
      %v326 = vunpack.c.h.b16 %v200
      %v327 = vunpack.c.l.b16 %v201
      %v328 = vunpack.c.h.b16 %v201
      %v329 = vunpack.c.l.b16 %v202
      %v330 = vunpack.c.h.b16 %v202
      %v331 = vunpack.c.l.b16 %v203
      %v332 = vunpack.c.h.b16 %v203
      %v333 = vunpack.c.l.b16 %v204
      %v334 = vunpack.c.h.b16 %v204
      %v335 = vunpack.c.l.b16 %v205
      %v336 = vunpack.c.h.b16 %v205
      %v337 = vunpack.c.l.b16 %v206
      %v338 = vunpack.c.h.b16 %v206
      %v339 = vunpack.c.l.b16 %v207
      %v340 = vunpack.c.h.b16 %v207
      %v341 = vunpack.c.l.b16 %v208
      %v342 = vunpack.c.h.b16 %v208
      %v343 = vunpack.c.l.b16 %v209
      %v344 = vunpack.c.h.b16 %v209
      %v345 = vpack.c.b16 %v283, %v281
      %v346 = vpack.c.b16 %v284, %v282
      %v347 = vpack.c.b16 %v287, %v285
      %v348 = vpack.c.b16 %v288, %v286
      %v349 = vpack.c.b16 %v291, %v289
      %v350 = vpack.c.b16 %v292, %v290
      %v351 = vpack.c.b16 %v295, %v293
      %v352 = vpack.c.b16 %v296, %v294
      %v353 = vpack.c.b16 %v299, %v297
      %v354 = vpack.c.b16 %v300, %v298
      %v355 = vpack.c.b16 %v303, %v301
      %v356 = vpack.c.b16 %v304, %v302
      %v357 = vpack.c.b16 %v307, %v305
      %v358 = vpack.c.b16 %v308, %v306
      %v359 = vpack.c.b16 %v311, %v309
      %v360 = vpack.c.b16 %v312, %v310
      %v361 = vpack.c.b16 %v315, %v313
      %v362 = vpack.c.b16 %v316, %v314
      %v363 = vpack.c.b16 %v319, %v317
      %v364 = vpack.c.b16 %v320, %v318
      %v365 = vpack.c.b16 %v323, %v321
      %v366 = vpack.c.b16 %v324, %v322
      %v367 = vpack.c.b16 %v327, %v325
      %v368 = vpack.c.b16 %v328, %v326
      %v369 = vpack.c.b16 %v331, %v329
      %v370 = vpack.c.b16 %v332, %v330
      %v371 = vpack.c.b16 %v335, %v333
      %v372 = vpack.c.b16 %v336, %v334
      %v373 = vpack.c.b16 %v339, %v337
      %v374 = vpack.c.b16 %v340, %v338
      %v375 = vpack.c.b16 %v343, %v341
      %v376 = vpack.c.b16 %v344, %v342
      %v441 = vunpack.c.l.b16 %v210
      %v442 = vunpack.c.l.b16 %v211
      %v443 = vunpack.c.l.b16 %v212
      %v444 = vunpack.c.l.b16 %v213
      %v445 = vunpack.c.l.b16 %v214
      %v446 = vunpack.c.l.b16 %v215
      %v447 = vunpack.c.l.b16 %v216
      %v448 = vunpack.c.l.b16 %v217
      %v449 = vunpack.c.l.b16 %v218
      %v450 = vunpack.c.l.b16 %v219
      %v451 = vunpack.c.l.b16 %v220
      %v452 = vunpack.c.l.b16 %v221
      %v453 = vunpack.c.l.b16 %v222
      %v454 = vunpack.c.l.b16 %v223
      %v455 = vunpack.c.l.b16 %v224
      %v456 = vunpack.c.l.b16 %v225
      %v457 = vunpack.c.l.b16 %v226
      %v458 = vunpack.c.l.b16 %v227
      %v459 = vunpack.c.l.b16 %v228
      %v460 = vunpack.c.l.b16 %v229
      %v461 = vunpack.c.l.b16 %v230
      %v462 = vunpack.c.l.b16 %v231
      %v463 = vunpack.c.l.b16 %v232
      %v464 = vunpack.c.l.b16 %v233
      %v465 = vunpack.c.l.b16 %v234
      %v466 = vunpack.c.l.b16 %v235
      %v467 = vunpack.c.l.b16 %v236
      %v468 = vunpack.c.l.b16 %v237
      %v469 = vunpack.c.l.b16 %v238
      %v470 = vunpack.c.l.b16 %v239
      %v471 = vunpack.c.l.b16 %v240
      %v472 = vunpack.c.l.b16 %v241
      %v473 = vpack.c.b16 %v442, %v441
      %v474 = vpack.c.b16 %v444, %v443
      %v475 = vpack.c.b16 %v446, %v445
      %v476 = vpack.c.b16 %v448, %v447
      %v477 = vpack.c.b16 %v450, %v449
      %v478 = vpack.c.b16 %v452, %v451
      %v479 = vpack.c.b16 %v454, %v453
      %v480 = vpack.c.b16 %v456, %v455
      %v481 = vpack.c.b16 %v458, %v457
      %v482 = vpack.c.b16 %v460, %v459
      %v483 = vpack.c.b16 %v462, %v461
      %v484 = vpack.c.b16 %v464, %v463
      %v485 = vpack.c.b16 %v466, %v465
      %v486 = vpack.c.b16 %v468, %v467
      %v487 = vpack.c.b16 %v470, %v469
      %v488 = vpack.c.b16 %v472, %v471
      %505 = vmatprep.subr.bf16.mxu0 0
      %506 = vmatpush1.bf16.msra.mxu0 %v480
      %507 = vmatprep.subr.bf16.mxu0 0
      %508 = vmatpush1.bf16.msra.mxu0 %v479
      %509 = vmatprep.subr.bf16.mxu0 0
      %510 = vmatpush1.bf16.msra.mxu0 %v478
      %511 = vmatprep.subr.bf16.mxu0 0
      %512 = vmatpush1.bf16.msra.mxu0 %v477
      %513 = vmatprep.subr.bf16.mxu0 0
      %514 = vmatpush1.bf16.msra.mxu0 %v476
      %515 = vmatprep.subr.bf16.mxu0 0
      %516 = vmatpush1.bf16.msra.mxu0 %v475
      %517 = vmatprep.subr.bf16.mxu0 0
      %518 = vmatpush1.bf16.msra.mxu0 %v474
      %519 = vmatprep.subr.bf16.mxu0 0
      %520 = vmatpush1.bf16.msra.mxu0 %v473
      %521 = vmatprep.subr.bf16.mxu0 0
      %522 = vmatpush2.bf16.msra.mxu0 %v488
      %523 = vmatprep.subr.bf16.mxu0 0
      %524 = vmatpush2.bf16.msra.mxu0 %v487
      %525 = vmatprep.subr.bf16.mxu0 0
      %526 = vmatpush2.bf16.msra.mxu0 %v486
      %527 = vmatprep.subr.bf16.mxu0 0
      %528 = vmatpush2.bf16.msra.mxu0 %v485
      %529 = vmatprep.subr.bf16.mxu0 0
      %530 = vmatpush2.bf16.msra.mxu0 %v484
      %531 = vmatprep.subr.bf16.mxu0 0
      %532 = vmatpush2.bf16.msra.mxu0 %v483
      %533 = vmatprep.subr.bf16.mxu0 0
      %534 = vmatpush2.bf16.msra.mxu0 %v482
      %535 = vmatprep.subr.bf16.mxu0 0
      %536 = vmatpush2.bf16.msra.mxu0 %v481
      %537 = vmatprep.mubr.bf16.mxu0 %v346
      %538 = vmatmul.mubr.bf16.gmra.mxu0 %v345
      %v539 = vpop.f32.mrf.mxu0
      %v540 = vadd.f32 %v247, %v539
      %v541 = vpop.f32.mrf.mxu0
      %v542 = vpop.f32.mrf.mxu0
      %v543 = vadd.f32 %v247, %v542
      %v544 = vpop.f32.mrf.mxu0
      %545 = vmatprep.mubr.bf16.mxu0 %v348
      %546 = vmatmul.mubr.bf16.gmra.mxu0 %v347
      %v547 = vpop.f32.mrf.mxu0
      %v548 = vadd.f32 %v247, %v547
      %v549 = vpop.f32.mrf.mxu0
      %v550 = vpop.f32.mrf.mxu0
      %v551 = vadd.f32 %v247, %v550
      %v552 = vpop.f32.mrf.mxu0
      %553 = vmatprep.mubr.bf16.mxu0 %v350
      %554 = vmatmul.mubr.bf16.gmra.mxu0 %v349
      %v555 = vpop.f32.mrf.mxu0
      %v556 = vadd.f32 %v247, %v555
      %v557 = vpop.f32.mrf.mxu0
      %v558 = vpop.f32.mrf.mxu0
      %v559 = vadd.f32 %v247, %v558
      %v560 = vpop.f32.mrf.mxu0
      %561 = vmatprep.mubr.bf16.mxu0 %v352
      %562 = vmatmul.mubr.bf16.gmra.mxu0 %v351
      %v563 = vpop.f32.mrf.mxu0
      %v564 = vadd.f32 %v247, %v563
      %v565 = vpop.f32.mrf.mxu0
      %v566 = vpop.f32.mrf.mxu0
      %v567 = vadd.f32 %v247, %v566
      %v568 = vpop.f32.mrf.mxu0
      %569 = vmatprep.mubr.bf16.mxu0 %v354
      %570 = vmatmul.mubr.bf16.gmra.mxu0 %v353
      %v571 = vpop.f32.mrf.mxu0
      %v572 = vadd.f32 %v247, %v571
      %v573 = vpop.f32.mrf.mxu0
      %v574 = vpop.f32.mrf.mxu0
      %v575 = vadd.f32 %v247, %v574
      %v576 = vpop.f32.mrf.mxu0
      %577 = vmatprep.mubr.bf16.mxu0 %v356
      %578 = vmatmul.mubr.bf16.gmra.mxu0 %v355
      %v579 = vpop.f32.mrf.mxu0
      %v580 = vadd.f32 %v247, %v579
      %v581 = vpop.f32.mrf.mxu0
      %v582 = vpop.f32.mrf.mxu0
      %v583 = vadd.f32 %v247, %v582
      %v584 = vpop.f32.mrf.mxu0
      %585 = vmatprep.mubr.bf16.mxu0 %v358
      %586 = vmatmul.mubr.bf16.gmra.mxu0 %v357
      %v587 = vpop.f32.mrf.mxu0
      %v588 = vadd.f32 %v247, %v587
      %v589 = vpop.f32.mrf.mxu0
      %v590 = vpop.f32.mrf.mxu0
      %v591 = vadd.f32 %v247, %v590
      %v592 = vpop.f32.mrf.mxu0
      %593 = vmatprep.mubr.bf16.mxu0 %v360
      %594 = vmatmul.mubr.bf16.gmra.mxu0 %v359
      %v595 = vpop.f32.mrf.mxu0
      %v596 = vadd.f32 %v247, %v595
      %v597 = vpop.f32.mrf.mxu0
      %v598 = vpop.f32.mrf.mxu0
      %v599 = vadd.f32 %v247, %v598
      %v600 = vpop.f32.mrf.mxu0
      %601 = vmatprep.mubr.bf16.mxu0 %v362
      %602 = vmatmul.mubr.bf16.gmra.mxu0 %v361
      %v603 = vpop.f32.mrf.mxu0
      %v604 = vadd.f32 %v247, %v603
      %v605 = vpop.f32.mrf.mxu0
      %v606 = vpop.f32.mrf.mxu0
      %v607 = vadd.f32 %v247, %v606
      %v608 = vpop.f32.mrf.mxu0
      %609 = vmatprep.mubr.bf16.mxu0 %v364
      %610 = vmatmul.mubr.bf16.gmra.mxu0 %v363
      %v611 = vpop.f32.mrf.mxu0
      %v612 = vadd.f32 %v247, %v611
      %v613 = vpop.f32.mrf.mxu0
      %v614 = vpop.f32.mrf.mxu0
      %v615 = vadd.f32 %v247, %v614
      %v616 = vpop.f32.mrf.mxu0
      %617 = vmatprep.mubr.bf16.mxu0 %v366
      %618 = vmatmul.mubr.bf16.gmra.mxu0 %v365
      %v619 = vpop.f32.mrf.mxu0
      %v620 = vadd.f32 %v247, %v619
      %v621 = vpop.f32.mrf.mxu0
      %v622 = vpop.f32.mrf.mxu0
      %v623 = vadd.f32 %v247, %v622
      %v624 = vpop.f32.mrf.mxu0
      %625 = vmatprep.mubr.bf16.mxu0 %v368
      %626 = vmatmul.mubr.bf16.gmra.mxu0 %v367
      %v627 = vpop.f32.mrf.mxu0
      %v628 = vadd.f32 %v247, %v627
      %v629 = vpop.f32.mrf.mxu0
      %v630 = vpop.f32.mrf.mxu0
      %v631 = vadd.f32 %v247, %v630
      %v632 = vpop.f32.mrf.mxu0
      %633 = vmatprep.mubr.bf16.mxu0 %v370
      %634 = vmatmul.mubr.bf16.gmra.mxu0 %v369
      %v635 = vpop.f32.mrf.mxu0
      %v636 = vadd.f32 %v247, %v635
      %v637 = vpop.f32.mrf.mxu0
      %v638 = vpop.f32.mrf.mxu0
      %v639 = vadd.f32 %v247, %v638
      %v640 = vpop.f32.mrf.mxu0
      %641 = vmatprep.mubr.bf16.mxu0 %v372
      %642 = vmatmul.mubr.bf16.gmra.mxu0 %v371
      %v643 = vpop.f32.mrf.mxu0
      %v644 = vadd.f32 %v247, %v643
      %v645 = vpop.f32.mrf.mxu0
      %v646 = vpop.f32.mrf.mxu0
      %v647 = vadd.f32 %v247, %v646
      %v648 = vpop.f32.mrf.mxu0
      %649 = vmatprep.mubr.bf16.mxu0 %v374
      %650 = vmatmul.mubr.bf16.gmra.mxu0 %v373
      %v651 = vpop.f32.mrf.mxu0
      %v652 = vadd.f32 %v247, %v651
      %v653 = vpop.f32.mrf.mxu0
      %v654 = vpop.f32.mrf.mxu0
      %v655 = vadd.f32 %v247, %v654
      %v656 = vpop.f32.mrf.mxu0
      %657 = vmatprep.mubr.bf16.mxu0 %v376
      %658 = vmatmul.mubr.bf16.gmra.mxu0 %v375
      %v659 = vpop.f32.mrf.mxu0
      %v660 = vadd.f32 %v247, %v659
      %v661 = vpop.f32.mrf.mxu0
      %v662 = vpop.f32.mrf.mxu0
      %v663 = vadd.f32 %v247, %v662
      %v664 = vpop.f32.mrf.mxu0
      %665 = vdwg.mxu0
      %v666 = vmax.f32 %v540, 0.0
      %v667 = vmax.f32 %v543, 0.0
      %v668 = vmax.f32 %v548, 0.0
      %v669 = vmax.f32 %v551, 0.0
      %v670 = vmax.f32 %v556, 0.0
      %v671 = vmax.f32 %v559, 0.0
      %v672 = vmax.f32 %v564, 0.0
      %v673 = vmax.f32 %v567, 0.0
      %v674 = vmax.f32 %v572, 0.0
      %v675 = vmax.f32 %v575, 0.0
      %v676 = vmax.f32 %v580, 0.0
      %v677 = vmax.f32 %v583, 0.0
      %v678 = vmax.f32 %v588, 0.0
      %v679 = vmax.f32 %v591, 0.0
      %v680 = vmax.f32 %v596, 0.0
      %v681 = vmax.f32 %v599, 0.0
      %v682 = vmax.f32 %v604, 0.0
      %v683 = vmax.f32 %v607, 0.0
      %v684 = vmax.f32 %v612, 0.0
      %v685 = vmax.f32 %v615, 0.0
      %v686 = vmax.f32 %v620, 0.0
      %v687 = vmax.f32 %v623, 0.0
      %v688 = vmax.f32 %v628, 0.0
      %v689 = vmax.f32 %v631, 0.0
      %v690 = vmax.f32 %v636, 0.0
      %v691 = vmax.f32 %v639, 0.0
      %v692 = vmax.f32 %v644, 0.0
      %v693 = vmax.f32 %v647, 0.0
      %v694 = vmax.f32 %v652, 0.0
      %v695 = vmax.f32 %v655, 0.0
      %v696 = vmax.f32 %v660, 0.0
      %v697 = vmax.f32 %v663, 0.0
      %v698 = vpack.c.bf16 %v667, %v666
      %v699 = vpack.c.bf16 %v669, %v668
      %v700 = vpack.c.bf16 %v671, %v670
      %v701 = vpack.c.bf16 %v673, %v672
      %v702 = vpack.c.bf16 %v675, %v674
      %v703 = vpack.c.bf16 %v677, %v676
      %v704 = vpack.c.bf16 %v679, %v678
      %v705 = vpack.c.bf16 %v681, %v680
      %v706 = vpack.c.bf16 %v683, %v682
      %v707 = vpack.c.bf16 %v685, %v684
      %v708 = vpack.c.bf16 %v687, %v686
      %v709 = vpack.c.bf16 %v689, %v688
      %v710 = vpack.c.bf16 %v691, %v690
      %v711 = vpack.c.bf16 %v693, %v692
      %v712 = vpack.c.bf16 %v695, %v694
      %v713 = vpack.c.bf16 %v697, %v696
      %v730 = vunpack.c.l.b16 %v698
      %v731 = vunpack.c.h.b16 %v698
      %v732 = vunpack.c.l.b16 %v699
      %v733 = vunpack.c.h.b16 %v699
      %v734 = vunpack.c.l.b16 %v700
      %v735 = vunpack.c.h.b16 %v700
      %v736 = vunpack.c.l.b16 %v701
      %v737 = vunpack.c.h.b16 %v701
      %v738 = vunpack.c.l.b16 %v702
      %v739 = vunpack.c.h.b16 %v702
      %v740 = vunpack.c.l.b16 %v703
      %v741 = vunpack.c.h.b16 %v703
      %v742 = vunpack.c.l.b16 %v704
      %v743 = vunpack.c.h.b16 %v704
      %v744 = vunpack.c.l.b16 %v705
      %v745 = vunpack.c.h.b16 %v705
      %v746 = vunpack.c.l.b16 %v706
      %v747 = vunpack.c.h.b16 %v706
      %v748 = vunpack.c.l.b16 %v707
      %v749 = vunpack.c.h.b16 %v707
      %v750 = vunpack.c.l.b16 %v708
      %v751 = vunpack.c.h.b16 %v708
      %v752 = vunpack.c.l.b16 %v709
      %v753 = vunpack.c.h.b16 %v709
      %v754 = vunpack.c.l.b16 %v710
      %v755 = vunpack.c.h.b16 %v710
      %v756 = vunpack.c.l.b16 %v711
      %v757 = vunpack.c.h.b16 %v711
      %v758 = vunpack.c.l.b16 %v712
      %v759 = vunpack.c.h.b16 %v712
      %v760 = vunpack.c.l.b16 %v713
      %v761 = vunpack.c.h.b16 %v713
      %v762 = vpack.c.b16 %v730, %v730
      %v763 = vpack.c.b16 %v731, %v731
      %v764 = vpack.c.b16 %v732, %v732
      %v765 = vpack.c.b16 %v733, %v733
      %v766 = vpack.c.b16 %v734, %v734
      %v767 = vpack.c.b16 %v735, %v735
      %v768 = vpack.c.b16 %v736, %v736
      %v769 = vpack.c.b16 %v737, %v737
      %v770 = vpack.c.b16 %v738, %v738
      %v771 = vpack.c.b16 %v739, %v739
      %v772 = vpack.c.b16 %v740, %v740
      %v773 = vpack.c.b16 %v741, %v741
      %v774 = vpack.c.b16 %v742, %v742
      %v775 = vpack.c.b16 %v743, %v743
      %v776 = vpack.c.b16 %v744, %v744
      %v777 = vpack.c.b16 %v745, %v745
      %v778 = vpack.c.b16 %v746, %v746
      %v779 = vpack.c.b16 %v747, %v747
      %v780 = vpack.c.b16 %v748, %v748
      %v781 = vpack.c.b16 %v749, %v749
      %v782 = vpack.c.b16 %v750, %v750
      %v783 = vpack.c.b16 %v751, %v751
      %v784 = vpack.c.b16 %v752, %v752
      %v785 = vpack.c.b16 %v753, %v753
      %v786 = vpack.c.b16 %v754, %v754
      %v787 = vpack.c.b16 %v755, %v755
      %v788 = vpack.c.b16 %v756, %v756
      %v789 = vpack.c.b16 %v757, %v757
      %v790 = vpack.c.b16 %v758, %v758
      %v791 = vpack.c.b16 %v759, %v759
      %v792 = vpack.c.b16 %v760, %v760
      %v793 = vpack.c.b16 %v761, %v761
      %826 = vst [vmem:[%s175] sm:$0xf] %v762
      %827 = vst [vmem:[%s175 + $0x4] sm:$0xf] %v763
      %828 = vst [vmem:[%s175 + $0x8] sm:$0xf] %v764
      %829 = vst [vmem:[%s175 + $0xc] sm:$0xf] %v765
      %830 = vst [vmem:[%s175 + $0x10] sm:$0xf] %v766
      %831 = vst [vmem:[%s175 + $0x14] sm:$0xf] %v767
      %832 = vst [vmem:[%s175 + $0x18] sm:$0xf] %v768
      %833 = vst [vmem:[%s175 + $0x1c] sm:$0xf] %v769
      %834 = vst [vmem:[%s175 + $0x20] sm:$0xf] %v770
      %835 = vst [vmem:[%s175 + $0x24] sm:$0xf] %v771
      %836 = vst [vmem:[%s175 + $0x28] sm:$0xf] %v772
      %837 = vst [vmem:[%s175 + $0x2c] sm:$0xf] %v773
      %838 = vst [vmem:[%s175 + $0x30] sm:$0xf] %v774
      %839 = vst [vmem:[%s175 + $0x34] sm:$0xf] %v775
      %840 = vst [vmem:[%s175 + $0x38] sm:$0xf] %v776
      %841 = vst [vmem:[%s175 + $0x3c] sm:$0xf] %v777
      %842 = vst [vmem:[%s175 + $0x40] sm:$0xf] %v778
      %843 = vst [vmem:[%s175 + $0x44] sm:$0xf] %v779
      %844 = vst [vmem:[%s175 + $0x48] sm:$0xf] %v780
      %845 = vst [vmem:[%s175 + $0x4c] sm:$0xf] %v781
      %846 = vst [vmem:[%s175 + $0x50] sm:$0xf] %v782
      %847 = vst [vmem:[%s175 + $0x54] sm:$0xf] %v783
      %848 = vst [vmem:[%s175 + $0x58] sm:$0xf] %v784
      %849 = vst [vmem:[%s175 + $0x5c] sm:$0xf] %v785
      %850 = vst [vmem:[%s175 + $0x60] sm:$0xf] %v786
      %851 = vst [vmem:[%s175 + $0x64] sm:$0xf] %v787
      %852 = vst [vmem:[%s175 + $0x68] sm:$0xf] %v788
      %853 = vst [vmem:[%s175 + $0x6c] sm:$0xf] %v789
      %854 = vst [vmem:[%s175 + $0x70] sm:$0xf] %v790
      %855 = vst [vmem:[%s175 + $0x74] sm:$0xf] %v791
      %856 = vst [vmem:[%s175 + $0x78] sm:$0xf] %v792
      %857 = vst [vmem:[%s175 + $0x7c] sm:$0xf] %v793
      %s858 = smul.u32 32, %s14
      %p859 = scmp.lt.s32.totalorder %s858, 127
      %s860 = scalar_select %p859, %s858, 127
      %s861 = smul.addr %s860, 4
      %s862 = scalar_lea.vmem %s3, %s861
      // Predicated region
      $region33: #{dqn_forward.4} parent=31 // pred_check
        %p863 = pneg %p100
      $region34: #{dqn_forward.4} parent=31 // pred_check_branch
        %865 = sbr.rel (%p863) target = $region36
      $region35: #{dqn_forward.4} parent=31 // pred_region
        %s866 = smul.u32 32, %s14
      $region36: #{dqn_forward.4} parent=31 // pred_fallthru
        _
    $region32: #{dqn_forward.4} parent=5 // pred_fallthru
      _
    %p867 = scmp.le.s32.totalorder 2, %s9
    // Predicated region
    $region37: #{dqn_forward.4} parent=5 // pred_check
      %p868 = pneg %p867
    $region38: #{dqn_forward.4} parent=5 // pred_check_branch
      %870 = sbr.rel (%p868) target = $region40
    $region39: #{dqn_forward.4} parent=5 // pred_region
      %s871 = ssub.s32 %s9, 2
      // Predicated region
      $region41: #{dqn_forward.4} parent=39 // pred_check
        %p872 = pneg %p106
      $region42: #{dqn_forward.4} parent=39 // pred_check_branch
        %874 = sbr.rel (%p872) target = $region44
      $region43: #{dqn_forward.4} parent=39 // pred_region
        %s875 = smul.u32 32, %s15
        %p876 = scmp.lt.s32.totalorder %s875, 127
        %s877 = scalar_select %p876, %s875, 127
        %s878 = smul.addr %s877, 4
        %s879 = scalar_lea.vmem %s3, %s878
      $region44: #{dqn_forward.4} parent=39 // pred_fallthru
        _
    $region40: #{dqn_forward.4} parent=5 // pred_fallthru
      _
  $region6: #{dqn_forward.4} parent=0 // loop_footer
    %s13 = sadd.s32 1, %s9
  $region7: #{dqn_forward.4} parent=0 // loop_footer_branch
    %8 = sbr.rel target = $region3
  $region8: #{dqn_forward.4} parent=0 // loop_exit
    _

// kernel: dqn_forward.5
$region0: #{dqn_forward.5}
  #allocation0 [shape = 'u32[]', space=smem, size = 0x4, offset = 0x4, fixed_abs, tag = 'smem constant byte address 0x4 - core index']
  #allocation1 [shape = 'u32[144,128]{1,0:T(1,128)}', space=vmem, size = 0x12000, scoped, tag = 'internal scratch']
  %s0 = inlined_call_operand.vmem [shape: bf16[168,512], index: 0, kind: input, shape index: {}]
  %s1 = inlined_call_operand.vmem [shape: bf16[512,128], index: 1, kind: input, shape index: {}]
  %s2 = inlined_call_operand.vmem [shape: f32[1,128], index: 2, kind: input, shape index: {}]
  %s3 = inlined_call_operand.vmem [shape: bf16[168,128], index: 3, kind: output, shape index: {}]
  %s4 = sld [smem:[#allocation0]]
  $region22: #{dqn_forward.5} parent=0
    _
  %s6 = ssub.s32 1, %s4
  %s7 = scalar_select 0, %s6, %s4
  // Predicated region
  $region2: #{dqn_forward.5} parent=0 // pred_check
    _
  $region3: #{dqn_forward.5} parent=0 // pred_check_branch
    %9 = sbr.rel (0) target = $region5
  $region4: #{dqn_forward.5} parent=0 // pred_region
    _
  $region5: #{dqn_forward.5} parent=0 // pred_fallthru
    _
  // Predicated region
  $region6: #{dqn_forward.5} parent=0 // pred_check
    _
  $region7: #{dqn_forward.5} parent=0 // pred_check_branch
    %11 = sbr.rel (0) target = $region9
  $region8: #{dqn_forward.5} parent=0 // pred_region
    _
  $region9: #{dqn_forward.5} parent=0 // pred_fallthru
    _
  // Predicated region
  $region10: #{dqn_forward.5} parent=0 // pred_check
    _
  $region11: #{dqn_forward.5} parent=0 // pred_check_branch
    %13 = sbr.rel (0) target = $region13
  $region12: #{dqn_forward.5} parent=0 // pred_region
    _
  $region13: #{dqn_forward.5} parent=0 // pred_fallthru
    _
  %v15 = vld [vmem:[%s0] sm:$0xff]
  %v16 = vld [vmem:[%s0 + $0x8] sm:$0xff]
  %v17 = vld [vmem:[%s0 + $0x10] sm:$0xff]
  %v18 = vld [vmem:[%s0 + $0x18] sm:$0xff]
  %v19 = vld [vmem:[%s0 + $0x20] sm:$0xff]
  %v20 = vld [vmem:[%s0 + $0x28] sm:$0xff]
  %v21 = vld [vmem:[%s0 + $0x30] sm:$0xff]
  %v22 = vld [vmem:[%s0 + $0x38] sm:$0xff]
  %v23 = vld [vmem:[%s0 + $0x40] sm:$0xff]
  %v24 = vld [vmem:[%s0 + $0x48] sm:$0xff]
  %v25 = vld [vmem:[%s0 + $0x50] sm:$0xff]
  %v26 = vld [vmem:[%s0 + $0x58] sm:$0xff]
  %v27 = vld [vmem:[%s0 + $0x60] sm:$0xff]
  %v28 = vld [vmem:[%s0 + $0x68] sm:$0xff]
  %v29 = vld [vmem:[%s0 + $0x70] sm:$0xff]
  %v30 = vld [vmem:[%s0 + $0x78] sm:$0xff]
  %v31 = vld [vmem:[%s0 + $0x80] sm:$0xff]
  %v32 = vld [vmem:[%s0 + $0x88] sm:$0xff]
  %v33 = vld [vmem:[%s0 + $0x90] sm:$0xff]
  %v34 = vld [vmem:[%s0 + $0x98] sm:$0xff]
  %v35 = vld [vmem:[%s0 + $0xa0] sm:$0xff]
  %v36 = vld [vmem:[%s0 + $0xa8] sm:$0xff]
  %v37 = vld [vmem:[%s0 + $0xb0] sm:$0xff]
  %v38 = vld [vmem:[%s0 + $0xb8] sm:$0xff]
  %v39 = vld [vmem:[%s0 + $0xc0] sm:$0xff]
  %v40 = vld [vmem:[%s0 + $0xc8] sm:$0xff]
  %v41 = vld [vmem:[%s0 + $0xd0] sm:$0xff]
  %v42 = vld [vmem:[%s0 + $0xd8] sm:$0xff]
  %v43 = vld [vmem:[%s0 + $0xe0] sm:$0xff]
  %v44 = vld [vmem:[%s0 + $0xe8] sm:$0xff]
  %v45 = vld [vmem:[%s0 + $0xf0] sm:$0xff]
  %v46 = vld [vmem:[%s0 + $0xf8] sm:$0xff]
  %v47 = vld [vmem:[%s0 + $0x100] sm:$0xff]
  %v48 = vld [vmem:[%s0 + $0x108] sm:$0xff]
  %v49 = vld [vmem:[%s0 + $0x110] sm:$0xff]
  %v50 = vld [vmem:[%s0 + $0x118] sm:$0xff]
  %v51 = vld [vmem:[%s0 + $0x120] sm:$0xff]
  %v52 = vld [vmem:[%s0 + $0x128] sm:$0xff]
  %v53 = vld [vmem:[%s0 + $0x130] sm:$0xff]
  %v54 = vld [vmem:[%s0 + $0x138] sm:$0xff]
  %v55 = vld [vmem:[%s0 + $0x140] sm:$0xff]
  %v56 = vld [vmem:[%s0 + $0x148] sm:$0xff]
  %v57 = vld [vmem:[%s1] sm:$0xf]
  %v58 = vld [vmem:[%s1 + $0x4] sm:$0xf]
  %v59 = vld [vmem:[%s1 + $0x8] sm:$0xf]
  %v60 = vld [vmem:[%s1 + $0xc] sm:$0xf]
  %v61 = vld [vmem:[%s1 + $0x10] sm:$0xf]
  %v62 = vld [vmem:[%s1 + $0x14] sm:$0xf]
  %v63 = vld [vmem:[%s1 + $0x18] sm:$0xf]
  %v64 = vld [vmem:[%s1 + $0x1c] sm:$0xf]
  %v65 = vld [vmem:[%s1 + $0x20] sm:$0xf]
  %v66 = vld [vmem:[%s1 + $0x24] sm:$0xf]
  %v67 = vld [vmem:[%s1 + $0x28] sm:$0xf]
  %v68 = vld [vmem:[%s1 + $0x2c] sm:$0xf]
  %v69 = vld [vmem:[%s1 + $0x30] sm:$0xf]
  %v70 = vld [vmem:[%s1 + $0x34] sm:$0xf]
  %v71 = vld [vmem:[%s1 + $0x38] sm:$0xf]
  %v72 = vld [vmem:[%s1 + $0x3c] sm:$0xf]
  %v73 = vld [vmem:[%s1 + $0x40] sm:$0xf]
  %v74 = vld [vmem:[%s1 + $0x44] sm:$0xf]
  %v75 = vld [vmem:[%s1 + $0x48] sm:$0xf]
  %v76 = vld [vmem:[%s1 + $0x4c] sm:$0xf]
  %v77 = vld [vmem:[%s1 + $0x50] sm:$0xf]
  %v78 = vld [vmem:[%s1 + $0x54] sm:$0xf]
  %v79 = vld [vmem:[%s1 + $0x58] sm:$0xf]
  %v80 = vld [vmem:[%s1 + $0x5c] sm:$0xf]
  %v81 = vld [vmem:[%s1 + $0x60] sm:$0xf]
  %v82 = vld [vmem:[%s1 + $0x64] sm:$0xf]
  %v83 = vld [vmem:[%s1 + $0x68] sm:$0xf]
  %v84 = vld [vmem:[%s1 + $0x6c] sm:$0xf]
  %v85 = vld [vmem:[%s1 + $0x70] sm:$0xf]
  %v86 = vld [vmem:[%s1 + $0x74] sm:$0xf]
  %v87 = vld [vmem:[%s1 + $0x78] sm:$0xf]
  %v88 = vld [vmem:[%s1 + $0x7c] sm:$0xf]
  %v89 = vld [vmem:[%s1 + $0x80] sm:$0xf]
  %v90 = vld [vmem:[%s1 + $0x84] sm:$0xf]
  %v91 = vld [vmem:[%s1 + $0x88] sm:$0xf]
  %v92 = vld [vmem:[%s1 + $0x8c] sm:$0xf]
  %v93 = vld [vmem:[%s1 + $0x90] sm:$0xf]
  %v94 = vld [vmem:[%s1 + $0x94] sm:$0xf]
  %v95 = vld [vmem:[%s1 + $0x98] sm:$0xf]
  %v96 = vld [vmem:[%s1 + $0x9c] sm:$0xf]
  %v97 = vld [vmem:[%s1 + $0xa0] sm:$0xf]
  %v98 = vld [vmem:[%s1 + $0xa4] sm:$0xf]
  %v99 = vld [vmem:[%s1 + $0xa8] sm:$0xf]
  %v100 = vld [vmem:[%s1 + $0xac] sm:$0xf]
  %v101 = vld [vmem:[%s1 + $0xb0] sm:$0xf]
  %v102 = vld [vmem:[%s1 + $0xb4] sm:$0xf]
  %v103 = vld [vmem:[%s1 + $0xb8] sm:$0xf]
  %v104 = vld [vmem:[%s1 + $0xbc] sm:$0xf]
  %v105 = vld [vmem:[%s1 + $0xc0] sm:$0xf]
  %v106 = vld [vmem:[%s1 + $0xc4] sm:$0xf]
  %v107 = vld [vmem:[%s1 + $0xc8] sm:$0xf]
  %v108 = vld [vmem:[%s1 + $0xcc] sm:$0xf]
  %v109 = vld [vmem:[%s1 + $0xd0] sm:$0xf]
  %v110 = vld [vmem:[%s1 + $0xd4] sm:$0xf]
  %v111 = vld [vmem:[%s1 + $0xd8] sm:$0xf]
  %v112 = vld [vmem:[%s1 + $0xdc] sm:$0xf]
  %v113 = vld [vmem:[%s1 + $0xe0] sm:$0xf]
  %v114 = vld [vmem:[%s1 + $0xe4] sm:$0xf]
  %v115 = vld [vmem:[%s1 + $0xe8] sm:$0xf]
  %v116 = vld [vmem:[%s1 + $0xec] sm:$0xf]
  %v117 = vld [vmem:[%s1 + $0xf0] sm:$0xf]
  %v118 = vld [vmem:[%s1 + $0xf4] sm:$0xf]
  %v119 = vld [vmem:[%s1 + $0xf8] sm:$0xf]
  %v120 = vld [vmem:[%s1 + $0xfc] sm:$0xf]
  %v121 = vld [vmem:[%s2] sm:$0x1]
  %v123 = vlaneseq
  %v124 = vshrl.u32 %v123, 7
  %v125 = vsub.s32 0, %v124
  %v126 = vrot.slane %v121, %v125
  %v170 = vunpack.c.l.b16 %v15
  %v171 = vunpack.c.h.b16 %v15
  %v172 = vunpack.c.l.b16 %v16
  %v173 = vunpack.c.h.b16 %v16
  %v174 = vunpack.c.l.b16 %v17
  %v175 = vunpack.c.h.b16 %v17
  %v176 = vunpack.c.l.b16 %v18
  %v177 = vunpack.c.h.b16 %v18
  %v178 = vunpack.c.l.b16 %v19
  %v179 = vunpack.c.h.b16 %v19
  %v180 = vunpack.c.l.b16 %v20
  %v181 = vunpack.c.h.b16 %v20
  %v182 = vunpack.c.l.b16 %v21
  %v183 = vunpack.c.h.b16 %v21
  %v184 = vunpack.c.l.b16 %v22
  %v185 = vunpack.c.h.b16 %v22
  %v186 = vunpack.c.l.b16 %v23
  %v187 = vunpack.c.h.b16 %v23
  %v188 = vunpack.c.l.b16 %v24
  %v189 = vunpack.c.h.b16 %v24
  %v190 = vunpack.c.l.b16 %v25
  %v191 = vunpack.c.h.b16 %v25
  %v192 = vunpack.c.l.b16 %v26
  %v193 = vunpack.c.h.b16 %v26
  %v194 = vunpack.c.l.b16 %v27
  %v195 = vunpack.c.h.b16 %v27
  %v196 = vunpack.c.l.b16 %v28
  %v197 = vunpack.c.h.b16 %v28
  %v198 = vunpack.c.l.b16 %v29
  %v199 = vunpack.c.h.b16 %v29
  %v200 = vunpack.c.l.b16 %v30
  %v201 = vunpack.c.h.b16 %v30
  %v202 = vunpack.c.l.b16 %v31
  %v203 = vunpack.c.h.b16 %v31
  %v204 = vunpack.c.l.b16 %v32
  %v205 = vunpack.c.h.b16 %v32
  %v206 = vunpack.c.l.b16 %v33
  %v207 = vunpack.c.h.b16 %v33
  %v208 = vunpack.c.l.b16 %v34
  %v209 = vunpack.c.h.b16 %v34
  %v210 = vunpack.c.l.b16 %v35
  %v211 = vunpack.c.h.b16 %v35
  %v212 = vunpack.c.l.b16 %v36
  %v213 = vunpack.c.h.b16 %v36
  %v214 = vunpack.c.l.b16 %v37
  %v215 = vunpack.c.h.b16 %v37
  %v216 = vunpack.c.l.b16 %v38
  %v217 = vunpack.c.h.b16 %v38
  %v218 = vunpack.c.l.b16 %v39
  %v219 = vunpack.c.h.b16 %v39
  %v220 = vunpack.c.l.b16 %v40
  %v221 = vunpack.c.h.b16 %v40
  %v222 = vunpack.c.l.b16 %v41
  %v223 = vunpack.c.h.b16 %v41
  %v224 = vunpack.c.l.b16 %v42
  %v225 = vunpack.c.h.b16 %v42
  %v226 = vunpack.c.l.b16 %v43
  %v227 = vunpack.c.h.b16 %v43
  %v228 = vunpack.c.l.b16 %v44
  %v229 = vunpack.c.h.b16 %v44
  %v230 = vunpack.c.l.b16 %v45
  %v231 = vunpack.c.h.b16 %v45
  %v232 = vunpack.c.l.b16 %v46
  %v233 = vunpack.c.h.b16 %v46
  %v234 = vunpack.c.l.b16 %v47
  %v235 = vunpack.c.h.b16 %v47
  %v236 = vunpack.c.l.b16 %v48
  %v237 = vunpack.c.h.b16 %v48
  %v238 = vunpack.c.l.b16 %v49
  %v239 = vunpack.c.h.b16 %v49
  %v240 = vunpack.c.l.b16 %v50
  %v241 = vunpack.c.h.b16 %v50
  %v242 = vunpack.c.l.b16 %v51
  %v243 = vunpack.c.h.b16 %v51
  %v244 = vunpack.c.l.b16 %v52
  %v245 = vunpack.c.h.b16 %v52
  %v246 = vunpack.c.l.b16 %v53
  %v247 = vunpack.c.h.b16 %v53
  %v248 = vunpack.c.l.b16 %v54
  %v249 = vunpack.c.h.b16 %v54
  %v250 = vunpack.c.l.b16 %v55
  %v251 = vunpack.c.h.b16 %v55
  %v252 = vunpack.c.l.b16 %v56
  %v253 = vunpack.c.h.b16 %v56
  %v254 = vpack.c.b16 %v174, %v170
  %v255 = vpack.c.b16 %v175, %v171
  %v256 = vpack.c.b16 %v176, %v172
  %v257 = vpack.c.b16 %v177, %v173
  %v258 = vpack.c.b16 %v182, %v178
  %v259 = vpack.c.b16 %v183, %v179
  %v260 = vpack.c.b16 %v184, %v180
  %v261 = vpack.c.b16 %v185, %v181
  %v262 = vpack.c.b16 %v190, %v186
  %v263 = vpack.c.b16 %v191, %v187
  %v264 = vpack.c.b16 %v192, %v188
  %v265 = vpack.c.b16 %v193, %v189
  %v266 = vpack.c.b16 %v198, %v194
  %v267 = vpack.c.b16 %v199, %v195
  %v268 = vpack.c.b16 %v200, %v196
  %v269 = vpack.c.b16 %v201, %v197
  %v270 = vpack.c.b16 %v206, %v202
  %v271 = vpack.c.b16 %v207, %v203
  %v272 = vpack.c.b16 %v208, %v204
  %v273 = vpack.c.b16 %v209, %v205
  %v274 = vpack.c.b16 %v214, %v210
  %v275 = vpack.c.b16 %v215, %v211
  %v276 = vpack.c.b16 %v216, %v212
  %v277 = vpack.c.b16 %v217, %v213
  %v278 = vpack.c.b16 %v222, %v218
  %v279 = vpack.c.b16 %v223, %v219
  %v280 = vpack.c.b16 %v224, %v220
  %v281 = vpack.c.b16 %v225, %v221
  %v282 = vpack.c.b16 %v230, %v226
  %v283 = vpack.c.b16 %v231, %v227
  %v284 = vpack.c.b16 %v232, %v228
  %v285 = vpack.c.b16 %v233, %v229
  %v286 = vpack.c.b16 %v238, %v234
  %v287 = vpack.c.b16 %v239, %v235
  %v288 = vpack.c.b16 %v240, %v236
  %v289 = vpack.c.b16 %v241, %v237
  %v290 = vpack.c.b16 %v246, %v242
  %v291 = vpack.c.b16 %v247, %v243
  %v292 = vpack.c.b16 %v248, %v244
  %v293 = vpack.c.b16 %v249, %v245
  %v294 = vpack.c.b16 %v250, %v250
  %v295 = vpack.c.b16 %v251, %v251
  %v296 = vpack.c.b16 %v252, %v252
  %v297 = vpack.c.b16 %v253, %v253
  %v406 = vunpack.c.l.b16 %v57
  %v407 = vunpack.c.l.b16 %v58
  %v408 = vunpack.c.l.b16 %v59
  %v409 = vunpack.c.l.b16 %v60
  %v410 = vunpack.c.l.b16 %v61
  %v411 = vunpack.c.l.b16 %v62
  %v412 = vunpack.c.l.b16 %v63
  %v413 = vunpack.c.l.b16 %v64
  %v414 = vunpack.c.l.b16 %v65
  %v415 = vunpack.c.l.b16 %v66
  %v416 = vunpack.c.l.b16 %v67
  %v417 = vunpack.c.l.b16 %v68
  %v418 = vunpack.c.l.b16 %v69
  %v419 = vunpack.c.l.b16 %v70
  %v420 = vunpack.c.l.b16 %v71
  %v421 = vunpack.c.l.b16 %v72
  %v422 = vunpack.c.l.b16 %v73
  %v423 = vunpack.c.l.b16 %v74
  %v424 = vunpack.c.l.b16 %v75
  %v425 = vunpack.c.l.b16 %v76
  %v426 = vunpack.c.l.b16 %v77
  %v427 = vunpack.c.l.b16 %v78
  %v428 = vunpack.c.l.b16 %v79
  %v429 = vunpack.c.l.b16 %v80
  %v430 = vunpack.c.l.b16 %v81
  %v431 = vunpack.c.l.b16 %v82
  %v432 = vunpack.c.l.b16 %v83
  %v433 = vunpack.c.l.b16 %v84
  %v434 = vunpack.c.l.b16 %v85
  %v435 = vunpack.c.l.b16 %v86
  %v436 = vunpack.c.l.b16 %v87
  %v437 = vunpack.c.l.b16 %v88
  %v438 = vunpack.c.l.b16 %v89
  %v439 = vunpack.c.l.b16 %v90
  %v440 = vunpack.c.l.b16 %v91
  %v441 = vunpack.c.l.b16 %v92
  %v442 = vunpack.c.l.b16 %v93
  %v443 = vunpack.c.l.b16 %v94
  %v444 = vunpack.c.l.b16 %v95
  %v445 = vunpack.c.l.b16 %v96
  %v446 = vunpack.c.l.b16 %v97
  %v447 = vunpack.c.l.b16 %v98
  %v448 = vunpack.c.l.b16 %v99
  %v449 = vunpack.c.l.b16 %v100
  %v450 = vunpack.c.l.b16 %v101
  %v451 = vunpack.c.l.b16 %v102
  %v452 = vunpack.c.l.b16 %v103
  %v453 = vunpack.c.l.b16 %v104
  %v454 = vunpack.c.l.b16 %v105
  %v455 = vunpack.c.l.b16 %v106
  %v456 = vunpack.c.l.b16 %v107
  %v457 = vunpack.c.l.b16 %v108
  %v458 = vunpack.c.l.b16 %v109
  %v459 = vunpack.c.l.b16 %v110
  %v460 = vunpack.c.l.b16 %v111
  %v461 = vunpack.c.l.b16 %v112
  %v462 = vunpack.c.l.b16 %v113
  %v463 = vunpack.c.l.b16 %v114
  %v464 = vunpack.c.l.b16 %v115
  %v465 = vunpack.c.l.b16 %v116
  %v466 = vunpack.c.l.b16 %v117
  %v467 = vunpack.c.l.b16 %v118
  %v468 = vunpack.c.l.b16 %v119
  %v469 = vunpack.c.l.b16 %v120
  %v470 = vpack.c.b16 %v407, %v406
  %v471 = vpack.c.b16 %v409, %v408
  %v472 = vpack.c.b16 %v411, %v410
  %v473 = vpack.c.b16 %v413, %v412
  %v474 = vpack.c.b16 %v415, %v414
  %v475 = vpack.c.b16 %v417, %v416
  %v476 = vpack.c.b16 %v419, %v418
  %v477 = vpack.c.b16 %v421, %v420
  %v478 = vpack.c.b16 %v423, %v422
  %v479 = vpack.c.b16 %v425, %v424
  %v480 = vpack.c.b16 %v427, %v426
  %v481 = vpack.c.b16 %v429, %v428
  %v482 = vpack.c.b16 %v431, %v430
  %v483 = vpack.c.b16 %v433, %v432
  %v484 = vpack.c.b16 %v435, %v434
  %v485 = vpack.c.b16 %v437, %v436
  %v486 = vpack.c.b16 %v439, %v438
  %v487 = vpack.c.b16 %v441, %v440
  %v488 = vpack.c.b16 %v443, %v442
  %v489 = vpack.c.b16 %v445, %v444
  %v490 = vpack.c.b16 %v447, %v446
  %v491 = vpack.c.b16 %v449, %v448
  %v492 = vpack.c.b16 %v451, %v450
  %v493 = vpack.c.b16 %v453, %v452
  %v494 = vpack.c.b16 %v455, %v454
  %v495 = vpack.c.b16 %v457, %v456
  %v496 = vpack.c.b16 %v459, %v458
  %v497 = vpack.c.b16 %v461, %v460
  %v498 = vpack.c.b16 %v463, %v462
  %v499 = vpack.c.b16 %v465, %v464
  %v500 = vpack.c.b16 %v467, %v466
  %v501 = vpack.c.b16 %v469, %v468
  %534 = vmatprep.subr.bf16.mxu0 0
  %535 = vmatpush1.bf16.msra.mxu0 %v477
  %536 = vmatprep.subr.bf16.mxu0 0
  %537 = vmatpush1.bf16.msra.mxu0 %v476
  %538 = vmatprep.subr.bf16.mxu0 0
  %539 = vmatpush1.bf16.msra.mxu0 %v475
  %540 = vmatprep.subr.bf16.mxu0 0
  %541 = vmatpush1.bf16.msra.mxu0 %v474
  %542 = vmatprep.subr.bf16.mxu0 0
  %543 = vmatpush1.bf16.msra.mxu0 %v473
  %544 = vmatprep.subr.bf16.mxu0 0
  %545 = vmatpush1.bf16.msra.mxu0 %v472
  %546 = vmatprep.subr.bf16.mxu0 0
  %547 = vmatpush1.bf16.msra.mxu0 %v471
  %548 = vmatprep.subr.bf16.mxu0 0
  %549 = vmatpush1.bf16.msra.mxu0 %v470
  %550 = vmatprep.subr.bf16.mxu0 0
  %551 = vmatpush2.bf16.msra.mxu0 %v485
  %552 = vmatprep.subr.bf16.mxu0 0
  %553 = vmatpush2.bf16.msra.mxu0 %v484
  %554 = vmatprep.subr.bf16.mxu0 0
  %555 = vmatpush2.bf16.msra.mxu0 %v483
  %556 = vmatprep.subr.bf16.mxu0 0
  %557 = vmatpush2.bf16.msra.mxu0 %v482
  %558 = vmatprep.subr.bf16.mxu0 0
  %559 = vmatpush2.bf16.msra.mxu0 %v481
  %560 = vmatprep.subr.bf16.mxu0 0
  %561 = vmatpush2.bf16.msra.mxu0 %v480
  %562 = vmatprep.subr.bf16.mxu0 0
  %563 = vmatpush2.bf16.msra.mxu0 %v479
  %564 = vmatprep.subr.bf16.mxu0 0
  %565 = vmatpush2.bf16.msra.mxu0 %v478
  %566 = vmatprep.mubr.bf16.mxu0 %v255
  %567 = vmatmul.mubr.bf16.gmra.mxu0 %v254
  %v568 = vpop.f32.mrf.mxu0
  %v569 = vadd.f32 %v126, %v568
  %v570 = vpop.f32.mrf.mxu0
  %v571 = vpop.f32.mrf.mxu0
  %v572 = vadd.f32 %v126, %v571
  %v573 = vpop.f32.mrf.mxu0
  %574 = vmatprep.mubr.bf16.mxu0 %v259
  %575 = vmatmul.mubr.bf16.gmra.mxu0 %v258
  %v576 = vpop.f32.mrf.mxu0
  %v577 = vadd.f32 %v126, %v576
  %v578 = vpop.f32.mrf.mxu0
  %v579 = vpop.f32.mrf.mxu0
  %v580 = vadd.f32 %v126, %v579
  %v581 = vpop.f32.mrf.mxu0
  %582 = vmatprep.mubr.bf16.mxu0 %v263
  %583 = vmatmul.mubr.bf16.gmra.mxu0 %v262
  %v584 = vpop.f32.mrf.mxu0
  %v585 = vadd.f32 %v126, %v584
  %v586 = vpop.f32.mrf.mxu0
  %v587 = vpop.f32.mrf.mxu0
  %v588 = vadd.f32 %v126, %v587
  %v589 = vpop.f32.mrf.mxu0
  %590 = vmatprep.mubr.bf16.mxu0 %v267
  %591 = vmatmul.mubr.bf16.gmra.mxu0 %v266
  %v592 = vpop.f32.mrf.mxu0
  %v593 = vadd.f32 %v126, %v592
  %v594 = vpop.f32.mrf.mxu0
  %v595 = vpop.f32.mrf.mxu0
  %v596 = vadd.f32 %v126, %v595
  %v597 = vpop.f32.mrf.mxu0
  %598 = vmatprep.mubr.bf16.mxu0 %v271
  %599 = vmatmul.mubr.bf16.gmra.mxu0 %v270
  %v600 = vpop.f32.mrf.mxu0
  %v601 = vadd.f32 %v126, %v600
  %v602 = vpop.f32.mrf.mxu0
  %v603 = vpop.f32.mrf.mxu0
  %v604 = vadd.f32 %v126, %v603
  %v605 = vpop.f32.mrf.mxu0
  %606 = vmatprep.mubr.bf16.mxu0 %v275
  %607 = vmatmul.mubr.bf16.gmra.mxu0 %v274
  %v608 = vpop.f32.mrf.mxu0
  %v609 = vadd.f32 %v126, %v608
  %v610 = vpop.f32.mrf.mxu0
  %v611 = vpop.f32.mrf.mxu0
  %v612 = vadd.f32 %v126, %v611
  %v613 = vpop.f32.mrf.mxu0
  %614 = vmatprep.mubr.bf16.mxu0 %v279
  %615 = vmatmul.mubr.bf16.gmra.mxu0 %v278
  %v616 = vpop.f32.mrf.mxu0
  %v617 = vadd.f32 %v126, %v616
  %v618 = vpop.f32.mrf.mxu0
  %v619 = vpop.f32.mrf.mxu0
  %v620 = vadd.f32 %v126, %v619
  %v621 = vpop.f32.mrf.mxu0
  %622 = vmatprep.mubr.bf16.mxu0 %v283
  %623 = vmatmul.mubr.bf16.gmra.mxu0 %v282
  %v624 = vpop.f32.mrf.mxu0
  %v625 = vadd.f32 %v126, %v624
  %v626 = vpop.f32.mrf.mxu0
  %v627 = vpop.f32.mrf.mxu0
  %v628 = vadd.f32 %v126, %v627
  %v629 = vpop.f32.mrf.mxu0
  %630 = vmatprep.mubr.bf16.mxu0 %v287
  %631 = vmatmul.mubr.bf16.gmra.mxu0 %v286
  %v632 = vpop.f32.mrf.mxu0
  %v633 = vadd.f32 %v126, %v632
  %v634 = vpop.f32.mrf.mxu0
  %v635 = vpop.f32.mrf.mxu0
  %v636 = vadd.f32 %v126, %v635
  %v637 = vpop.f32.mrf.mxu0
  %638 = vmatprep.mubr.bf16.mxu0 %v291
  %639 = vmatmul.mubr.bf16.gmra.mxu0 %v290
  %v640 = vpop.f32.mrf.mxu0
  %v641 = vadd.f32 %v126, %v640
  %v642 = vpop.f32.mrf.mxu0
  %v643 = vpop.f32.mrf.mxu0
  %v644 = vadd.f32 %v126, %v643
  %v645 = vpop.f32.mrf.mxu0
  %646 = vmatprep.mubr.bf16.mxu0 %v295
  %647 = vmatmul.mubr.bf16.gmra.mxu0 %v294
  %v648 = vpop.f32.mrf.mxu0
  %v649 = vadd.f32 %v126, %v648
  %v650 = vpop.f32.mrf.mxu0
  %v651 = vpop.f32.mrf.mxu0
  %v652 = vpop.f32.mrf.mxu0
  %653 = vdwg.mxu0
  %654 = vmatprep.subr.bf16.mxu0 0
  %655 = vmatpush1.bf16.msra.mxu0 %v493
  %656 = vmatprep.subr.bf16.mxu0 0
  %657 = vmatpush1.bf16.msra.mxu0 %v492
  %658 = vmatprep.subr.bf16.mxu0 0
  %659 = vmatpush1.bf16.msra.mxu0 %v491
  %660 = vmatprep.subr.bf16.mxu0 0
  %661 = vmatpush1.bf16.msra.mxu0 %v490
  %662 = vmatprep.subr.bf16.mxu0 0
  %663 = vmatpush1.bf16.msra.mxu0 %v489
  %664 = vmatprep.subr.bf16.mxu0 0
  %665 = vmatpush1.bf16.msra.mxu0 %v488
  %666 = vmatprep.subr.bf16.mxu0 0
  %667 = vmatpush1.bf16.msra.mxu0 %v487
  %668 = vmatprep.subr.bf16.mxu0 0
  %669 = vmatpush1.bf16.msra.mxu0 %v486
  %670 = vmatprep.subr.bf16.mxu0 0
  %671 = vmatpush2.bf16.msra.mxu0 %v501
  %672 = vmatprep.subr.bf16.mxu0 0
  %673 = vmatpush2.bf16.msra.mxu0 %v500
  %674 = vmatprep.subr.bf16.mxu0 0
  %675 = vmatpush2.bf16.msra.mxu0 %v499
  %676 = vmatprep.subr.bf16.mxu0 0
  %677 = vmatpush2.bf16.msra.mxu0 %v498
  %678 = vmatprep.subr.bf16.mxu0 0
  %679 = vmatpush2.bf16.msra.mxu0 %v497
  %680 = vmatprep.subr.bf16.mxu0 0
  %681 = vmatpush2.bf16.msra.mxu0 %v496
  %682 = vmatprep.subr.bf16.mxu0 0
  %683 = vmatpush2.bf16.msra.mxu0 %v495
  %684 = vmatprep.subr.bf16.mxu0 0
  %685 = vmatpush2.bf16.msra.mxu0 %v494
  %686 = vmatprep.mubr.bf16.mxu0 %v257
  %687 = vmatmul.mubr.bf16.gmra.mxu0 %v256
  %v688 = vpop.f32.mrf.mxu0
  %v689 = vadd.f32 %v569, %v688
  %v690 = vpop.f32.mrf.mxu0
  %v691 = vpop.f32.mrf.mxu0
  %v692 = vadd.f32 %v572, %v691
  %v693 = vpop.f32.mrf.mxu0
  %694 = vmatprep.mubr.bf16.mxu0 %v261
  %695 = vmatmul.mubr.bf16.gmra.mxu0 %v260
  %v696 = vpop.f32.mrf.mxu0
  %v697 = vadd.f32 %v577, %v696
  %v698 = vpop.f32.mrf.mxu0
  %v699 = vpop.f32.mrf.mxu0
  %v700 = vadd.f32 %v580, %v699
  %v701 = vpop.f32.mrf.mxu0
  %702 = vmatprep.mubr.bf16.mxu0 %v265
  %703 = vmatmul.mubr.bf16.gmra.mxu0 %v264
  %v704 = vpop.f32.mrf.mxu0
  %v705 = vadd.f32 %v585, %v704
  %v706 = vpop.f32.mrf.mxu0
  %v707 = vpop.f32.mrf.mxu0
  %v708 = vadd.f32 %v588, %v707
  %v709 = vpop.f32.mrf.mxu0
  %710 = vmatprep.mubr.bf16.mxu0 %v269
  %711 = vmatmul.mubr.bf16.gmra.mxu0 %v268
  %v712 = vpop.f32.mrf.mxu0
  %v713 = vadd.f32 %v593, %v712
  %v714 = vpop.f32.mrf.mxu0
  %v715 = vpop.f32.mrf.mxu0
  %v716 = vadd.f32 %v596, %v715
  %v717 = vpop.f32.mrf.mxu0
  %718 = vmatprep.mubr.bf16.mxu0 %v273
  %719 = vmatmul.mubr.bf16.gmra.mxu0 %v272
  %v720 = vpop.f32.mrf.mxu0
  %v721 = vadd.f32 %v601, %v720
  %v722 = vpop.f32.mrf.mxu0
  %v723 = vpop.f32.mrf.mxu0
  %v724 = vadd.f32 %v604, %v723
  %v725 = vpop.f32.mrf.mxu0
  %726 = vmatprep.mubr.bf16.mxu0 %v277
  %727 = vmatmul.mubr.bf16.gmra.mxu0 %v276
  %v728 = vpop.f32.mrf.mxu0
  %v729 = vadd.f32 %v609, %v728
  %v730 = vpop.f32.mrf.mxu0
  %v731 = vpop.f32.mrf.mxu0
  %v732 = vadd.f32 %v612, %v731
  %v733 = vpop.f32.mrf.mxu0
  %734 = vmatprep.mubr.bf16.mxu0 %v281
  %735 = vmatmul.mubr.bf16.gmra.mxu0 %v280
  %v736 = vpop.f32.mrf.mxu0
  %v737 = vadd.f32 %v617, %v736
  %v738 = vpop.f32.mrf.mxu0
  %v739 = vpop.f32.mrf.mxu0
  %v740 = vadd.f32 %v620, %v739
  %v741 = vpop.f32.mrf.mxu0
  %742 = vmatprep.mubr.bf16.mxu0 %v285
  %743 = vmatmul.mubr.bf16.gmra.mxu0 %v284
  %v744 = vpop.f32.mrf.mxu0
  %v745 = vadd.f32 %v625, %v744
  %v746 = vpop.f32.mrf.mxu0
  %v747 = vpop.f32.mrf.mxu0
  %v748 = vadd.f32 %v628, %v747
  %v749 = vpop.f32.mrf.mxu0
  %750 = vmatprep.mubr.bf16.mxu0 %v289
  %751 = vmatmul.mubr.bf16.gmra.mxu0 %v288
  %v752 = vpop.f32.mrf.mxu0
  %v753 = vadd.f32 %v633, %v752
  %v754 = vpop.f32.mrf.mxu0
  %v755 = vpop.f32.mrf.mxu0
  %v756 = vadd.f32 %v636, %v755
  %v757 = vpop.f32.mrf.mxu0
  %758 = vmatprep.mubr.bf16.mxu0 %v293
  %759 = vmatmul.mubr.bf16.gmra.mxu0 %v292
  %v760 = vpop.f32.mrf.mxu0
  %v761 = vadd.f32 %v641, %v760
  %v762 = vpop.f32.mrf.mxu0
  %v763 = vpop.f32.mrf.mxu0
  %v764 = vadd.f32 %v644, %v763
  %v765 = vpop.f32.mrf.mxu0
  %766 = vmatprep.mubr.bf16.mxu0 %v297
  %767 = vmatmul.mubr.bf16.gmra.mxu0 %v296
  %v768 = vpop.f32.mrf.mxu0
  %v769 = vadd.f32 %v649, %v768
  %v770 = vpop.f32.mrf.mxu0
  %v771 = vpop.f32.mrf.mxu0
  %v772 = vpop.f32.mrf.mxu0
  %773 = vdwg.mxu0
  %v774 = vmax.f32 %v689, 0.0
  %v775 = vmax.f32 %v692, 0.0
  %v776 = vmax.f32 %v697, 0.0
  %v777 = vmax.f32 %v700, 0.0
  %v778 = vmax.f32 %v705, 0.0
  %v779 = vmax.f32 %v708, 0.0
  %v780 = vmax.f32 %v713, 0.0
  %v781 = vmax.f32 %v716, 0.0
  %v782 = vmax.f32 %v721, 0.0
  %v783 = vmax.f32 %v724, 0.0
  %v784 = vmax.f32 %v729, 0.0
  %v785 = vmax.f32 %v732, 0.0
  %v786 = vmax.f32 %v737, 0.0
  %v787 = vmax.f32 %v740, 0.0
  %v788 = vmax.f32 %v745, 0.0
  %v789 = vmax.f32 %v748, 0.0
  %v790 = vmax.f32 %v753, 0.0
  %v791 = vmax.f32 %v756, 0.0
  %v792 = vmax.f32 %v761, 0.0
  %v793 = vmax.f32 %v764, 0.0
  %v794 = vmax.f32 %v769, 0.0
  %v795 = vpack.c.bf16 %v775, %v774
  %v796 = vpack.c.bf16 %v777, %v776
  %v797 = vpack.c.bf16 %v779, %v778
  %v798 = vpack.c.bf16 %v781, %v780
  %v799 = vpack.c.bf16 %v783, %v782
  %v800 = vpack.c.bf16 %v785, %v784
  %v801 = vpack.c.bf16 %v787, %v786
  %v802 = vpack.c.bf16 %v789, %v788
  %v803 = vpack.c.bf16 %v791, %v790
  %v804 = vpack.c.bf16 %v793, %v792
  %v805 = vpack.c.bf16 %v794, %v794
  %v817 = vunpack.c.l.b16 %v795
  %v818 = vunpack.c.h.b16 %v795
  %v819 = vunpack.c.l.b16 %v796
  %v820 = vunpack.c.h.b16 %v796
  %v821 = vunpack.c.l.b16 %v797
  %v822 = vunpack.c.h.b16 %v797
  %v823 = vunpack.c.l.b16 %v798
  %v824 = vunpack.c.h.b16 %v798
  %v825 = vunpack.c.l.b16 %v799
  %v826 = vunpack.c.h.b16 %v799
  %v827 = vunpack.c.l.b16 %v800
  %v828 = vunpack.c.h.b16 %v800
  %v829 = vunpack.c.l.b16 %v801
  %v830 = vunpack.c.h.b16 %v801
  %v831 = vunpack.c.l.b16 %v802
  %v832 = vunpack.c.h.b16 %v802
  %v833 = vunpack.c.l.b16 %v803
  %v834 = vunpack.c.h.b16 %v803
  %v835 = vunpack.c.l.b16 %v804
  %v836 = vunpack.c.h.b16 %v804
  %v837 = vunpack.c.l.b16 %v805
  %v838 = vpack.c.b16 %v817, %v817
  %v839 = vpack.c.b16 %v818, %v818
  %v840 = vpack.c.b16 %v819, %v819
  %v841 = vpack.c.b16 %v820, %v820
  %v842 = vpack.c.b16 %v821, %v821
  %v843 = vpack.c.b16 %v822, %v822
  %v844 = vpack.c.b16 %v823, %v823
  %v845 = vpack.c.b16 %v824, %v824
  %v846 = vpack.c.b16 %v825, %v825
  %v847 = vpack.c.b16 %v826, %v826
  %v848 = vpack.c.b16 %v827, %v827
  %v849 = vpack.c.b16 %v828, %v828
  %v850 = vpack.c.b16 %v829, %v829
  %v851 = vpack.c.b16 %v830, %v830
  %v852 = vpack.c.b16 %v831, %v831
  %v853 = vpack.c.b16 %v832, %v832
  %v854 = vpack.c.b16 %v833, %v833
  %v855 = vpack.c.b16 %v834, %v834
  %v856 = vpack.c.b16 %v835, %v835
  %v857 = vpack.c.b16 %v836, %v836
  %v858 = vpack.c.b16 %v837, %v837
  %880 = vst [vmem:[%s3] sm:$0xf] %v838
  %881 = vst [vmem:[%s3 + $0x4] sm:$0xf] %v839
  %882 = vst [vmem:[%s3 + $0x8] sm:$0xf] %v840
  %883 = vst [vmem:[%s3 + $0xc] sm:$0xf] %v841
  %884 = vst [vmem:[%s3 + $0x10] sm:$0xf] %v842
  %885 = vst [vmem:[%s3 + $0x14] sm:$0xf] %v843
  %886 = vst [vmem:[%s3 + $0x18] sm:$0xf] %v844
  %887 = vst [vmem:[%s3 + $0x1c] sm:$0xf] %v845
  %888 = vst [vmem:[%s3 + $0x20] sm:$0xf] %v846
  %889 = vst [vmem:[%s3 + $0x24] sm:$0xf] %v847
  %890 = vst [vmem:[%s3 + $0x28] sm:$0xf] %v848
  %891 = vst [vmem:[%s3 + $0x2c] sm:$0xf] %v849
  %892 = vst [vmem:[%s3 + $0x30] sm:$0xf] %v850
  %893 = vst [vmem:[%s3 + $0x34] sm:$0xf] %v851
  %894 = vst [vmem:[%s3 + $0x38] sm:$0xf] %v852
  %895 = vst [vmem:[%s3 + $0x3c] sm:$0xf] %v853
  %896 = vst [vmem:[%s3 + $0x40] sm:$0xf] %v854
  %897 = vst [vmem:[%s3 + $0x44] sm:$0xf] %v855
  %898 = vst [vmem:[%s3 + $0x48] sm:$0xf] %v856
  %899 = vst [vmem:[%s3 + $0x4c] sm:$0xf] %v857
  %900 = vst [vmem:[%s3 + $0x50] sm:$0xf] %v858
  // Predicated region
  $region14: #{dqn_forward.5} parent=0 // pred_check
    _
  $region15: #{dqn_forward.5} parent=0 // pred_check_branch
    %902 = sbr.rel (0) target = $region17
  $region16: #{dqn_forward.5} parent=0 // pred_region
    _
  $region17: #{dqn_forward.5} parent=0 // pred_fallthru
    _
  // Predicated region
  $region18: #{dqn_forward.5} parent=0 // pred_check
    _
  $region19: #{dqn_forward.5} parent=0 // pred_check_branch
    %904 = sbr.rel (0) target = $region21
  $region20: #{dqn_forward.5} parent=0 // pred_region
    _
  $region21: #{dqn_forward.5} parent=0 // pred_fallthru
    _

// kernel: dqn_forward.6
$region0: #{dqn_forward.6}
  #allocation0 [shape = 'u32[]', space=smem, size = 0x4, offset = 0x4, fixed_abs, tag = 'smem constant byte address 0x4 - core index']
  #allocation1 [shape = 'u32[144,128]{1,0:T(1,128)}', space=vmem, size = 0x12000, scoped, tag = 'internal scratch']
  %s0 = inlined_call_operand.vmem [shape: bf16[104,640], index: 0, kind: input, shape index: {}]
  %s1 = inlined_call_operand.vmem [shape: bf16[640,128], index: 1, kind: input, shape index: {}]
  %s2 = inlined_call_operand.vmem [shape: f32[1,128], index: 2, kind: input, shape index: {}]
  %s3 = inlined_call_operand.vmem [shape: bf16[104,128], index: 3, kind: output, shape index: {}]
  %s4 = sld [smem:[#allocation0]]
  $region22: #{dqn_forward.6} parent=0
    _
  %s6 = ssub.s32 1, %s4
  %s7 = scalar_select 0, %s6, %s4
  // Predicated region
  $region2: #{dqn_forward.6} parent=0 // pred_check
    _
  $region3: #{dqn_forward.6} parent=0 // pred_check_branch
    %9 = sbr.rel (0) target = $region5
  $region4: #{dqn_forward.6} parent=0 // pred_region
    _
  $region5: #{dqn_forward.6} parent=0 // pred_fallthru
    _
  // Predicated region
  $region6: #{dqn_forward.6} parent=0 // pred_check
    _
  $region7: #{dqn_forward.6} parent=0 // pred_check_branch
    %11 = sbr.rel (0) target = $region9
  $region8: #{dqn_forward.6} parent=0 // pred_region
    _
  $region9: #{dqn_forward.6} parent=0 // pred_fallthru
    _
  // Predicated region
  $region10: #{dqn_forward.6} parent=0 // pred_check
    _
  $region11: #{dqn_forward.6} parent=0 // pred_check_branch
    %13 = sbr.rel (0) target = $region13
  $region12: #{dqn_forward.6} parent=0 // pred_region
    _
  $region13: #{dqn_forward.6} parent=0 // pred_fallthru
    _
  %v15 = vld [vmem:[%s0] sm:$0xff]
  %v16 = vld [vmem:[%s0 + $0x8] sm:$0xff]
  %v17 = vld [vmem:[%s0 + $0x10] sm:$0xf]
  %v18 = vld [vmem:[%s0 + $0x14] sm:$0xff]
  %v19 = vld [vmem:[%s0 + $0x1c] sm:$0xff]
  %v20 = vld [vmem:[%s0 + $0x24] sm:$0xf]
  %v21 = vld [vmem:[%s0 + $0x28] sm:$0xff]
  %v22 = vld [vmem:[%s0 + $0x30] sm:$0xff]
  %v23 = vld [vmem:[%s0 + $0x38] sm:$0xf]
  %v24 = vld [vmem:[%s0 + $0x3c] sm:$0xff]
  %v25 = vld [vmem:[%s0 + $0x44] sm:$0xff]
  %v26 = vld [vmem:[%s0 + $0x4c] sm:$0xf]
  %v27 = vld [vmem:[%s0 + $0x50] sm:$0xff]
  %v28 = vld [vmem:[%s0 + $0x58] sm:$0xff]
  %v29 = vld [vmem:[%s0 + $0x60] sm:$0xf]
  %v30 = vld [vmem:[%s0 + $0x64] sm:$0xff]
  %v31 = vld [vmem:[%s0 + $0x6c] sm:$0xff]
  %v32 = vld [vmem:[%s0 + $0x74] sm:$0xf]
  %v33 = vld [vmem:[%s0 + $0x78] sm:$0xff]
  %v34 = vld [vmem:[%s0 + $0x80] sm:$0xff]
  %v35 = vld [vmem:[%s0 + $0x88] sm:$0xf]
  %v36 = vld [vmem:[%s0 + $0x8c] sm:$0xff]
  %v37 = vld [vmem:[%s0 + $0x94] sm:$0xff]
  %v38 = vld [vmem:[%s0 + $0x9c] sm:$0xf]
  %v39 = vld [vmem:[%s0 + $0xa0] sm:$0xff]
  %v40 = vld [vmem:[%s0 + $0xa8] sm:$0xff]
  %v41 = vld [vmem:[%s0 + $0xb0] sm:$0xf]
  %v42 = vld [vmem:[%s0 + $0xb4] sm:$0xff]
  %v43 = vld [vmem:[%s0 + $0xbc] sm:$0xff]
  %v44 = vld [vmem:[%s0 + $0xc4] sm:$0xf]
  %v45 = vld [vmem:[%s0 + $0xc8] sm:$0xff]
  %v46 = vld [vmem:[%s0 + $0xd0] sm:$0xff]
  %v47 = vld [vmem:[%s0 + $0xd8] sm:$0xf]
  %v48 = vld [vmem:[%s0 + $0xdc] sm:$0xff]
  %v49 = vld [vmem:[%s0 + $0xe4] sm:$0xff]
  %v50 = vld [vmem:[%s0 + $0xec] sm:$0xf]
  %v51 = vld [vmem:[%s0 + $0xf0] sm:$0xff]
  %v52 = vld [vmem:[%s0 + $0xf8] sm:$0xff]
  %v53 = vld [vmem:[%s0 + $0x100] sm:$0xf]
  %v54 = vld [vmem:[%s1] sm:$0xf]
  %v55 = vld [vmem:[%s1 + $0x4] sm:$0xf]
  %v56 = vld [vmem:[%s1 + $0x8] sm:$0xf]
  %v57 = vld [vmem:[%s1 + $0xc] sm:$0xf]
  %v58 = vld [vmem:[%s1 + $0x10] sm:$0xf]
  %v59 = vld [vmem:[%s1 + $0x14] sm:$0xf]
  %v60 = vld [vmem:[%s1 + $0x18] sm:$0xf]
  %v61 = vld [vmem:[%s1 + $0x1c] sm:$0xf]
  %v62 = vld [vmem:[%s1 + $0x20] sm:$0xf]
  %v63 = vld [vmem:[%s1 + $0x24] sm:$0xf]
  %v64 = vld [vmem:[%s1 + $0x28] sm:$0xf]
  %v65 = vld [vmem:[%s1 + $0x2c] sm:$0xf]
  %v66 = vld [vmem:[%s1 + $0x30] sm:$0xf]
  %v67 = vld [vmem:[%s1 + $0x34] sm:$0xf]
  %v68 = vld [vmem:[%s1 + $0x38] sm:$0xf]
  %v69 = vld [vmem:[%s1 + $0x3c] sm:$0xf]
  %v70 = vld [vmem:[%s1 + $0x40] sm:$0xf]
  %v71 = vld [vmem:[%s1 + $0x44] sm:$0xf]
  %v72 = vld [vmem:[%s1 + $0x48] sm:$0xf]
  %v73 = vld [vmem:[%s1 + $0x4c] sm:$0xf]
  %v74 = vld [vmem:[%s1 + $0x50] sm:$0xf]
  %v75 = vld [vmem:[%s1 + $0x54] sm:$0xf]
  %v76 = vld [vmem:[%s1 + $0x58] sm:$0xf]
  %v77 = vld [vmem:[%s1 + $0x5c] sm:$0xf]
  %v78 = vld [vmem:[%s1 + $0x60] sm:$0xf]
  %v79 = vld [vmem:[%s1 + $0x64] sm:$0xf]
  %v80 = vld [vmem:[%s1 + $0x68] sm:$0xf]
  %v81 = vld [vmem:[%s1 + $0x6c] sm:$0xf]
  %v82 = vld [vmem:[%s1 + $0x70] sm:$0xf]
  %v83 = vld [vmem:[%s1 + $0x74] sm:$0xf]
  %v84 = vld [vmem:[%s1 + $0x78] sm:$0xf]
  %v85 = vld [vmem:[%s1 + $0x7c] sm:$0xf]
  %v86 = vld [vmem:[%s1 + $0x80] sm:$0xf]
  %v87 = vld [vmem:[%s1 + $0x84] sm:$0xf]
  %v88 = vld [vmem:[%s1 + $0x88] sm:$0xf]
  %v89 = vld [vmem:[%s1 + $0x8c] sm:$0xf]
  %v90 = vld [vmem:[%s1 + $0x90] sm:$0xf]
  %v91 = vld [vmem:[%s1 + $0x94] sm:$0xf]
  %v92 = vld [vmem:[%s1 + $0x98] sm:$0xf]
  %v93 = vld [vmem:[%s1 + $0x9c] sm:$0xf]
  %v94 = vld [vmem:[%s1 + $0xa0] sm:$0xf]
  %v95 = vld [vmem:[%s1 + $0xa4] sm:$0xf]
  %v96 = vld [vmem:[%s1 + $0xa8] sm:$0xf]
  %v97 = vld [vmem:[%s1 + $0xac] sm:$0xf]
  %v98 = vld [vmem:[%s1 + $0xb0] sm:$0xf]
  %v99 = vld [vmem:[%s1 + $0xb4] sm:$0xf]
  %v100 = vld [vmem:[%s1 + $0xb8] sm:$0xf]
  %v101 = vld [vmem:[%s1 + $0xbc] sm:$0xf]
  %v102 = vld [vmem:[%s1 + $0xc0] sm:$0xf]
  %v103 = vld [vmem:[%s1 + $0xc4] sm:$0xf]
  %v104 = vld [vmem:[%s1 + $0xc8] sm:$0xf]
  %v105 = vld [vmem:[%s1 + $0xcc] sm:$0xf]
  %v106 = vld [vmem:[%s1 + $0xd0] sm:$0xf]
  %v107 = vld [vmem:[%s1 + $0xd4] sm:$0xf]
  %v108 = vld [vmem:[%s1 + $0xd8] sm:$0xf]
  %v109 = vld [vmem:[%s1 + $0xdc] sm:$0xf]
  %v110 = vld [vmem:[%s1 + $0xe0] sm:$0xf]
  %v111 = vld [vmem:[%s1 + $0xe4] sm:$0xf]
  %v112 = vld [vmem:[%s1 + $0xe8] sm:$0xf]
  %v113 = vld [vmem:[%s1 + $0xec] sm:$0xf]
  %v114 = vld [vmem:[%s1 + $0xf0] sm:$0xf]
  %v115 = vld [vmem:[%s1 + $0xf4] sm:$0xf]
  %v116 = vld [vmem:[%s1 + $0xf8] sm:$0xf]
  %v117 = vld [vmem:[%s1 + $0xfc] sm:$0xf]
  %v118 = vld [vmem:[%s1 + $0x100] sm:$0xf]
  %v119 = vld [vmem:[%s1 + $0x104] sm:$0xf]
  %v120 = vld [vmem:[%s1 + $0x108] sm:$0xf]
  %v121 = vld [vmem:[%s1 + $0x10c] sm:$0xf]
  %v122 = vld [vmem:[%s1 + $0x110] sm:$0xf]
  %v123 = vld [vmem:[%s1 + $0x114] sm:$0xf]
  %v124 = vld [vmem:[%s1 + $0x118] sm:$0xf]
  %v125 = vld [vmem:[%s1 + $0x11c] sm:$0xf]
  %v126 = vld [vmem:[%s1 + $0x120] sm:$0xf]
  %v127 = vld [vmem:[%s1 + $0x124] sm:$0xf]
  %v128 = vld [vmem:[%s1 + $0x128] sm:$0xf]
  %v129 = vld [vmem:[%s1 + $0x12c] sm:$0xf]
  %v130 = vld [vmem:[%s1 + $0x130] sm:$0xf]
  %v131 = vld [vmem:[%s1 + $0x134] sm:$0xf]
  %v132 = vld [vmem:[%s1 + $0x138] sm:$0xf]
  %v133 = vld [vmem:[%s1 + $0x13c] sm:$0xf]
  %v134 = vld [vmem:[%s2] sm:$0x1]
  %v136 = vlaneseq
  %v137 = vshrl.u32 %v136, 7
  %v138 = vsub.s32 0, %v137
  %v139 = vrot.slane %v134, %v138
  %v180 = vunpack.c.l.b16 %v15
  %v181 = vunpack.c.h.b16 %v15
  %v182 = vunpack.c.l.b16 %v16
  %v183 = vunpack.c.h.b16 %v16
  %v184 = vunpack.c.l.b16 %v17
  %v185 = vunpack.c.l.b16 %v18
  %v186 = vunpack.c.h.b16 %v18
  %v187 = vunpack.c.l.b16 %v19
  %v188 = vunpack.c.h.b16 %v19
  %v189 = vunpack.c.l.b16 %v20
  %v190 = vunpack.c.l.b16 %v21
  %v191 = vunpack.c.h.b16 %v21
  %v192 = vunpack.c.l.b16 %v22
  %v193 = vunpack.c.h.b16 %v22
  %v194 = vunpack.c.l.b16 %v23
  %v195 = vunpack.c.l.b16 %v24
  %v196 = vunpack.c.h.b16 %v24
  %v197 = vunpack.c.l.b16 %v25
  %v198 = vunpack.c.h.b16 %v25
  %v199 = vunpack.c.l.b16 %v26
  %v200 = vunpack.c.l.b16 %v27
  %v201 = vunpack.c.h.b16 %v27
  %v202 = vunpack.c.l.b16 %v28
  %v203 = vunpack.c.h.b16 %v28
  %v204 = vunpack.c.l.b16 %v29
  %v205 = vunpack.c.l.b16 %v30
  %v206 = vunpack.c.h.b16 %v30
  %v207 = vunpack.c.l.b16 %v31
  %v208 = vunpack.c.h.b16 %v31
  %v209 = vunpack.c.l.b16 %v32
  %v210 = vunpack.c.l.b16 %v33
  %v211 = vunpack.c.h.b16 %v33
  %v212 = vunpack.c.l.b16 %v34
  %v213 = vunpack.c.h.b16 %v34
  %v214 = vunpack.c.l.b16 %v35
  %v215 = vunpack.c.l.b16 %v36
  %v216 = vunpack.c.h.b16 %v36
  %v217 = vunpack.c.l.b16 %v37
  %v218 = vunpack.c.h.b16 %v37
  %v219 = vunpack.c.l.b16 %v38
  %v220 = vunpack.c.l.b16 %v39
  %v221 = vunpack.c.h.b16 %v39
  %v222 = vunpack.c.l.b16 %v40
  %v223 = vunpack.c.h.b16 %v40
  %v224 = vunpack.c.l.b16 %v41
  %v225 = vunpack.c.l.b16 %v42
  %v226 = vunpack.c.h.b16 %v42
  %v227 = vunpack.c.l.b16 %v43
  %v228 = vunpack.c.h.b16 %v43
  %v229 = vunpack.c.l.b16 %v44
  %v230 = vunpack.c.l.b16 %v45
  %v231 = vunpack.c.h.b16 %v45
  %v232 = vunpack.c.l.b16 %v46
  %v233 = vunpack.c.h.b16 %v46
  %v234 = vunpack.c.l.b16 %v47
  %v235 = vunpack.c.l.b16 %v48
  %v236 = vunpack.c.h.b16 %v48
  %v237 = vunpack.c.l.b16 %v49
  %v238 = vunpack.c.h.b16 %v49
  %v239 = vunpack.c.l.b16 %v50
  %v240 = vunpack.c.l.b16 %v51
  %v241 = vunpack.c.h.b16 %v51
  %v242 = vunpack.c.l.b16 %v52
  %v243 = vunpack.c.h.b16 %v52
  %v244 = vunpack.c.l.b16 %v53
  %v245 = vpack.c.b16 %v185, %v180
  %v246 = vpack.c.b16 %v186, %v181
  %v247 = vpack.c.b16 %v187, %v182
  %v248 = vpack.c.b16 %v188, %v183
  %v249 = vpack.c.b16 %v189, %v184
  %v250 = vpack.c.b16 %v195, %v190
  %v251 = vpack.c.b16 %v196, %v191
  %v252 = vpack.c.b16 %v197, %v192
  %v253 = vpack.c.b16 %v198, %v193
  %v254 = vpack.c.b16 %v199, %v194
  %v255 = vpack.c.b16 %v205, %v200
  %v256 = vpack.c.b16 %v206, %v201
  %v257 = vpack.c.b16 %v207, %v202
  %v258 = vpack.c.b16 %v208, %v203
  %v259 = vpack.c.b16 %v209, %v204
  %v260 = vpack.c.b16 %v215, %v210
  %v261 = vpack.c.b16 %v216, %v211
  %v262 = vpack.c.b16 %v217, %v212
  %v263 = vpack.c.b16 %v218, %v213
  %v264 = vpack.c.b16 %v219, %v214
  %v265 = vpack.c.b16 %v225, %v220
  %v266 = vpack.c.b16 %v226, %v221
  %v267 = vpack.c.b16 %v227, %v222
  %v268 = vpack.c.b16 %v228, %v223
  %v269 = vpack.c.b16 %v229, %v224
  %v270 = vpack.c.b16 %v235, %v230
  %v271 = vpack.c.b16 %v236, %v231
  %v272 = vpack.c.b16 %v237, %v232
  %v273 = vpack.c.b16 %v238, %v233
  %v274 = vpack.c.b16 %v239, %v234
  %v275 = vpack.c.b16 %v240, %v240
  %v276 = vpack.c.b16 %v241, %v241
  %v277 = vpack.c.b16 %v242, %v242
  %v278 = vpack.c.b16 %v243, %v243
  %v279 = vpack.c.b16 %v244, %v244
  %v395 = vunpack.c.l.b16 %v54
  %v396 = vunpack.c.l.b16 %v55
  %v397 = vunpack.c.l.b16 %v56
  %v398 = vunpack.c.l.b16 %v57
  %v399 = vunpack.c.l.b16 %v58
  %v400 = vunpack.c.l.b16 %v59
  %v401 = vunpack.c.l.b16 %v60
  %v402 = vunpack.c.l.b16 %v61
  %v403 = vunpack.c.l.b16 %v62
  %v404 = vunpack.c.l.b16 %v63
  %v405 = vunpack.c.l.b16 %v64
  %v406 = vunpack.c.l.b16 %v65
  %v407 = vunpack.c.l.b16 %v66
  %v408 = vunpack.c.l.b16 %v67
  %v409 = vunpack.c.l.b16 %v68
  %v410 = vunpack.c.l.b16 %v69
  %v411 = vunpack.c.l.b16 %v70
  %v412 = vunpack.c.l.b16 %v71
  %v413 = vunpack.c.l.b16 %v72
  %v414 = vunpack.c.l.b16 %v73
  %v415 = vunpack.c.l.b16 %v74
  %v416 = vunpack.c.l.b16 %v75
  %v417 = vunpack.c.l.b16 %v76
  %v418 = vunpack.c.l.b16 %v77
  %v419 = vunpack.c.l.b16 %v78
  %v420 = vunpack.c.l.b16 %v79
  %v421 = vunpack.c.l.b16 %v80
  %v422 = vunpack.c.l.b16 %v81
  %v423 = vunpack.c.l.b16 %v82
  %v424 = vunpack.c.l.b16 %v83
  %v425 = vunpack.c.l.b16 %v84
  %v426 = vunpack.c.l.b16 %v85
  %v427 = vunpack.c.l.b16 %v86
  %v428 = vunpack.c.l.b16 %v87
  %v429 = vunpack.c.l.b16 %v88
  %v430 = vunpack.c.l.b16 %v89
  %v431 = vunpack.c.l.b16 %v90
  %v432 = vunpack.c.l.b16 %v91
  %v433 = vunpack.c.l.b16 %v92
  %v434 = vunpack.c.l.b16 %v93
  %v435 = vunpack.c.l.b16 %v94
  %v436 = vunpack.c.l.b16 %v95
  %v437 = vunpack.c.l.b16 %v96
  %v438 = vunpack.c.l.b16 %v97
  %v439 = vunpack.c.l.b16 %v98
  %v440 = vunpack.c.l.b16 %v99
  %v441 = vunpack.c.l.b16 %v100
  %v442 = vunpack.c.l.b16 %v101
  %v443 = vunpack.c.l.b16 %v102
  %v444 = vunpack.c.l.b16 %v103
  %v445 = vunpack.c.l.b16 %v104
  %v446 = vunpack.c.l.b16 %v105
  %v447 = vunpack.c.l.b16 %v106
  %v448 = vunpack.c.l.b16 %v107
  %v449 = vunpack.c.l.b16 %v108
  %v450 = vunpack.c.l.b16 %v109
  %v451 = vunpack.c.l.b16 %v110
  %v452 = vunpack.c.l.b16 %v111
  %v453 = vunpack.c.l.b16 %v112
  %v454 = vunpack.c.l.b16 %v113
  %v455 = vunpack.c.l.b16 %v114
  %v456 = vunpack.c.l.b16 %v115
  %v457 = vunpack.c.l.b16 %v116
  %v458 = vunpack.c.l.b16 %v117
  %v459 = vunpack.c.l.b16 %v118
  %v460 = vunpack.c.l.b16 %v119
  %v461 = vunpack.c.l.b16 %v120
  %v462 = vunpack.c.l.b16 %v121
  %v463 = vunpack.c.l.b16 %v122
  %v464 = vunpack.c.l.b16 %v123
  %v465 = vunpack.c.l.b16 %v124
  %v466 = vunpack.c.l.b16 %v125
  %v467 = vunpack.c.l.b16 %v126
  %v468 = vunpack.c.l.b16 %v127
  %v469 = vunpack.c.l.b16 %v128
  %v470 = vunpack.c.l.b16 %v129
  %v471 = vunpack.c.l.b16 %v130
  %v472 = vunpack.c.l.b16 %v131
  %v473 = vunpack.c.l.b16 %v132
  %v474 = vunpack.c.l.b16 %v133
  %v475 = vpack.c.b16 %v396, %v395
  %v476 = vpack.c.b16 %v398, %v397
  %v477 = vpack.c.b16 %v400, %v399
  %v478 = vpack.c.b16 %v402, %v401
  %v479 = vpack.c.b16 %v404, %v403
  %v480 = vpack.c.b16 %v406, %v405
  %v481 = vpack.c.b16 %v408, %v407
  %v482 = vpack.c.b16 %v410, %v409
  %v483 = vpack.c.b16 %v412, %v411
  %v484 = vpack.c.b16 %v414, %v413
  %v485 = vpack.c.b16 %v416, %v415
  %v486 = vpack.c.b16 %v418, %v417
  %v487 = vpack.c.b16 %v420, %v419
  %v488 = vpack.c.b16 %v422, %v421
  %v489 = vpack.c.b16 %v424, %v423
  %v490 = vpack.c.b16 %v426, %v425
  %v491 = vpack.c.b16 %v428, %v427
  %v492 = vpack.c.b16 %v430, %v429
  %v493 = vpack.c.b16 %v432, %v431
  %v494 = vpack.c.b16 %v434, %v433
  %v495 = vpack.c.b16 %v436, %v435
  %v496 = vpack.c.b16 %v438, %v437
  %v497 = vpack.c.b16 %v440, %v439
  %v498 = vpack.c.b16 %v442, %v441
  %v499 = vpack.c.b16 %v444, %v443
  %v500 = vpack.c.b16 %v446, %v445
  %v501 = vpack.c.b16 %v448, %v447
  %v502 = vpack.c.b16 %v450, %v449
  %v503 = vpack.c.b16 %v452, %v451
  %v504 = vpack.c.b16 %v454, %v453
  %v505 = vpack.c.b16 %v456, %v455
  %v506 = vpack.c.b16 %v458, %v457
  %v507 = vpack.c.b16 %v460, %v459
  %v508 = vpack.c.b16 %v462, %v461
  %v509 = vpack.c.b16 %v464, %v463
  %v510 = vpack.c.b16 %v466, %v465
  %v511 = vpack.c.b16 %v468, %v467
  %v512 = vpack.c.b16 %v470, %v469
  %v513 = vpack.c.b16 %v472, %v471
  %v514 = vpack.c.b16 %v474, %v473
  %555 = vmatprep.subr.bf16.mxu0 0
  %556 = vmatpush1.bf16.msra.mxu0 %v482
  %557 = vmatprep.subr.bf16.mxu0 0
  %558 = vmatpush1.bf16.msra.mxu0 %v481
  %559 = vmatprep.subr.bf16.mxu0 0
  %560 = vmatpush1.bf16.msra.mxu0 %v480
  %561 = vmatprep.subr.bf16.mxu0 0
  %562 = vmatpush1.bf16.msra.mxu0 %v479
  %563 = vmatprep.subr.bf16.mxu0 0
  %564 = vmatpush1.bf16.msra.mxu0 %v478
  %565 = vmatprep.subr.bf16.mxu0 0
  %566 = vmatpush1.bf16.msra.mxu0 %v477
  %567 = vmatprep.subr.bf16.mxu0 0
  %568 = vmatpush1.bf16.msra.mxu0 %v476
  %569 = vmatprep.subr.bf16.mxu0 0
  %570 = vmatpush1.bf16.msra.mxu0 %v475
  %571 = vmatprep.subr.bf16.mxu0 0
  %572 = vmatpush2.bf16.msra.mxu0 %v490
  %573 = vmatprep.subr.bf16.mxu0 0
  %574 = vmatpush2.bf16.msra.mxu0 %v489
  %575 = vmatprep.subr.bf16.mxu0 0
  %576 = vmatpush2.bf16.msra.mxu0 %v488
  %577 = vmatprep.subr.bf16.mxu0 0
  %578 = vmatpush2.bf16.msra.mxu0 %v487
  %579 = vmatprep.subr.bf16.mxu0 0
  %580 = vmatpush2.bf16.msra.mxu0 %v486
  %581 = vmatprep.subr.bf16.mxu0 0
  %582 = vmatpush2.bf16.msra.mxu0 %v485
  %583 = vmatprep.subr.bf16.mxu0 0
  %584 = vmatpush2.bf16.msra.mxu0 %v484
  %585 = vmatprep.subr.bf16.mxu0 0
  %586 = vmatpush2.bf16.msra.mxu0 %v483
  %587 = vmatprep.mubr.bf16.mxu0 %v246
  %588 = vmatmul.mubr.bf16.gmra.mxu0 %v245
  %v589 = vpop.f32.mrf.mxu0
  %v590 = vadd.f32 %v139, %v589
  %v591 = vpop.f32.mrf.mxu0
  %v592 = vpop.f32.mrf.mxu0
  %v593 = vadd.f32 %v139, %v592
  %v594 = vpop.f32.mrf.mxu0
  %595 = vmatprep.mubr.bf16.mxu0 %v251
  %596 = vmatmul.mubr.bf16.gmra.mxu0 %v250
  %v597 = vpop.f32.mrf.mxu0
  %v598 = vadd.f32 %v139, %v597
  %v599 = vpop.f32.mrf.mxu0
  %v600 = vpop.f32.mrf.mxu0
  %v601 = vadd.f32 %v139, %v600
  %v602 = vpop.f32.mrf.mxu0
  %603 = vmatprep.mubr.bf16.mxu0 %v256
  %604 = vmatmul.mubr.bf16.gmra.mxu0 %v255
  %v605 = vpop.f32.mrf.mxu0
  %v606 = vadd.f32 %v139, %v605
  %v607 = vpop.f32.mrf.mxu0
  %v608 = vpop.f32.mrf.mxu0
  %v609 = vadd.f32 %v139, %v608
  %v610 = vpop.f32.mrf.mxu0
  %611 = vmatprep.mubr.bf16.mxu0 %v261
  %612 = vmatmul.mubr.bf16.gmra.mxu0 %v260
  %v613 = vpop.f32.mrf.mxu0
  %v614 = vadd.f32 %v139, %v613
  %v615 = vpop.f32.mrf.mxu0
  %v616 = vpop.f32.mrf.mxu0
  %v617 = vadd.f32 %v139, %v616
  %v618 = vpop.f32.mrf.mxu0
  %619 = vmatprep.mubr.bf16.mxu0 %v266
  %620 = vmatmul.mubr.bf16.gmra.mxu0 %v265
  %v621 = vpop.f32.mrf.mxu0
  %v622 = vadd.f32 %v139, %v621
  %v623 = vpop.f32.mrf.mxu0
  %v624 = vpop.f32.mrf.mxu0
  %v625 = vadd.f32 %v139, %v624
  %v626 = vpop.f32.mrf.mxu0
  %627 = vmatprep.mubr.bf16.mxu0 %v271
  %628 = vmatmul.mubr.bf16.gmra.mxu0 %v270
  %v629 = vpop.f32.mrf.mxu0
  %v630 = vadd.f32 %v139, %v629
  %v631 = vpop.f32.mrf.mxu0
  %v632 = vpop.f32.mrf.mxu0
  %v633 = vadd.f32 %v139, %v632
  %v634 = vpop.f32.mrf.mxu0
  %635 = vmatprep.mubr.bf16.mxu0 %v276
  %636 = vmatmul.mubr.bf16.gmra.mxu0 %v275
  %v637 = vpop.f32.mrf.mxu0
  %v638 = vadd.f32 %v139, %v637
  %v639 = vpop.f32.mrf.mxu0
  %v640 = vpop.f32.mrf.mxu0
  %v641 = vpop.f32.mrf.mxu0
  %642 = vdwg.mxu0
  %643 = vmatprep.subr.bf16.mxu0 0
  %644 = vmatpush1.bf16.msra.mxu0 %v498
  %645 = vmatprep.subr.bf16.mxu0 0
  %646 = vmatpush1.bf16.msra.mxu0 %v497
  %647 = vmatprep.subr.bf16.mxu0 0
  %648 = vmatpush1.bf16.msra.mxu0 %v496
  %649 = vmatprep.subr.bf16.mxu0 0
  %650 = vmatpush1.bf16.msra.mxu0 %v495
  %651 = vmatprep.subr.bf16.mxu0 0
  %652 = vmatpush1.bf16.msra.mxu0 %v494
  %653 = vmatprep.subr.bf16.mxu0 0
  %654 = vmatpush1.bf16.msra.mxu0 %v493
  %655 = vmatprep.subr.bf16.mxu0 0
  %656 = vmatpush1.bf16.msra.mxu0 %v492
  %657 = vmatprep.subr.bf16.mxu0 0
  %658 = vmatpush1.bf16.msra.mxu0 %v491
  %659 = vmatprep.subr.bf16.mxu0 0
  %660 = vmatpush2.bf16.msra.mxu0 %v506
  %661 = vmatprep.subr.bf16.mxu0 0
  %662 = vmatpush2.bf16.msra.mxu0 %v505
  %663 = vmatprep.subr.bf16.mxu0 0
  %664 = vmatpush2.bf16.msra.mxu0 %v504
  %665 = vmatprep.subr.bf16.mxu0 0
  %666 = vmatpush2.bf16.msra.mxu0 %v503
  %667 = vmatprep.subr.bf16.mxu0 0
  %668 = vmatpush2.bf16.msra.mxu0 %v502
  %669 = vmatprep.subr.bf16.mxu0 0
  %670 = vmatpush2.bf16.msra.mxu0 %v501
  %671 = vmatprep.subr.bf16.mxu0 0
  %672 = vmatpush2.bf16.msra.mxu0 %v500
  %673 = vmatprep.subr.bf16.mxu0 0
  %674 = vmatpush2.bf16.msra.mxu0 %v499
  %675 = vmatprep.mubr.bf16.mxu0 %v248
  %676 = vmatmul.mubr.bf16.gmra.mxu0 %v247
  %v677 = vpop.f32.mrf.mxu0
  %v678 = vadd.f32 %v590, %v677
  %v679 = vpop.f32.mrf.mxu0
  %v680 = vpop.f32.mrf.mxu0
  %v681 = vadd.f32 %v593, %v680
  %v682 = vpop.f32.mrf.mxu0
  %683 = vmatprep.mubr.bf16.mxu0 %v253
  %684 = vmatmul.mubr.bf16.gmra.mxu0 %v252
  %v685 = vpop.f32.mrf.mxu0
  %v686 = vadd.f32 %v598, %v685
  %v687 = vpop.f32.mrf.mxu0
  %v688 = vpop.f32.mrf.mxu0
  %v689 = vadd.f32 %v601, %v688
  %v690 = vpop.f32.mrf.mxu0
  %691 = vmatprep.mubr.bf16.mxu0 %v258
  %692 = vmatmul.mubr.bf16.gmra.mxu0 %v257
  %v693 = vpop.f32.mrf.mxu0
  %v694 = vadd.f32 %v606, %v693
  %v695 = vpop.f32.mrf.mxu0
  %v696 = vpop.f32.mrf.mxu0
  %v697 = vadd.f32 %v609, %v696
  %v698 = vpop.f32.mrf.mxu0
  %699 = vmatprep.mubr.bf16.mxu0 %v263
  %700 = vmatmul.mubr.bf16.gmra.mxu0 %v262
  %v701 = vpop.f32.mrf.mxu0
  %v702 = vadd.f32 %v614, %v701
  %v703 = vpop.f32.mrf.mxu0
  %v704 = vpop.f32.mrf.mxu0
  %v705 = vadd.f32 %v617, %v704
  %v706 = vpop.f32.mrf.mxu0
  %707 = vmatprep.mubr.bf16.mxu0 %v268
  %708 = vmatmul.mubr.bf16.gmra.mxu0 %v267
  %v709 = vpop.f32.mrf.mxu0
  %v710 = vadd.f32 %v622, %v709
  %v711 = vpop.f32.mrf.mxu0
  %v712 = vpop.f32.mrf.mxu0
  %v713 = vadd.f32 %v625, %v712
  %v714 = vpop.f32.mrf.mxu0
  %715 = vmatprep.mubr.bf16.mxu0 %v273
  %716 = vmatmul.mubr.bf16.gmra.mxu0 %v272
  %v717 = vpop.f32.mrf.mxu0
  %v718 = vadd.f32 %v630, %v717
  %v719 = vpop.f32.mrf.mxu0
  %v720 = vpop.f32.mrf.mxu0
  %v721 = vadd.f32 %v633, %v720
  %v722 = vpop.f32.mrf.mxu0
  %723 = vmatprep.mubr.bf16.mxu0 %v278
  %724 = vmatmul.mubr.bf16.gmra.mxu0 %v277
  %v725 = vpop.f32.mrf.mxu0
  %v726 = vadd.f32 %v638, %v725
  %v727 = vpop.f32.mrf.mxu0
  %v728 = vpop.f32.mrf.mxu0
  %v729 = vpop.f32.mrf.mxu0
  %730 = vdwg.mxu0
  %731 = vmatprep.subr.bf16.mxu0 0
  %732 = vmatpush1.bf16.msra.mxu0 %v514
  %733 = vmatprep.subr.bf16.mxu0 0
  %734 = vmatpush1.bf16.msra.mxu0 %v513
  %735 = vmatprep.subr.bf16.mxu0 0
  %736 = vmatpush1.bf16.msra.mxu0 %v512
  %737 = vmatprep.subr.bf16.mxu0 0
  %738 = vmatpush1.bf16.msra.mxu0 %v511
  %739 = vmatprep.subr.bf16.mxu0 0
  %740 = vmatpush1.bf16.msra.mxu0 %v510
  %741 = vmatprep.subr.bf16.mxu0 0
  %742 = vmatpush1.bf16.msra.mxu0 %v509
  %743 = vmatprep.subr.bf16.mxu0 0
  %744 = vmatpush1.bf16.msra.mxu0 %v508
  %745 = vmatprep.subr.bf16.mxu0 0
  %746 = vmatpush1.bf16.msra.mxu0 %v507
  %747 = vmatprep.subr.bf16.mxu0 0
  %748 = vmatpush2.bf16.msra.mxu0 0
  %749 = vmatprep.subr.bf16.mxu0 0
  %750 = vmatpush2.bf16.msra.mxu0 0
  %751 = vmatprep.subr.bf16.mxu0 0
  %752 = vmatpush2.bf16.msra.mxu0 0
  %753 = vmatprep.subr.bf16.mxu0 0
  %754 = vmatpush2.bf16.msra.mxu0 0
  %755 = vmatprep.subr.bf16.mxu0 0
  %756 = vmatpush2.bf16.msra.mxu0 0
  %757 = vmatprep.subr.bf16.mxu0 0
  %758 = vmatpush2.bf16.msra.mxu0 0
  %759 = vmatprep.subr.bf16.mxu0 0
  %760 = vmatpush2.bf16.msra.mxu0 0
  %761 = vmatprep.subr.bf16.mxu0 0
  %762 = vmatpush2.bf16.msra.mxu0 0
  %763 = vmatprep.mubr.bf16.mxu0 0
  %764 = vmatmul.mubr.bf16.gmra.mxu0 %v249
  %v765 = vpop.f32.mrf.mxu0
  %v766 = vadd.f32 %v678, %v765
  %v767 = vpop.f32.mrf.mxu0
  %v768 = vpop.f32.mrf.mxu0
  %v769 = vadd.f32 %v681, %v768
  %v770 = vpop.f32.mrf.mxu0
  %771 = vmatprep.mubr.bf16.mxu0 0
  %772 = vmatmul.mubr.bf16.gmra.mxu0 %v254
  %v773 = vpop.f32.mrf.mxu0
  %v774 = vadd.f32 %v686, %v773
  %v775 = vpop.f32.mrf.mxu0
  %v776 = vpop.f32.mrf.mxu0
  %v777 = vadd.f32 %v689, %v776
  %v778 = vpop.f32.mrf.mxu0
  %779 = vmatprep.mubr.bf16.mxu0 0
  %780 = vmatmul.mubr.bf16.gmra.mxu0 %v259
  %v781 = vpop.f32.mrf.mxu0
  %v782 = vadd.f32 %v694, %v781
  %v783 = vpop.f32.mrf.mxu0
  %v784 = vpop.f32.mrf.mxu0
  %v785 = vadd.f32 %v697, %v784
  %v786 = vpop.f32.mrf.mxu0
  %787 = vmatprep.mubr.bf16.mxu0 0
  %788 = vmatmul.mubr.bf16.gmra.mxu0 %v264
  %v789 = vpop.f32.mrf.mxu0
  %v790 = vadd.f32 %v702, %v789
  %v791 = vpop.f32.mrf.mxu0
  %v792 = vpop.f32.mrf.mxu0
  %v793 = vadd.f32 %v705, %v792
  %v794 = vpop.f32.mrf.mxu0
  %795 = vmatprep.mubr.bf16.mxu0 0
  %796 = vmatmul.mubr.bf16.gmra.mxu0 %v269
  %v797 = vpop.f32.mrf.mxu0
  %v798 = vadd.f32 %v710, %v797
  %v799 = vpop.f32.mrf.mxu0
  %v800 = vpop.f32.mrf.mxu0
  %v801 = vadd.f32 %v713, %v800
  %v802 = vpop.f32.mrf.mxu0
  %803 = vmatprep.mubr.bf16.mxu0 0
  %804 = vmatmul.mubr.bf16.gmra.mxu0 %v274
  %v805 = vpop.f32.mrf.mxu0
  %v806 = vadd.f32 %v718, %v805
  %v807 = vpop.f32.mrf.mxu0
  %v808 = vpop.f32.mrf.mxu0
  %v809 = vadd.f32 %v721, %v808
  %v810 = vpop.f32.mrf.mxu0
  %811 = vmatprep.mubr.bf16.mxu0 0
  %812 = vmatmul.mubr.bf16.gmra.mxu0 %v279
  %v813 = vpop.f32.mrf.mxu0
  %v814 = vadd.f32 %v726, %v813
  %v815 = vpop.f32.mrf.mxu0
  %v816 = vpop.f32.mrf.mxu0
  %v817 = vpop.f32.mrf.mxu0
  %818 = vdwg.mxu0
  %v819 = vmax.f32 %v766, 0.0
  %v820 = vmax.f32 %v769, 0.0
  %v821 = vmax.f32 %v774, 0.0
  %v822 = vmax.f32 %v777, 0.0
  %v823 = vmax.f32 %v782, 0.0
  %v824 = vmax.f32 %v785, 0.0
  %v825 = vmax.f32 %v790, 0.0
  %v826 = vmax.f32 %v793, 0.0
  %v827 = vmax.f32 %v798, 0.0
  %v828 = vmax.f32 %v801, 0.0
  %v829 = vmax.f32 %v806, 0.0
  %v830 = vmax.f32 %v809, 0.0
  %v831 = vmax.f32 %v814, 0.0
  %v832 = vpack.c.bf16 %v820, %v819
  %v833 = vpack.c.bf16 %v822, %v821
  %v834 = vpack.c.bf16 %v824, %v823
  %v835 = vpack.c.bf16 %v826, %v825
  %v836 = vpack.c.bf16 %v828, %v827
  %v837 = vpack.c.bf16 %v830, %v829
  %v838 = vpack.c.bf16 %v831, %v831
  %v846 = vunpack.c.l.b16 %v832
  %v847 = vunpack.c.h.b16 %v832
  %v848 = vunpack.c.l.b16 %v833
  %v849 = vunpack.c.h.b16 %v833
  %v850 = vunpack.c.l.b16 %v834
  %v851 = vunpack.c.h.b16 %v834
  %v852 = vunpack.c.l.b16 %v835
  %v853 = vunpack.c.h.b16 %v835
  %v854 = vunpack.c.l.b16 %v836
  %v855 = vunpack.c.h.b16 %v836
  %v856 = vunpack.c.l.b16 %v837
  %v857 = vunpack.c.h.b16 %v837
  %v858 = vunpack.c.l.b16 %v838
  %v859 = vpack.c.b16 %v846, %v846
  %v860 = vpack.c.b16 %v847, %v847
  %v861 = vpack.c.b16 %v848, %v848
  %v862 = vpack.c.b16 %v849, %v849
  %v863 = vpack.c.b16 %v850, %v850
  %v864 = vpack.c.b16 %v851, %v851
  %v865 = vpack.c.b16 %v852, %v852
  %v866 = vpack.c.b16 %v853, %v853
  %v867 = vpack.c.b16 %v854, %v854
  %v868 = vpack.c.b16 %v855, %v855
  %v869 = vpack.c.b16 %v856, %v856
  %v870 = vpack.c.b16 %v857, %v857
  %v871 = vpack.c.b16 %v858, %v858
  %885 = vst [vmem:[%s3] sm:$0xf] %v859
  %886 = vst [vmem:[%s3 + $0x4] sm:$0xf] %v860
  %887 = vst [vmem:[%s3 + $0x8] sm:$0xf] %v861
  %888 = vst [vmem:[%s3 + $0xc] sm:$0xf] %v862
  %889 = vst [vmem:[%s3 + $0x10] sm:$0xf] %v863
  %890 = vst [vmem:[%s3 + $0x14] sm:$0xf] %v864
  %891 = vst [vmem:[%s3 + $0x18] sm:$0xf] %v865
  %892 = vst [vmem:[%s3 + $0x1c] sm:$0xf] %v866
  %893 = vst [vmem:[%s3 + $0x20] sm:$0xf] %v867
  %894 = vst [vmem:[%s3 + $0x24] sm:$0xf] %v868
  %895 = vst [vmem:[%s3 + $0x28] sm:$0xf] %v869
  %896 = vst [vmem:[%s3 + $0x2c] sm:$0xf] %v870
  %897 = vst [vmem:[%s3 + $0x30] sm:$0xf] %v871
  // Predicated region
  $region14: #{dqn_forward.6} parent=0 // pred_check
    _
  $region15: #{dqn_forward.6} parent=0 // pred_check_branch
    %899 = sbr.rel (0) target = $region17
  $region16: #{dqn_forward.6} parent=0 // pred_region
    _
  $region17: #{dqn_forward.6} parent=0 // pred_fallthru
    _
  // Predicated region
  $region18: #{dqn_forward.6} parent=0 // pred_check
    _
  $region19: #{dqn_forward.6} parent=0 // pred_check_branch
    %901 = sbr.rel (0) target = $region21
  $region20: #{dqn_forward.6} parent=0 // pred_region
    _
  $region21: #{dqn_forward.6} parent=0 // pred_fallthru
    _

// kernel: dqn_forward.7
$region0: #{dqn_forward.7}
  #allocation0 [shape = 'u32[]', space=smem, size = 0x4, offset = 0x4, fixed_abs, tag = 'smem constant byte address 0x4 - core index']
  #allocation1 [shape = 'u32[144,128]{1,0:T(1,128)}', space=vmem, size = 0x12000, scoped, tag = 'internal scratch']
  #allocation2 [shape = 'f32[2,512]{1,0:T(2,128)}', space=vmem, size = 0x1000, scoped, tag = 'scratch operand']
  %s0 = inlined_call_operand.vmem [shape: bf16[2,3200], index: 0, kind: input, shape index: {}]
  %s1 = inlined_call_operand.vmem [shape: bf16[3200,512], index: 1, kind: input, shape index: {}]
  %s2 = inlined_call_operand.vmem [shape: f32[1,512], index: 2, kind: input, shape index: {}]
  %s3 = inlined_call_operand.vmem [shape: bf16[512,128], index: 3, kind: input, shape index: {}]
  %s4 = inlined_call_operand.vmem [shape: f32[1,128], index: 4, kind: input, shape index: {}]
  %s5 = inlined_call_operand.hbm [shape: f32[2,128], index: 5, kind: output, shape index: {}]
  %s6 = sld [smem:[#allocation0]]
  $region61: #{dqn_forward.7} parent=0
    _
  %s8 = ssub.s32 1, %s6
  %s9 = scalar_select 0, %s8, %s6
  $region1: #{dqn_forward.7} parent=0
    #allocation3 [shape = 'u8[1024]{0}', space=vmem, size = 0x400, scoped, tag = 'output window, operand 0, single buffered']
    #allocation4 [shape = 's32[2]{0}', space=sflag, size = 0x8, scoped, tag = 'scoped memory for dqn_forward.7']
    %10 = vsyncpa [#allocation4], 0
    loop: start=0, step=1, limit=7
    $region2: #{dqn_forward.7} parent=1 // loop_pre_header
      _
    $region3: #{dqn_forward.7} parent=1 // loop_header
      %s12 = sphi 0, %s16
      %p13 = scmp.ge.s32.totalorder %s12, 7
      %s22 = sphi 0, %s24
      %s25 = sphi 0, %s22
      %s26 = sphi 0, %s25
      %s42 = sphi 0, %s26
      %s48 = sphi 0, %s50
      %s51 = sphi 0, %s48
      %s52 = sphi 0, %s51
      %s68 = sphi 0, %s52
      %s72 = sphi 0, %s72
      %s74 = sphi 0, %s72
      %s75 = sphi 0, %s74
      %s89 = sphi 0, %s75
      %s93 = sphi 0, %s93
      %s95 = sphi 0, %s93
      %s96 = sphi 0, %s95
      %s110 = sphi 0, %s96
      %s114 = sphi 0, %s114
      %s116 = sphi 0, %s114
      %s117 = sphi 0, %s116
      %s131 = sphi 0, %s117
      %s135 = sphi 0, %s135
      %s137 = sphi 0, %s135
      %s138 = sphi 0, %s137
      %s152 = sphi 0, %s138
    $region4: #{dqn_forward.7} parent=1 // loop_header_branch
      %15 = sbr.rel (%p13) target = $region8
    $region5: #{dqn_forward.7} parent=1 // loop_body
      %s17 = ssub.s32 %s12, 1
      %s18 = ssub.s32 %s12, 2
      %s19 = sadd.s32 %s12, 1
      %s20 = ssub.s32 %s12, %s19
      %p21 = scmp.eq.s32.totalorder %s20, 0
      %s23 = sadd.s32 %s22, 1
      %s24 = scalar_select %p21, %s22, %s23
      %p27 = pneg %p21
      %p28 = scmp.eq.s32.totalorder %s12, 4
      %p29 = por %p27, %p28
      %p30 = scmp.ne.s32.totalorder %s22, %s25
      %p31 = scmp.eq.s32.totalorder %s12, 0
      %p32 = por %p30, %p31
      %p33 = scmp.ne.s32.totalorder %s22, %s25
      %p34 = scmp.eq.s32.totalorder %s17, 4
      %p35 = por %p33, %p34
      %p36 = scmp.ne.s32.totalorder %s25, %s26
      %p37 = scmp.eq.s32.totalorder %s17, 0
      %p38 = por %p36, %p37
      %p39 = scmp.ne.s32.totalorder %s25, %s26
      %p40 = scmp.eq.s32.totalorder %s18, 4
      %p41 = por %p39, %p40
      %p43 = scmp.ne.s32.totalorder %s26, %s42
      %p44 = scmp.eq.s32.totalorder %s18, 0
      %p45 = por %p43, %p44
      %s46 = ssub.s32 %s12, %s19
      %p47 = scmp.eq.s32.totalorder %s46, 0
      %s49 = sadd.s32 %s48, 1
      %s50 = scalar_select %p47, %s48, %s49
      %p53 = pneg %p47
      %p54 = scmp.eq.s32.totalorder %s12, 4
      %p55 = por %p53, %p54
      %p56 = scmp.ne.s32.totalorder %s48, %s51
      %p57 = scmp.eq.s32.totalorder %s12, 0
      %p58 = por %p56, %p57
      %p59 = scmp.ne.s32.totalorder %s48, %s51
      %p60 = scmp.eq.s32.totalorder %s17, 4
      %p61 = por %p59, %p60
      %p62 = scmp.ne.s32.totalorder %s51, %s52
      %p63 = scmp.eq.s32.totalorder %s17, 0
      %p64 = por %p62, %p63
      %p65 = scmp.ne.s32.totalorder %s51, %s52
      %p66 = scmp.eq.s32.totalorder %s18, 4
      %p67 = por %p65, %p66
      %p69 = scmp.ne.s32.totalorder %s52, %s68
      %p70 = scmp.eq.s32.totalorder %s18, 0
      %p71 = por %p69, %p70
      %s73 = sadd.s32 %s72, 1
      %p76 = scmp.eq.s32.totalorder %s12, 4
      %p77 = scmp.ne.s32.totalorder %s72, %s74
      %p78 = scmp.eq.s32.totalorder %s12, 0
      %p79 = por %p77, %p78
      %p80 = scmp.ne.s32.totalorder %s72, %s74
      %p81 = scmp.eq.s32.totalorder %s17, 4
      %p82 = por %p80, %p81
      %p83 = scmp.ne.s32.totalorder %s74, %s75
      %p84 = scmp.eq.s32.totalorder %s17, 0
      %p85 = por %p83, %p84
      %p86 = scmp.ne.s32.totalorder %s74, %s75
      %p87 = scmp.eq.s32.totalorder %s18, 4
      %p88 = por %p86, %p87
      %p90 = scmp.ne.s32.totalorder %s75, %s89
      %p91 = scmp.eq.s32.totalorder %s18, 0
      %p92 = por %p90, %p91
      %s94 = sadd.s32 %s93, 1
      %p97 = scmp.eq.s32.totalorder %s12, 4
      %p98 = scmp.ne.s32.totalorder %s93, %s95
      %p99 = scmp.eq.s32.totalorder %s12, 0
      %p100 = por %p98, %p99
      %p101 = scmp.ne.s32.totalorder %s93, %s95
      %p102 = scmp.eq.s32.totalorder %s17, 4
      %p103 = por %p101, %p102
      %p104 = scmp.ne.s32.totalorder %s95, %s96
      %p105 = scmp.eq.s32.totalorder %s17, 0
      %p106 = por %p104, %p105
      %p107 = scmp.ne.s32.totalorder %s95, %s96
      %p108 = scmp.eq.s32.totalorder %s18, 4
      %p109 = por %p107, %p108
      %p111 = scmp.ne.s32.totalorder %s96, %s110
      %p112 = scmp.eq.s32.totalorder %s18, 0
      %p113 = por %p111, %p112
      %s115 = sadd.s32 %s114, 1
      %p118 = scmp.eq.s32.totalorder %s12, 4
      %p119 = scmp.ne.s32.totalorder %s114, %s116
      %p120 = scmp.eq.s32.totalorder %s12, 0
      %p121 = por %p119, %p120
      %p122 = scmp.ne.s32.totalorder %s114, %s116
      %p123 = scmp.eq.s32.totalorder %s17, 4
      %p124 = por %p122, %p123
      %p125 = scmp.ne.s32.totalorder %s116, %s117
      %p126 = scmp.eq.s32.totalorder %s17, 0
      %p127 = por %p125, %p126
      %p128 = scmp.ne.s32.totalorder %s116, %s117
      %p129 = scmp.eq.s32.totalorder %s18, 4
      %p130 = por %p128, %p129
      %p132 = scmp.ne.s32.totalorder %s117, %s131
      %p133 = scmp.eq.s32.totalorder %s18, 0
      %p134 = por %p132, %p133
      %s136 = sadd.s32 %s135, 1
      %p139 = scmp.eq.s32.totalorder %s12, 4
      %p140 = scmp.ne.s32.totalorder %s135, %s137
      %p141 = scmp.eq.s32.totalorder %s12, 0
      %p142 = por %p140, %p141
      %p143 = scmp.ne.s32.totalorder %s135, %s137
      %p144 = scmp.eq.s32.totalorder %s17, 4
      %p145 = por %p143, %p144
      %p146 = scmp.ne.s32.totalorder %s137, %s138
      %p147 = scmp.eq.s32.totalorder %s17, 0
      %p148 = por %p146, %p147
      %p149 = scmp.ne.s32.totalorder %s137, %s138
      %p150 = scmp.eq.s32.totalorder %s18, 4
      %p151 = por %p149, %p150
      %p153 = scmp.ne.s32.totalorder %s138, %s152
      %p154 = scmp.eq.s32.totalorder %s18, 0
      %p155 = por %p153, %p154
      %p156 = scmp.le.s32.totalorder 1, %s12
      %p157 = scmp.lt.s32.totalorder %s12, 6
      %p158 = pnand %p156, %p157
      %p159 = pneg %p158
      // Predicated region
      $region9: #{dqn_forward.7} parent=5 // pred_check
        _
      $region10: #{dqn_forward.7} parent=5 // pred_check_branch
        %161 = sbr.rel (%p158) target = $region12
      $region11: #{dqn_forward.7} parent=5 // pred_region
        %s162 = ssub.s32 %s12, 1
        // Predicated region
        $region13: #{dqn_forward.7} parent=11 // pred_check
          %p163 = pneg %p85
        $region14: #{dqn_forward.7} parent=11 // pred_check_branch
          %165 = sbr.rel (%p163) target = $region16
        $region15: #{dqn_forward.7} parent=11 // pred_region
          _
        $region16: #{dqn_forward.7} parent=11 // pred_fallthru
          _
        // Predicated region
        $region17: #{dqn_forward.7} parent=11 // pred_check
          %p166 = pneg %p106
        $region18: #{dqn_forward.7} parent=11 // pred_check_branch
          %168 = sbr.rel (%p166) target = $region20
        $region19: #{dqn_forward.7} parent=11 // pred_region
          _
        $region20: #{dqn_forward.7} parent=11 // pred_fallthru
          _
        // Predicated region
        $region21: #{dqn_forward.7} parent=11 // pred_check
          %p169 = pneg %p127
        $region22: #{dqn_forward.7} parent=11 // pred_check_branch
          %171 = sbr.rel (%p169) target = $region24
        $region23: #{dqn_forward.7} parent=11 // pred_region
          _
        $region24: #{dqn_forward.7} parent=11 // pred_fallthru
          _
      $region12: #{dqn_forward.7} parent=5 // pred_fallthru
        _
      %p172 = scmp.lt.s32.totalorder %s12, 5
      // Predicated region
      $region25: #{dqn_forward.7} parent=5 // pred_check
        %p173 = pneg %p172
      $region26: #{dqn_forward.7} parent=5 // pred_check_branch
        %175 = sbr.rel (%p173) target = $region28
      $region27: #{dqn_forward.7} parent=5 // pred_region
        // Predicated region
        $region29: #{dqn_forward.7} parent=27 // pred_check
          %p176 = pneg %p32
        $region30: #{dqn_forward.7} parent=27 // pred_check_branch
          %178 = sbr.rel (%p176) target = $region32
        $region31: #{dqn_forward.7} parent=27 // pred_region
          %s179 = smul.u32 5, %s12
          %p180 = scmp.lt.s32.totalorder %s179, 24
          %s181 = scalar_select %p180, %s179, 24
          %s182 = scalar_lea.vmem %s0, %s181
          %s183 = smul.u32 5, %s12
        $region32: #{dqn_forward.7} parent=27 // pred_fallthru
          _
        // Predicated region
        $region33: #{dqn_forward.7} parent=27 // pred_check
          %p184 = pneg %p58
        $region34: #{dqn_forward.7} parent=27 // pred_check_branch
          %186 = sbr.rel (%p184) target = $region36
        $region35: #{dqn_forward.7} parent=27 // pred_region
          %s187 = smul.u32 80, %s12
          %p188 = scmp.lt.s32.totalorder %s187, 399
          %s189 = scalar_select %p188, %s187, 399
          %s190 = smul.addr %s189, 4
          %s191 = smul.addr %s190, 4
          %s192 = scalar_lea.vmem %s1, %s191
          %s193 = smul.u32 80, %s12
        $region36: #{dqn_forward.7} parent=27 // pred_fallthru
          _
      $region28: #{dqn_forward.7} parent=5 // pred_fallthru
        _
      %p194 = scmp.le.s32.totalorder 1, %s12
      %p195 = scmp.lt.s32.totalorder %s12, 6
      %p196 = pnand %p194, %p195
      %p197 = pneg %p196
      // Predicated region
      $region37: #{dqn_forward.7} parent=5 // pred_check
        _
      $region38: #{dqn_forward.7} parent=5 // pred_check_branch
        %199 = sbr.rel (%p196) target = $region40
      $region39: #{dqn_forward.7} parent=5 // pred_region
        %s200 = ssub.s32 %s12, 1
        %s201 = smul.u32 5, %s17
        %p202 = scmp.lt.s32.totalorder %s201, 24
        %s203 = scalar_select %p202, %s201, 24
        %s204 = scalar_lea.vmem %s0, %s203
        %p205 = pneg %p38
        %p206 = pneg %p35
        %s207 = smul.u32 80, %s17
        %p208 = scmp.lt.s32.totalorder %s207, 399
        %s209 = scalar_select %p208, %s207, 399
        %s210 = smul.addr %s209, 4
        %s211 = smul.addr %s210, 4
        %s212 = scalar_lea.vmem %s1, %s211
        %p213 = pneg %p64
        %p214 = pneg %p61
        %p215 = pneg %p85
        %p216 = pneg %p82
        %p217 = pneg %p106
        %p218 = pneg %p103
        %p219 = pneg %p127
        %p220 = pneg %p124
        %p221 = pneg %p148
        %p222 = pneg %p145
        %s223 = smul.u32 5, %s17
        %p224 = scmp.lt.s32.totalorder %s223, 24
        %s225 = scalar_select %p224, %s223, 24
        %s226 = scalar_lea.vmem %s0, %s225
        %s227 = smul.u32 5, %s17
        %s228 = smul.u32 80, %s17
        %p229 = scmp.lt.s32.totalorder %s228, 399
        %s230 = scalar_select %p229, %s228, 399
        %s231 = smul.addr %s230, 4
        %s232 = smul.addr %s231, 4
        %s233 = scalar_lea.vmem %s1, %s232
        %s234 = smul.u32 80, %s17
        %p236 = scmp.eq.s32.totalorder %s17, 0
        // Predicated region
        $region41: #{dqn_forward.7} parent=39 // pred_check
          %p237 = pneg %p236
        $region42: #{dqn_forward.7} parent=39 // pred_check_branch
          %239 = sbr.rel (%p237) target = $region44
        $region43: #{dqn_forward.7} parent=39 // pred_region
          %240 = vst [vmem:[#allocation2] sm:$0xff] 0.0
        $region44: #{dqn_forward.7} parent=39 // pred_fallthru
          _
        %v241 = vld [vmem:[#allocation2] sm:$0xff]
        %v242 = vld [vmem:[%s226] sm:$0x1f]
        %v243 = vld [vmem:[%s233] sm:$0xff]
        %v244 = vld [vmem:[%s233 + $0x8] sm:$0xff]
        %v245 = vld [vmem:[%s233 + $0x10] sm:$0xff]
        %v246 = vld [vmem:[%s233 + $0x18] sm:$0xff]
        %v247 = vld [vmem:[%s233 + $0x20] sm:$0xff]
        %v248 = vld [vmem:[%s233 + $0x28] sm:$0xff]
        %v249 = vld [vmem:[%s233 + $0x30] sm:$0xff]
        %v250 = vld [vmem:[%s233 + $0x38] sm:$0xff]
        %v251 = vld [vmem:[%s233 + $0x40] sm:$0xff]
        %v252 = vld [vmem:[%s233 + $0x48] sm:$0xff]
        %v253 = vld [vmem:[%s233 + $0x50] sm:$0xff]
        %v254 = vld [vmem:[%s233 + $0x58] sm:$0xff]
        %v255 = vld [vmem:[%s233 + $0x60] sm:$0xff]
        %v256 = vld [vmem:[%s233 + $0x68] sm:$0xff]
        %v257 = vld [vmem:[%s233 + $0x70] sm:$0xff]
        %v258 = vld [vmem:[%s233 + $0x78] sm:$0xff]
        %v259 = vld [vmem:[%s233 + $0x80] sm:$0xff]
        %v260 = vld [vmem:[%s233 + $0x88] sm:$0xff]
        %v261 = vld [vmem:[%s233 + $0x90] sm:$0xff]
        %v262 = vld [vmem:[%s233 + $0x98] sm:$0xff]
        %v263 = vld [vmem:[%s233 + $0xa0] sm:$0xff]
        %v264 = vld [vmem:[%s233 + $0xa8] sm:$0xff]
        %v265 = vld [vmem:[%s233 + $0xb0] sm:$0xff]
        %v266 = vld [vmem:[%s233 + $0xb8] sm:$0xff]
        %v267 = vld [vmem:[%s233 + $0xc0] sm:$0xff]
        %v268 = vld [vmem:[%s233 + $0xc8] sm:$0xff]
        %v269 = vld [vmem:[%s233 + $0xd0] sm:$0xff]
        %v270 = vld [vmem:[%s233 + $0xd8] sm:$0xff]
        %v271 = vld [vmem:[%s233 + $0xe0] sm:$0xff]
        %v272 = vld [vmem:[%s233 + $0xe8] sm:$0xff]
        %v273 = vld [vmem:[%s233 + $0xf0] sm:$0xff]
        %v274 = vld [vmem:[%s233 + $0xf8] sm:$0xff]
        %v275 = vld [vmem:[%s233 + $0x100] sm:$0xff]
        %v276 = vld [vmem:[%s233 + $0x108] sm:$0xff]
        %v277 = vld [vmem:[%s233 + $0x110] sm:$0xff]
        %v278 = vld [vmem:[%s233 + $0x118] sm:$0xff]
        %v279 = vld [vmem:[%s233 + $0x120] sm:$0xff]
        %v280 = vld [vmem:[%s233 + $0x128] sm:$0xff]
        %v281 = vld [vmem:[%s233 + $0x130] sm:$0xff]
        %v282 = vld [vmem:[%s233 + $0x138] sm:$0xff]
        %v283 = vld [vmem:[%s233 + $0x140] sm:$0xff]
        %v284 = vld [vmem:[%s233 + $0x148] sm:$0xff]
        %v285 = vld [vmem:[%s233 + $0x150] sm:$0xff]
        %v286 = vld [vmem:[%s233 + $0x158] sm:$0xff]
        %v287 = vld [vmem:[%s233 + $0x160] sm:$0xff]
        %v288 = vld [vmem:[%s233 + $0x168] sm:$0xff]
        %v289 = vld [vmem:[%s233 + $0x170] sm:$0xff]
        %v290 = vld [vmem:[%s233 + $0x178] sm:$0xff]
        %v291 = vld [vmem:[%s233 + $0x180] sm:$0xff]
        %v292 = vld [vmem:[%s233 + $0x188] sm:$0xff]
        %v293 = vld [vmem:[%s233 + $0x190] sm:$0xff]
        %v294 = vld [vmem:[%s233 + $0x198] sm:$0xff]
        %v295 = vld [vmem:[%s233 + $0x1a0] sm:$0xff]
        %v296 = vld [vmem:[%s233 + $0x1a8] sm:$0xff]
        %v297 = vld [vmem:[%s233 + $0x1b0] sm:$0xff]
        %v298 = vld [vmem:[%s233 + $0x1b8] sm:$0xff]
        %v299 = vld [vmem:[%s233 + $0x1c0] sm:$0xff]
        %v300 = vld [vmem:[%s233 + $0x1c8] sm:$0xff]
        %v301 = vld [vmem:[%s233 + $0x1d0] sm:$0xff]
        %v302 = vld [vmem:[%s233 + $0x1d8] sm:$0xff]
        %v303 = vld [vmem:[%s233 + $0x1e0] sm:$0xff]
        %v304 = vld [vmem:[%s233 + $0x1e8] sm:$0xff]
        %v305 = vld [vmem:[%s233 + $0x1f0] sm:$0xff]
        %v306 = vld [vmem:[%s233 + $0x1f8] sm:$0xff]
        %v307 = vld [vmem:[%s233 + $0x200] sm:$0xff]
        %v308 = vld [vmem:[%s233 + $0x208] sm:$0xff]
        %v309 = vld [vmem:[%s233 + $0x210] sm:$0xff]
        %v310 = vld [vmem:[%s233 + $0x218] sm:$0xff]
        %v311 = vld [vmem:[%s233 + $0x220] sm:$0xff]
        %v312 = vld [vmem:[%s233 + $0x228] sm:$0xff]
        %v313 = vld [vmem:[%s233 + $0x230] sm:$0xff]
        %v314 = vld [vmem:[%s233 + $0x238] sm:$0xff]
        %v315 = vld [vmem:[%s233 + $0x240] sm:$0xff]
        %v316 = vld [vmem:[%s233 + $0x248] sm:$0xff]
        %v317 = vld [vmem:[%s233 + $0x250] sm:$0xff]
        %v318 = vld [vmem:[%s233 + $0x258] sm:$0xff]
        %v319 = vld [vmem:[%s233 + $0x260] sm:$0xff]
        %v320 = vld [vmem:[%s233 + $0x268] sm:$0xff]
        %v321 = vld [vmem:[%s233 + $0x270] sm:$0xff]
        %v322 = vld [vmem:[%s233 + $0x278] sm:$0xff]
        %v323 = vld [vmem:[%s233 + $0x280] sm:$0xff]
        %v324 = vld [vmem:[%s233 + $0x288] sm:$0xff]
        %v325 = vld [vmem:[%s233 + $0x290] sm:$0xff]
        %v326 = vld [vmem:[%s233 + $0x298] sm:$0xff]
        %v327 = vld [vmem:[%s233 + $0x2a0] sm:$0xff]
        %v328 = vld [vmem:[%s233 + $0x2a8] sm:$0xff]
        %v329 = vld [vmem:[%s233 + $0x2b0] sm:$0xff]
        %v330 = vld [vmem:[%s233 + $0x2b8] sm:$0xff]
        %v331 = vld [vmem:[%s233 + $0x2c0] sm:$0xff]
        %v332 = vld [vmem:[%s233 + $0x2c8] sm:$0xff]
        %v333 = vld [vmem:[%s233 + $0x2d0] sm:$0xff]
        %v334 = vld [vmem:[%s233 + $0x2d8] sm:$0xff]
        %v335 = vld [vmem:[%s233 + $0x2e0] sm:$0xff]
        %v336 = vld [vmem:[%s233 + $0x2e8] sm:$0xff]
        %v337 = vld [vmem:[%s233 + $0x2f0] sm:$0xff]
        %v338 = vld [vmem:[%s233 + $0x2f8] sm:$0xff]
        %v339 = vld [vmem:[%s233 + $0x300] sm:$0xff]
        %v340 = vld [vmem:[%s233 + $0x308] sm:$0xff]
        %v341 = vld [vmem:[%s233 + $0x310] sm:$0xff]
        %v342 = vld [vmem:[%s233 + $0x318] sm:$0xff]
        %v343 = vld [vmem:[%s233 + $0x320] sm:$0xff]
        %v344 = vld [vmem:[%s233 + $0x328] sm:$0xff]
        %v345 = vld [vmem:[%s233 + $0x330] sm:$0xff]
        %v346 = vld [vmem:[%s233 + $0x338] sm:$0xff]
        %v347 = vld [vmem:[%s233 + $0x340] sm:$0xff]
        %v348 = vld [vmem:[%s233 + $0x348] sm:$0xff]
        %v349 = vld [vmem:[%s233 + $0x350] sm:$0xff]
        %v350 = vld [vmem:[%s233 + $0x358] sm:$0xff]
        %v351 = vld [vmem:[%s233 + $0x360] sm:$0xff]
        %v352 = vld [vmem:[%s233 + $0x368] sm:$0xff]
        %v353 = vld [vmem:[%s233 + $0x370] sm:$0xff]
        %v354 = vld [vmem:[%s233 + $0x378] sm:$0xff]
        %v355 = vld [vmem:[%s233 + $0x380] sm:$0xff]
        %v356 = vld [vmem:[%s233 + $0x388] sm:$0xff]
        %v357 = vld [vmem:[%s233 + $0x390] sm:$0xff]
        %v358 = vld [vmem:[%s233 + $0x398] sm:$0xff]
        %v359 = vld [vmem:[%s233 + $0x3a0] sm:$0xff]
        %v360 = vld [vmem:[%s233 + $0x3a8] sm:$0xff]
        %v361 = vld [vmem:[%s233 + $0x3b0] sm:$0xff]
        %v362 = vld [vmem:[%s233 + $0x3b8] sm:$0xff]
        %v363 = vld [vmem:[%s233 + $0x3c0] sm:$0xff]
        %v364 = vld [vmem:[%s233 + $0x3c8] sm:$0xff]
        %v365 = vld [vmem:[%s233 + $0x3d0] sm:$0xff]
        %v366 = vld [vmem:[%s233 + $0x3d8] sm:$0xff]
        %v367 = vld [vmem:[%s233 + $0x3e0] sm:$0xff]
        %v368 = vld [vmem:[%s233 + $0x3e8] sm:$0xff]
        %v369 = vld [vmem:[%s233 + $0x3f0] sm:$0xff]
        %v370 = vld [vmem:[%s233 + $0x3f8] sm:$0xff]
        %v371 = vld [vmem:[%s233 + $0x400] sm:$0xff]
        %v372 = vld [vmem:[%s233 + $0x408] sm:$0xff]
        %v373 = vld [vmem:[%s233 + $0x410] sm:$0xff]
        %v374 = vld [vmem:[%s233 + $0x418] sm:$0xff]
        %v375 = vld [vmem:[%s233 + $0x420] sm:$0xff]
        %v376 = vld [vmem:[%s233 + $0x428] sm:$0xff]
        %v377 = vld [vmem:[%s233 + $0x430] sm:$0xff]
        %v378 = vld [vmem:[%s233 + $0x438] sm:$0xff]
        %v379 = vld [vmem:[%s233 + $0x440] sm:$0xff]
        %v380 = vld [vmem:[%s233 + $0x448] sm:$0xff]
        %v381 = vld [vmem:[%s233 + $0x450] sm:$0xff]
        %v382 = vld [vmem:[%s233 + $0x458] sm:$0xff]
        %v383 = vld [vmem:[%s233 + $0x460] sm:$0xff]
        %v384 = vld [vmem:[%s233 + $0x468] sm:$0xff]
        %v385 = vld [vmem:[%s233 + $0x470] sm:$0xff]
        %v386 = vld [vmem:[%s233 + $0x478] sm:$0xff]
        %v387 = vld [vmem:[%s233 + $0x480] sm:$0xff]
        %v388 = vld [vmem:[%s233 + $0x488] sm:$0xff]
        %v389 = vld [vmem:[%s233 + $0x490] sm:$0xff]
        %v390 = vld [vmem:[%s233 + $0x498] sm:$0xff]
        %v391 = vld [vmem:[%s233 + $0x4a0] sm:$0xff]
        %v392 = vld [vmem:[%s233 + $0x4a8] sm:$0xff]
        %v393 = vld [vmem:[%s233 + $0x4b0] sm:$0xff]
        %v394 = vld [vmem:[%s233 + $0x4b8] sm:$0xff]
        %v395 = vld [vmem:[%s233 + $0x4c0] sm:$0xff]
        %v396 = vld [vmem:[%s233 + $0x4c8] sm:$0xff]
        %v397 = vld [vmem:[%s233 + $0x4d0] sm:$0xff]
        %v398 = vld [vmem:[%s233 + $0x4d8] sm:$0xff]
        %v399 = vld [vmem:[%s233 + $0x4e0] sm:$0xff]
        %v400 = vld [vmem:[%s233 + $0x4e8] sm:$0xff]
        %v401 = vld [vmem:[%s233 + $0x4f0] sm:$0xff]
        %v402 = vld [vmem:[%s233 + $0x4f8] sm:$0xff]
        %v404 = vcombine.high %v242, %v242
        %v406 = vunpack.c.l.s4 1966171168
        %v407 = vunpack.c.0.s8 %v406
        %v408 = vlaneseq
        %v409 = vshrl.u32 %v408, 7
        %v410 = vsub.s32 %v407, %v409
        %v411 = vrot.slane %v242, %v410
        %v413 = vunpack.c.l.s4 1966171168
        %v414 = vunpack.c.0.s8 %v413
        %v415 = vlaneseq
        %v416 = vshrl.u32 %v415, 7
        %v417 = vsub.s32 %v414, %v416
        %v418 = vrot.slane %v404, %v417
        %v419 = vcombine.high %v411, %v411
        %v421 = vunpack.c.l.s4 1966171168
        %v422 = vunpack.c.0.s8 %v421
        %v423 = vlaneseq
        %v424 = vshrl.u32 %v423, 7
        %v425 = vsub.s32 %v422, %v424
        %v426 = vrot.slane %v411, %v425
        %v428 = vunpack.c.l.s4 1966171168
        %v429 = vunpack.c.0.s8 %v428
        %v430 = vlaneseq
        %v431 = vshrl.u32 %v430, 7
        %v432 = vsub.s32 %v429, %v431
        %v433 = vrot.slane %v418, %v432
        %v435 = vunpack.c.l.s4 1966171168
        %v436 = vunpack.c.0.s8 %v435
        %v437 = vlaneseq
        %v438 = vshrl.u32 %v437, 7
        %v439 = vsub.s32 %v436, %v438
        %v440 = vrot.slane %v419, %v439
        %v441 = vcombine.high %v426, %v426
        %v442 = vcombine.high %v440, %v440
        %v608 = vunpack.c.l.b16 %v243
        %v609 = vunpack.c.h.b16 %v243
        %v610 = vunpack.c.l.b16 %v244
        %v611 = vunpack.c.h.b16 %v244
        %v612 = vunpack.c.l.b16 %v245
        %v613 = vunpack.c.h.b16 %v245
        %v614 = vunpack.c.l.b16 %v246
        %v615 = vunpack.c.h.b16 %v246
        %v616 = vunpack.c.l.b16 %v247
        %v617 = vunpack.c.h.b16 %v247
        %v618 = vunpack.c.l.b16 %v248
        %v619 = vunpack.c.h.b16 %v248
        %v620 = vunpack.c.l.b16 %v249
        %v621 = vunpack.c.h.b16 %v249
        %v622 = vunpack.c.l.b16 %v250
        %v623 = vunpack.c.h.b16 %v250
        %v624 = vunpack.c.l.b16 %v251
        %v625 = vunpack.c.h.b16 %v251
        %v626 = vunpack.c.l.b16 %v252
        %v627 = vunpack.c.h.b16 %v252
        %v628 = vunpack.c.l.b16 %v253
        %v629 = vunpack.c.h.b16 %v253
        %v630 = vunpack.c.l.b16 %v254
        %v631 = vunpack.c.h.b16 %v254
        %v632 = vunpack.c.l.b16 %v255
        %v633 = vunpack.c.h.b16 %v255
        %v634 = vunpack.c.l.b16 %v256
        %v635 = vunpack.c.h.b16 %v256
        %v636 = vunpack.c.l.b16 %v257
        %v637 = vunpack.c.h.b16 %v257
        %v638 = vunpack.c.l.b16 %v258
        %v639 = vunpack.c.h.b16 %v258
        %v640 = vunpack.c.l.b16 %v259
        %v641 = vunpack.c.h.b16 %v259
        %v642 = vunpack.c.l.b16 %v260
        %v643 = vunpack.c.h.b16 %v260
        %v644 = vunpack.c.l.b16 %v261
        %v645 = vunpack.c.h.b16 %v261
        %v646 = vunpack.c.l.b16 %v262
        %v647 = vunpack.c.h.b16 %v262
        %v648 = vunpack.c.l.b16 %v263
        %v649 = vunpack.c.h.b16 %v263
        %v650 = vunpack.c.l.b16 %v264
        %v651 = vunpack.c.h.b16 %v264
        %v652 = vunpack.c.l.b16 %v265
        %v653 = vunpack.c.h.b16 %v265
        %v654 = vunpack.c.l.b16 %v266
        %v655 = vunpack.c.h.b16 %v266
        %v656 = vunpack.c.l.b16 %v267
        %v657 = vunpack.c.h.b16 %v267
        %v658 = vunpack.c.l.b16 %v268
        %v659 = vunpack.c.h.b16 %v268
        %v660 = vunpack.c.l.b16 %v269
        %v661 = vunpack.c.h.b16 %v269
        %v662 = vunpack.c.l.b16 %v270
        %v663 = vunpack.c.h.b16 %v270
        %v664 = vunpack.c.l.b16 %v271
        %v665 = vunpack.c.h.b16 %v271
        %v666 = vunpack.c.l.b16 %v272
        %v667 = vunpack.c.h.b16 %v272
        %v668 = vunpack.c.l.b16 %v273
        %v669 = vunpack.c.h.b16 %v273
        %v670 = vunpack.c.l.b16 %v274
        %v671 = vunpack.c.h.b16 %v274
        %v672 = vunpack.c.l.b16 %v275
        %v673 = vunpack.c.h.b16 %v275
        %v674 = vunpack.c.l.b16 %v276
        %v675 = vunpack.c.h.b16 %v276
        %v676 = vunpack.c.l.b16 %v277
        %v677 = vunpack.c.h.b16 %v277
        %v678 = vunpack.c.l.b16 %v278
        %v679 = vunpack.c.h.b16 %v278
        %v680 = vunpack.c.l.b16 %v279
        %v681 = vunpack.c.h.b16 %v279
        %v682 = vunpack.c.l.b16 %v280
        %v683 = vunpack.c.h.b16 %v280
        %v684 = vunpack.c.l.b16 %v281
        %v685 = vunpack.c.h.b16 %v281
        %v686 = vunpack.c.l.b16 %v282
        %v687 = vunpack.c.h.b16 %v282
        %v688 = vunpack.c.l.b16 %v283
        %v689 = vunpack.c.h.b16 %v283
        %v690 = vunpack.c.l.b16 %v284
        %v691 = vunpack.c.h.b16 %v284
        %v692 = vunpack.c.l.b16 %v285
        %v693 = vunpack.c.h.b16 %v285
        %v694 = vunpack.c.l.b16 %v286
        %v695 = vunpack.c.h.b16 %v286
        %v696 = vunpack.c.l.b16 %v287
        %v697 = vunpack.c.h.b16 %v287
        %v698 = vunpack.c.l.b16 %v288
        %v699 = vunpack.c.h.b16 %v288
        %v700 = vunpack.c.l.b16 %v289
        %v701 = vunpack.c.h.b16 %v289
        %v702 = vunpack.c.l.b16 %v290
        %v703 = vunpack.c.h.b16 %v290
        %v704 = vunpack.c.l.b16 %v291
        %v705 = vunpack.c.h.b16 %v291
        %v706 = vunpack.c.l.b16 %v292
        %v707 = vunpack.c.h.b16 %v292
        %v708 = vunpack.c.l.b16 %v293
        %v709 = vunpack.c.h.b16 %v293
        %v710 = vunpack.c.l.b16 %v294
        %v711 = vunpack.c.h.b16 %v294
        %v712 = vunpack.c.l.b16 %v295
        %v713 = vunpack.c.h.b16 %v295
        %v714 = vunpack.c.l.b16 %v296
        %v715 = vunpack.c.h.b16 %v296
        %v716 = vunpack.c.l.b16 %v297
        %v717 = vunpack.c.h.b16 %v297
        %v718 = vunpack.c.l.b16 %v298
        %v719 = vunpack.c.h.b16 %v298
        %v720 = vunpack.c.l.b16 %v299
        %v721 = vunpack.c.h.b16 %v299
        %v722 = vunpack.c.l.b16 %v300
        %v723 = vunpack.c.h.b16 %v300
        %v724 = vunpack.c.l.b16 %v301
        %v725 = vunpack.c.h.b16 %v301
        %v726 = vunpack.c.l.b16 %v302
        %v727 = vunpack.c.h.b16 %v302
        %v728 = vunpack.c.l.b16 %v303
        %v729 = vunpack.c.h.b16 %v303
        %v730 = vunpack.c.l.b16 %v304
        %v731 = vunpack.c.h.b16 %v304
        %v732 = vunpack.c.l.b16 %v305
        %v733 = vunpack.c.h.b16 %v305
        %v734 = vunpack.c.l.b16 %v306
        %v735 = vunpack.c.h.b16 %v306
        %v736 = vunpack.c.l.b16 %v307
        %v737 = vunpack.c.h.b16 %v307
        %v738 = vunpack.c.l.b16 %v308
        %v739 = vunpack.c.h.b16 %v308
        %v740 = vunpack.c.l.b16 %v309
        %v741 = vunpack.c.h.b16 %v309
        %v742 = vunpack.c.l.b16 %v310
        %v743 = vunpack.c.h.b16 %v310
        %v744 = vunpack.c.l.b16 %v311
        %v745 = vunpack.c.h.b16 %v311
        %v746 = vunpack.c.l.b16 %v312
        %v747 = vunpack.c.h.b16 %v312
        %v748 = vunpack.c.l.b16 %v313
        %v749 = vunpack.c.h.b16 %v313
        %v750 = vunpack.c.l.b16 %v314
        %v751 = vunpack.c.h.b16 %v314
        %v752 = vunpack.c.l.b16 %v315
        %v753 = vunpack.c.h.b16 %v315
        %v754 = vunpack.c.l.b16 %v316
        %v755 = vunpack.c.h.b16 %v316
        %v756 = vunpack.c.l.b16 %v317
        %v757 = vunpack.c.h.b16 %v317
        %v758 = vunpack.c.l.b16 %v318
        %v759 = vunpack.c.h.b16 %v318
        %v760 = vunpack.c.l.b16 %v319
        %v761 = vunpack.c.h.b16 %v319
        %v762 = vunpack.c.l.b16 %v320
        %v763 = vunpack.c.h.b16 %v320
        %v764 = vunpack.c.l.b16 %v321
        %v765 = vunpack.c.h.b16 %v321
        %v766 = vunpack.c.l.b16 %v322
        %v767 = vunpack.c.h.b16 %v322
        %v768 = vunpack.c.l.b16 %v323
        %v769 = vunpack.c.h.b16 %v323
        %v770 = vunpack.c.l.b16 %v324
        %v771 = vunpack.c.h.b16 %v324
        %v772 = vunpack.c.l.b16 %v325
        %v773 = vunpack.c.h.b16 %v325
        %v774 = vunpack.c.l.b16 %v326
        %v775 = vunpack.c.h.b16 %v326
        %v776 = vunpack.c.l.b16 %v327
        %v777 = vunpack.c.h.b16 %v327
        %v778 = vunpack.c.l.b16 %v328
        %v779 = vunpack.c.h.b16 %v328
        %v780 = vunpack.c.l.b16 %v329
        %v781 = vunpack.c.h.b16 %v329
        %v782 = vunpack.c.l.b16 %v330
        %v783 = vunpack.c.h.b16 %v330
        %v784 = vunpack.c.l.b16 %v331
        %v785 = vunpack.c.h.b16 %v331
        %v786 = vunpack.c.l.b16 %v332
        %v787 = vunpack.c.h.b16 %v332
        %v788 = vunpack.c.l.b16 %v333
        %v789 = vunpack.c.h.b16 %v333
        %v790 = vunpack.c.l.b16 %v334
        %v791 = vunpack.c.h.b16 %v334
        %v792 = vunpack.c.l.b16 %v335
        %v793 = vunpack.c.h.b16 %v335
        %v794 = vunpack.c.l.b16 %v336
        %v795 = vunpack.c.h.b16 %v336
        %v796 = vunpack.c.l.b16 %v337
        %v797 = vunpack.c.h.b16 %v337
        %v798 = vunpack.c.l.b16 %v338
        %v799 = vunpack.c.h.b16 %v338
        %v800 = vunpack.c.l.b16 %v339
        %v801 = vunpack.c.h.b16 %v339
        %v802 = vunpack.c.l.b16 %v340
        %v803 = vunpack.c.h.b16 %v340
        %v804 = vunpack.c.l.b16 %v341
        %v805 = vunpack.c.h.b16 %v341
        %v806 = vunpack.c.l.b16 %v342
        %v807 = vunpack.c.h.b16 %v342
        %v808 = vunpack.c.l.b16 %v343
        %v809 = vunpack.c.h.b16 %v343
        %v810 = vunpack.c.l.b16 %v344
        %v811 = vunpack.c.h.b16 %v344
        %v812 = vunpack.c.l.b16 %v345
        %v813 = vunpack.c.h.b16 %v345
        %v814 = vunpack.c.l.b16 %v346
        %v815 = vunpack.c.h.b16 %v346
        %v816 = vunpack.c.l.b16 %v347
        %v817 = vunpack.c.h.b16 %v347
        %v818 = vunpack.c.l.b16 %v348
        %v819 = vunpack.c.h.b16 %v348
        %v820 = vunpack.c.l.b16 %v349
        %v821 = vunpack.c.h.b16 %v349
        %v822 = vunpack.c.l.b16 %v350
        %v823 = vunpack.c.h.b16 %v350
        %v824 = vunpack.c.l.b16 %v351
        %v825 = vunpack.c.h.b16 %v351
        %v826 = vunpack.c.l.b16 %v352
        %v827 = vunpack.c.h.b16 %v352
        %v828 = vunpack.c.l.b16 %v353
        %v829 = vunpack.c.h.b16 %v353
        %v830 = vunpack.c.l.b16 %v354
        %v831 = vunpack.c.h.b16 %v354
        %v832 = vunpack.c.l.b16 %v355
        %v833 = vunpack.c.h.b16 %v355
        %v834 = vunpack.c.l.b16 %v356
        %v835 = vunpack.c.h.b16 %v356
        %v836 = vunpack.c.l.b16 %v357
        %v837 = vunpack.c.h.b16 %v357
        %v838 = vunpack.c.l.b16 %v358
        %v839 = vunpack.c.h.b16 %v358
        %v840 = vunpack.c.l.b16 %v359
        %v841 = vunpack.c.h.b16 %v359
        %v842 = vunpack.c.l.b16 %v360
        %v843 = vunpack.c.h.b16 %v360
        %v844 = vunpack.c.l.b16 %v361
        %v845 = vunpack.c.h.b16 %v361
        %v846 = vunpack.c.l.b16 %v362
        %v847 = vunpack.c.h.b16 %v362
        %v848 = vunpack.c.l.b16 %v363
        %v849 = vunpack.c.h.b16 %v363
        %v850 = vunpack.c.l.b16 %v364
        %v851 = vunpack.c.h.b16 %v364
        %v852 = vunpack.c.l.b16 %v365
        %v853 = vunpack.c.h.b16 %v365
        %v854 = vunpack.c.l.b16 %v366
        %v855 = vunpack.c.h.b16 %v366
        %v856 = vunpack.c.l.b16 %v367
        %v857 = vunpack.c.h.b16 %v367
        %v858 = vunpack.c.l.b16 %v368
        %v859 = vunpack.c.h.b16 %v368
        %v860 = vunpack.c.l.b16 %v369
        %v861 = vunpack.c.h.b16 %v369
        %v862 = vunpack.c.l.b16 %v370
        %v863 = vunpack.c.h.b16 %v370
        %v864 = vunpack.c.l.b16 %v371
        %v865 = vunpack.c.h.b16 %v371
        %v866 = vunpack.c.l.b16 %v372
        %v867 = vunpack.c.h.b16 %v372
        %v868 = vunpack.c.l.b16 %v373
        %v869 = vunpack.c.h.b16 %v373
        %v870 = vunpack.c.l.b16 %v374
        %v871 = vunpack.c.h.b16 %v374
        %v872 = vunpack.c.l.b16 %v375
        %v873 = vunpack.c.h.b16 %v375
        %v874 = vunpack.c.l.b16 %v376
        %v875 = vunpack.c.h.b16 %v376
        %v876 = vunpack.c.l.b16 %v377
        %v877 = vunpack.c.h.b16 %v377
        %v878 = vunpack.c.l.b16 %v378
        %v879 = vunpack.c.h.b16 %v378
        %v880 = vunpack.c.l.b16 %v379
        %v881 = vunpack.c.h.b16 %v379
        %v882 = vunpack.c.l.b16 %v380
        %v883 = vunpack.c.h.b16 %v380
        %v884 = vunpack.c.l.b16 %v381
        %v885 = vunpack.c.h.b16 %v381
        %v886 = vunpack.c.l.b16 %v382
        %v887 = vunpack.c.h.b16 %v382
        %v888 = vunpack.c.l.b16 %v383
        %v889 = vunpack.c.h.b16 %v383
        %v890 = vunpack.c.l.b16 %v384
        %v891 = vunpack.c.h.b16 %v384
        %v892 = vunpack.c.l.b16 %v385
        %v893 = vunpack.c.h.b16 %v385
        %v894 = vunpack.c.l.b16 %v386
        %v895 = vunpack.c.h.b16 %v386
        %v896 = vunpack.c.l.b16 %v387
        %v897 = vunpack.c.h.b16 %v387
        %v898 = vunpack.c.l.b16 %v388
        %v899 = vunpack.c.h.b16 %v388
        %v900 = vunpack.c.l.b16 %v389
        %v901 = vunpack.c.h.b16 %v389
        %v902 = vunpack.c.l.b16 %v390
        %v903 = vunpack.c.h.b16 %v390
        %v904 = vunpack.c.l.b16 %v391
        %v905 = vunpack.c.h.b16 %v391
        %v906 = vunpack.c.l.b16 %v392
        %v907 = vunpack.c.h.b16 %v392
        %v908 = vunpack.c.l.b16 %v393
        %v909 = vunpack.c.h.b16 %v393
        %v910 = vunpack.c.l.b16 %v394
        %v911 = vunpack.c.h.b16 %v394
        %v912 = vunpack.c.l.b16 %v395
        %v913 = vunpack.c.h.b16 %v395
        %v914 = vunpack.c.l.b16 %v396
        %v915 = vunpack.c.h.b16 %v396
        %v916 = vunpack.c.l.b16 %v397
        %v917 = vunpack.c.h.b16 %v397
        %v918 = vunpack.c.l.b16 %v398
        %v919 = vunpack.c.h.b16 %v398
        %v920 = vunpack.c.l.b16 %v399
        %v921 = vunpack.c.h.b16 %v399
        %v922 = vunpack.c.l.b16 %v400
        %v923 = vunpack.c.h.b16 %v400
        %v924 = vunpack.c.l.b16 %v401
        %v925 = vunpack.c.h.b16 %v401
        %v926 = vunpack.c.l.b16 %v402
        %v927 = vunpack.c.h.b16 %v402
        %v928 = vpack.c.b16 %v612, %v608
        %v929 = vpack.c.b16 %v613, %v609
        %v930 = vpack.c.b16 %v614, %v610
        %v931 = vpack.c.b16 %v615, %v611
        %v932 = vpack.c.b16 %v620, %v616
        %v933 = vpack.c.b16 %v621, %v617
        %v934 = vpack.c.b16 %v622, %v618
        %v935 = vpack.c.b16 %v623, %v619
        %v936 = vpack.c.b16 %v628, %v624
        %v937 = vpack.c.b16 %v629, %v625
        %v938 = vpack.c.b16 %v630, %v626
        %v939 = vpack.c.b16 %v631, %v627
        %v940 = vpack.c.b16 %v636, %v632
        %v941 = vpack.c.b16 %v637, %v633
        %v942 = vpack.c.b16 %v638, %v634
        %v943 = vpack.c.b16 %v639, %v635
        %v944 = vpack.c.b16 %v644, %v640
        %v945 = vpack.c.b16 %v645, %v641
        %v946 = vpack.c.b16 %v646, %v642
        %v947 = vpack.c.b16 %v647, %v643
        %v948 = vpack.c.b16 %v652, %v648
        %v949 = vpack.c.b16 %v653, %v649
        %v950 = vpack.c.b16 %v654, %v650
        %v951 = vpack.c.b16 %v655, %v651
        %v952 = vpack.c.b16 %v660, %v656
        %v953 = vpack.c.b16 %v661, %v657
        %v954 = vpack.c.b16 %v662, %v658
        %v955 = vpack.c.b16 %v663, %v659
        %v956 = vpack.c.b16 %v668, %v664
        %v957 = vpack.c.b16 %v669, %v665
        %v958 = vpack.c.b16 %v670, %v666
        %v959 = vpack.c.b16 %v671, %v667
        %v960 = vpack.c.b16 %v676, %v672
        %v961 = vpack.c.b16 %v677, %v673
        %v962 = vpack.c.b16 %v678, %v674
        %v963 = vpack.c.b16 %v679, %v675
        %v964 = vpack.c.b16 %v684, %v680
        %v965 = vpack.c.b16 %v685, %v681
        %v966 = vpack.c.b16 %v686, %v682
        %v967 = vpack.c.b16 %v687, %v683
        %v968 = vpack.c.b16 %v692, %v688
        %v969 = vpack.c.b16 %v693, %v689
        %v970 = vpack.c.b16 %v694, %v690
        %v971 = vpack.c.b16 %v695, %v691
        %v972 = vpack.c.b16 %v700, %v696
        %v973 = vpack.c.b16 %v701, %v697
        %v974 = vpack.c.b16 %v702, %v698
        %v975 = vpack.c.b16 %v703, %v699
        %v976 = vpack.c.b16 %v708, %v704
        %v977 = vpack.c.b16 %v709, %v705
        %v978 = vpack.c.b16 %v710, %v706
        %v979 = vpack.c.b16 %v711, %v707
        %v980 = vpack.c.b16 %v716, %v712
        %v981 = vpack.c.b16 %v717, %v713
        %v982 = vpack.c.b16 %v718, %v714
        %v983 = vpack.c.b16 %v719, %v715
        %v984 = vpack.c.b16 %v724, %v720
        %v985 = vpack.c.b16 %v725, %v721
        %v986 = vpack.c.b16 %v726, %v722
        %v987 = vpack.c.b16 %v727, %v723
        %v988 = vpack.c.b16 %v732, %v728
        %v989 = vpack.c.b16 %v733, %v729
        %v990 = vpack.c.b16 %v734, %v730
        %v991 = vpack.c.b16 %v735, %v731
        %v992 = vpack.c.b16 %v740, %v736
        %v993 = vpack.c.b16 %v741, %v737
        %v994 = vpack.c.b16 %v742, %v738
        %v995 = vpack.c.b16 %v743, %v739
        %v996 = vpack.c.b16 %v748, %v744
        %v997 = vpack.c.b16 %v749, %v745
        %v998 = vpack.c.b16 %v750, %v746
        %v999 = vpack.c.b16 %v751, %v747
        %v1000 = vpack.c.b16 %v756, %v752
        %v1001 = vpack.c.b16 %v757, %v753
        %v1002 = vpack.c.b16 %v758, %v754
        %v1003 = vpack.c.b16 %v759, %v755
        %v1004 = vpack.c.b16 %v764, %v760
        %v1005 = vpack.c.b16 %v765, %v761
        %v1006 = vpack.c.b16 %v766, %v762
        %v1007 = vpack.c.b16 %v767, %v763
        %v1008 = vpack.c.b16 %v772, %v768
        %v1009 = vpack.c.b16 %v773, %v769
        %v1010 = vpack.c.b16 %v774, %v770
        %v1011 = vpack.c.b16 %v775, %v771
        %v1012 = vpack.c.b16 %v780, %v776
        %v1013 = vpack.c.b16 %v781, %v777
        %v1014 = vpack.c.b16 %v782, %v778
        %v1015 = vpack.c.b16 %v783, %v779
        %v1016 = vpack.c.b16 %v788, %v784
        %v1017 = vpack.c.b16 %v789, %v785
        %v1018 = vpack.c.b16 %v790, %v786
        %v1019 = vpack.c.b16 %v791, %v787
        %v1020 = vpack.c.b16 %v796, %v792
        %v1021 = vpack.c.b16 %v797, %v793
        %v1022 = vpack.c.b16 %v798, %v794
        %v1023 = vpack.c.b16 %v799, %v795
        %v1024 = vpack.c.b16 %v804, %v800
        %v1025 = vpack.c.b16 %v805, %v801
        %v1026 = vpack.c.b16 %v806, %v802
        %v1027 = vpack.c.b16 %v807, %v803
        %v1028 = vpack.c.b16 %v812, %v808
        %v1029 = vpack.c.b16 %v813, %v809
        %v1030 = vpack.c.b16 %v814, %v810
        %v1031 = vpack.c.b16 %v815, %v811
        %v1032 = vpack.c.b16 %v820, %v816
        %v1033 = vpack.c.b16 %v821, %v817
        %v1034 = vpack.c.b16 %v822, %v818
        %v1035 = vpack.c.b16 %v823, %v819
        %v1036 = vpack.c.b16 %v828, %v824
        %v1037 = vpack.c.b16 %v829, %v825
        %v1038 = vpack.c.b16 %v830, %v826
        %v1039 = vpack.c.b16 %v831, %v827
        %v1040 = vpack.c.b16 %v836, %v832
        %v1041 = vpack.c.b16 %v837, %v833
        %v1042 = vpack.c.b16 %v838, %v834
        %v1043 = vpack.c.b16 %v839, %v835
        %v1044 = vpack.c.b16 %v844, %v840
        %v1045 = vpack.c.b16 %v845, %v841
        %v1046 = vpack.c.b16 %v846, %v842
        %v1047 = vpack.c.b16 %v847, %v843
        %v1048 = vpack.c.b16 %v852, %v848
        %v1049 = vpack.c.b16 %v853, %v849
        %v1050 = vpack.c.b16 %v854, %v850
        %v1051 = vpack.c.b16 %v855, %v851
        %v1052 = vpack.c.b16 %v860, %v856
        %v1053 = vpack.c.b16 %v861, %v857
        %v1054 = vpack.c.b16 %v862, %v858
        %v1055 = vpack.c.b16 %v863, %v859
        %v1056 = vpack.c.b16 %v868, %v864
        %v1057 = vpack.c.b16 %v869, %v865
        %v1058 = vpack.c.b16 %v870, %v866
        %v1059 = vpack.c.b16 %v871, %v867
        %v1060 = vpack.c.b16 %v876, %v872
        %v1061 = vpack.c.b16 %v877, %v873
        %v1062 = vpack.c.b16 %v878, %v874
        %v1063 = vpack.c.b16 %v879, %v875
        %v1064 = vpack.c.b16 %v884, %v880
        %v1065 = vpack.c.b16 %v885, %v881
        %v1066 = vpack.c.b16 %v886, %v882
        %v1067 = vpack.c.b16 %v887, %v883
        %v1068 = vpack.c.b16 %v892, %v888
        %v1069 = vpack.c.b16 %v893, %v889
        %v1070 = vpack.c.b16 %v894, %v890
        %v1071 = vpack.c.b16 %v895, %v891
        %v1072 = vpack.c.b16 %v900, %v896
        %v1073 = vpack.c.b16 %v901, %v897
        %v1074 = vpack.c.b16 %v902, %v898
        %v1075 = vpack.c.b16 %v903, %v899
        %v1076 = vpack.c.b16 %v908, %v904
        %v1077 = vpack.c.b16 %v909, %v905
        %v1078 = vpack.c.b16 %v910, %v906
        %v1079 = vpack.c.b16 %v911, %v907
        %v1080 = vpack.c.b16 %v916, %v912
        %v1081 = vpack.c.b16 %v917, %v913
        %v1082 = vpack.c.b16 %v918, %v914
        %v1083 = vpack.c.b16 %v919, %v915
        %v1084 = vpack.c.b16 %v924, %v920
        %v1085 = vpack.c.b16 %v925, %v921
        %v1086 = vpack.c.b16 %v926, %v922
        %v1087 = vpack.c.b16 %v927, %v923
        %1248 = vmatprep.subr.bf16.mxu0 %v957
        %1249 = vmatpush1.bf16.msra.mxu0 %v956
        %1250 = vmatprep.subr.bf16.mxu0 %v953
        %1251 = vmatpush1.bf16.msra.mxu0 %v952
        %1252 = vmatprep.subr.bf16.mxu0 %v949
        %1253 = vmatpush1.bf16.msra.mxu0 %v948
        %1254 = vmatprep.subr.bf16.mxu0 %v945
        %1255 = vmatpush1.bf16.msra.mxu0 %v944
        %1256 = vmatprep.subr.bf16.mxu0 %v941
        %1257 = vmatpush1.bf16.msra.mxu0 %v940
        %1258 = vmatprep.subr.bf16.mxu0 %v937
        %1259 = vmatpush1.bf16.msra.mxu0 %v936
        %1260 = vmatprep.subr.bf16.mxu0 %v933
        %1261 = vmatpush1.bf16.msra.mxu0 %v932
        %1262 = vmatprep.subr.bf16.mxu0 %v929
        %1263 = vmatpush1.bf16.msra.mxu0 %v928
        %1264 = vmatprep.subr.bf16.mxu0 %v989
        %1265 = vmatpush2.bf16.msra.mxu0 %v988
        %1266 = vmatprep.subr.bf16.mxu0 %v985
        %1267 = vmatpush2.bf16.msra.mxu0 %v984
        %1268 = vmatprep.subr.bf16.mxu0 %v981
        %1269 = vmatpush2.bf16.msra.mxu0 %v980
        %1270 = vmatprep.subr.bf16.mxu0 %v977
        %1271 = vmatpush2.bf16.msra.mxu0 %v976
        %1272 = vmatprep.subr.bf16.mxu0 %v973
        %1273 = vmatpush2.bf16.msra.mxu0 %v972
        %1274 = vmatprep.subr.bf16.mxu0 %v969
        %1275 = vmatpush2.bf16.msra.mxu0 %v968
        %1276 = vmatprep.subr.bf16.mxu0 %v965
        %1277 = vmatpush2.bf16.msra.mxu0 %v964
        %1278 = vmatprep.subr.bf16.mxu0 %v961
        %1279 = vmatpush2.bf16.msra.mxu0 %v960
        %1280 = vmatprep.mubr.bf16.mxu0 %v440
        %1281 = vmatmul.mubr.bf16.gmra.mxu0 %v426
        %v1282 = vpop.f32.mrf.mxu0
        %v1283 = vadd.f32 0.0, %v1282
        %v1284 = vpop.f32.mrf.mxu0
        %v1285 = vadd.f32 0.0, %v1284
        %v1286 = vpop.f32.mrf.mxu0
        %v1287 = vpop.f32.mrf.mxu0
        %1288 = vdwg.mxu0
        %1289 = vmatprep.subr.bf16.mxu0 %v1021
        %1290 = vmatpush1.bf16.msra.mxu0 %v1020
        %1291 = vmatprep.subr.bf16.mxu0 %v1017
        %1292 = vmatpush1.bf16.msra.mxu0 %v1016
        %1293 = vmatprep.subr.bf16.mxu0 %v1013
        %1294 = vmatpush1.bf16.msra.mxu0 %v1012
        %1295 = vmatprep.subr.bf16.mxu0 %v1009
        %1296 = vmatpush1.bf16.msra.mxu0 %v1008
        %1297 = vmatprep.subr.bf16.mxu0 %v1005
        %1298 = vmatpush1.bf16.msra.mxu0 %v1004
        %1299 = vmatprep.subr.bf16.mxu0 %v1001
        %1300 = vmatpush1.bf16.msra.mxu0 %v1000
        %1301 = vmatprep.subr.bf16.mxu0 %v997
        %1302 = vmatpush1.bf16.msra.mxu0 %v996
        %1303 = vmatprep.subr.bf16.mxu0 %v993
        %1304 = vmatpush1.bf16.msra.mxu0 %v992
        %1305 = vmatprep.subr.bf16.mxu0 %v1053
        %1306 = vmatpush2.bf16.msra.mxu0 %v1052
        %1307 = vmatprep.subr.bf16.mxu0 %v1049
        %1308 = vmatpush2.bf16.msra.mxu0 %v1048
        %1309 = vmatprep.subr.bf16.mxu0 %v1045
        %1310 = vmatpush2.bf16.msra.mxu0 %v1044
        %1311 = vmatprep.subr.bf16.mxu0 %v1041
        %1312 = vmatpush2.bf16.msra.mxu0 %v1040
        %1313 = vmatprep.subr.bf16.mxu0 %v1037
        %1314 = vmatpush2.bf16.msra.mxu0 %v1036
        %1315 = vmatprep.subr.bf16.mxu0 %v1033
        %1316 = vmatpush2.bf16.msra.mxu0 %v1032
        %1317 = vmatprep.subr.bf16.mxu0 %v1029
        %1318 = vmatpush2.bf16.msra.mxu0 %v1028
        %1319 = vmatprep.subr.bf16.mxu0 %v1025
        %1320 = vmatpush2.bf16.msra.mxu0 %v1024
        %1321 = vmatprep.mubr.bf16.mxu0 %v442
        %1322 = vmatmul.mubr.bf16.gmra.mxu0 %v441
        %v1323 = vpop.f32.mrf.mxu0
        %v1324 = vadd.f32 %v1283, %v1323
        %v1325 = vpop.f32.mrf.mxu0
        %v1326 = vadd.f32 %v1285, %v1325
        %v1327 = vpop.f32.mrf.mxu0
        %v1328 = vpop.f32.mrf.mxu0
        %1329 = vdwg.mxu0
        %1330 = vmatprep.subr.bf16.mxu0 %v1085
        %1331 = vmatpush1.bf16.msra.mxu0 %v1084
        %1332 = vmatprep.subr.bf16.mxu0 %v1081
        %1333 = vmatpush1.bf16.msra.mxu0 %v1080
        %1334 = vmatprep.subr.bf16.mxu0 %v1077
        %1335 = vmatpush1.bf16.msra.mxu0 %v1076
        %1336 = vmatprep.subr.bf16.mxu0 %v1073
        %1337 = vmatpush1.bf16.msra.mxu0 %v1072
        %1338 = vmatprep.subr.bf16.mxu0 %v1069
        %1339 = vmatpush1.bf16.msra.mxu0 %v1068
        %1340 = vmatprep.subr.bf16.mxu0 %v1065
        %1341 = vmatpush1.bf16.msra.mxu0 %v1064
        %1342 = vmatprep.subr.bf16.mxu0 %v1061
        %1343 = vmatpush1.bf16.msra.mxu0 %v1060
        %1344 = vmatprep.subr.bf16.mxu0 %v1057
        %1345 = vmatpush1.bf16.msra.mxu0 %v1056
        %1346 = vmatprep.subr.bf16.mxu0 0
        %1347 = vmatpush2.bf16.msra.mxu0 0
        %1348 = vmatprep.subr.bf16.mxu0 0
        %1349 = vmatpush2.bf16.msra.mxu0 0
        %1350 = vmatprep.subr.bf16.mxu0 0
        %1351 = vmatpush2.bf16.msra.mxu0 0
        %1352 = vmatprep.subr.bf16.mxu0 0
        %1353 = vmatpush2.bf16.msra.mxu0 0
        %1354 = vmatprep.subr.bf16.mxu0 0
        %1355 = vmatpush2.bf16.msra.mxu0 0
        %1356 = vmatprep.subr.bf16.mxu0 0
        %1357 = vmatpush2.bf16.msra.mxu0 0
        %1358 = vmatprep.subr.bf16.mxu0 0
        %1359 = vmatpush2.bf16.msra.mxu0 0
        %1360 = vmatprep.subr.bf16.mxu0 0
        %1361 = vmatpush2.bf16.msra.mxu0 0
        %1362 = vmatprep.mubr.bf16.mxu0 0
        %1363 = vmatmul.mubr.bf16.gmra.mxu0 %v433
        %v1364 = vpop.f32.mrf.mxu0
        %v1365 = vadd.f32 %v1324, %v1364
        %v1366 = vpop.f32.mrf.mxu0
        %v1367 = vadd.f32 %v1326, %v1366
        %v1368 = vpop.f32.mrf.mxu0
        %v1369 = vpop.f32.mrf.mxu0
        %1370 = vdwg.mxu0
        %1371 = vmatprep.subr.bf16.mxu0 %v959
        %1372 = vmatpush1.bf16.msra.mxu0 %v958
        %1373 = vmatprep.subr.bf16.mxu0 %v955
        %1374 = vmatpush1.bf16.msra.mxu0 %v954
        %1375 = vmatprep.subr.bf16.mxu0 %v951
        %1376 = vmatpush1.bf16.msra.mxu0 %v950
        %1377 = vmatprep.subr.bf16.mxu0 %v947
        %1378 = vmatpush1.bf16.msra.mxu0 %v946
        %1379 = vmatprep.subr.bf16.mxu0 %v943
        %1380 = vmatpush1.bf16.msra.mxu0 %v942
        %1381 = vmatprep.subr.bf16.mxu0 %v939
        %1382 = vmatpush1.bf16.msra.mxu0 %v938
        %1383 = vmatprep.subr.bf16.mxu0 %v935
        %1384 = vmatpush1.bf16.msra.mxu0 %v934
        %1385 = vmatprep.subr.bf16.mxu0 %v931
        %1386 = vmatpush1.bf16.msra.mxu0 %v930
        %1387 = vmatprep.subr.bf16.mxu0 %v991
        %1388 = vmatpush2.bf16.msra.mxu0 %v990
        %1389 = vmatprep.subr.bf16.mxu0 %v987
        %1390 = vmatpush2.bf16.msra.mxu0 %v986
        %1391 = vmatprep.subr.bf16.mxu0 %v983
        %1392 = vmatpush2.bf16.msra.mxu0 %v982
        %1393 = vmatprep.subr.bf16.mxu0 %v979
        %1394 = vmatpush2.bf16.msra.mxu0 %v978
        %1395 = vmatprep.subr.bf16.mxu0 %v975
        %1396 = vmatpush2.bf16.msra.mxu0 %v974
        %1397 = vmatprep.subr.bf16.mxu0 %v971
        %1398 = vmatpush2.bf16.msra.mxu0 %v970
        %1399 = vmatprep.subr.bf16.mxu0 %v967
        %1400 = vmatpush2.bf16.msra.mxu0 %v966
        %1401 = vmatprep.subr.bf16.mxu0 %v963
        %1402 = vmatpush2.bf16.msra.mxu0 %v962
        %1403 = vmatprep.mubr.bf16.mxu0 %v440
        %1404 = vmatmul.mubr.bf16.gmra.mxu0 %v426
        %v1405 = vpop.f32.mrf.mxu0
        %v1406 = vadd.f32 0.0, %v1405
        %v1407 = vpop.f32.mrf.mxu0
        %v1408 = vadd.f32 0.0, %v1407
        %v1409 = vpop.f32.mrf.mxu0
        %v1410 = vpop.f32.mrf.mxu0
        %1411 = vdwg.mxu0
        %1412 = vmatprep.subr.bf16.mxu0 %v1023
        %1413 = vmatpush1.bf16.msra.mxu0 %v1022
        %1414 = vmatprep.subr.bf16.mxu0 %v1019
        %1415 = vmatpush1.bf16.msra.mxu0 %v1018
        %1416 = vmatprep.subr.bf16.mxu0 %v1015
        %1417 = vmatpush1.bf16.msra.mxu0 %v1014
        %1418 = vmatprep.subr.bf16.mxu0 %v1011
        %1419 = vmatpush1.bf16.msra.mxu0 %v1010
        %1420 = vmatprep.subr.bf16.mxu0 %v1007
        %1421 = vmatpush1.bf16.msra.mxu0 %v1006
        %1422 = vmatprep.subr.bf16.mxu0 %v1003
        %1423 = vmatpush1.bf16.msra.mxu0 %v1002
        %1424 = vmatprep.subr.bf16.mxu0 %v999
        %1425 = vmatpush1.bf16.msra.mxu0 %v998
        %1426 = vmatprep.subr.bf16.mxu0 %v995
        %1427 = vmatpush1.bf16.msra.mxu0 %v994
        %1428 = vmatprep.subr.bf16.mxu0 %v1055
        %1429 = vmatpush2.bf16.msra.mxu0 %v1054
        %1430 = vmatprep.subr.bf16.mxu0 %v1051
        %1431 = vmatpush2.bf16.msra.mxu0 %v1050
        %1432 = vmatprep.subr.bf16.mxu0 %v1047
        %1433 = vmatpush2.bf16.msra.mxu0 %v1046
        %1434 = vmatprep.subr.bf16.mxu0 %v1043
        %1435 = vmatpush2.bf16.msra.mxu0 %v1042
        %1436 = vmatprep.subr.bf16.mxu0 %v1039
        %1437 = vmatpush2.bf16.msra.mxu0 %v1038
        %1438 = vmatprep.subr.bf16.mxu0 %v1035
        %1439 = vmatpush2.bf16.msra.mxu0 %v1034
        %1440 = vmatprep.subr.bf16.mxu0 %v1031
        %1441 = vmatpush2.bf16.msra.mxu0 %v1030
        %1442 = vmatprep.subr.bf16.mxu0 %v1027
        %1443 = vmatpush2.bf16.msra.mxu0 %v1026
        %1444 = vmatprep.mubr.bf16.mxu0 %v442
        %1445 = vmatmul.mubr.bf16.gmra.mxu0 %v441
        %v1446 = vpop.f32.mrf.mxu0
        %v1447 = vadd.f32 %v1406, %v1446
        %v1448 = vpop.f32.mrf.mxu0
        %v1449 = vadd.f32 %v1408, %v1448
        %v1450 = vpop.f32.mrf.mxu0
        %v1451 = vpop.f32.mrf.mxu0
        %1452 = vdwg.mxu0
        %1453 = vmatprep.subr.bf16.mxu0 %v1087
        %1454 = vmatpush1.bf16.msra.mxu0 %v1086
        %1455 = vmatprep.subr.bf16.mxu0 %v1083
        %1456 = vmatpush1.bf16.msra.mxu0 %v1082
        %1457 = vmatprep.subr.bf16.mxu0 %v1079
        %1458 = vmatpush1.bf16.msra.mxu0 %v1078
        %1459 = vmatprep.subr.bf16.mxu0 %v1075
        %1460 = vmatpush1.bf16.msra.mxu0 %v1074
        %1461 = vmatprep.subr.bf16.mxu0 %v1071
        %1462 = vmatpush1.bf16.msra.mxu0 %v1070
        %1463 = vmatprep.subr.bf16.mxu0 %v1067
        %1464 = vmatpush1.bf16.msra.mxu0 %v1066
        %1465 = vmatprep.subr.bf16.mxu0 %v1063
        %1466 = vmatpush1.bf16.msra.mxu0 %v1062
        %1467 = vmatprep.subr.bf16.mxu0 %v1059
        %1468 = vmatpush1.bf16.msra.mxu0 %v1058
        %1469 = vmatprep.subr.bf16.mxu0 0
        %1470 = vmatpush2.bf16.msra.mxu0 0
        %1471 = vmatprep.subr.bf16.mxu0 0
        %1472 = vmatpush2.bf16.msra.mxu0 0
        %1473 = vmatprep.subr.bf16.mxu0 0
        %1474 = vmatpush2.bf16.msra.mxu0 0
        %1475 = vmatprep.subr.bf16.mxu0 0
        %1476 = vmatpush2.bf16.msra.mxu0 0
        %1477 = vmatprep.subr.bf16.mxu0 0
        %1478 = vmatpush2.bf16.msra.mxu0 0
        %1479 = vmatprep.subr.bf16.mxu0 0
        %1480 = vmatpush2.bf16.msra.mxu0 0
        %1481 = vmatprep.subr.bf16.mxu0 0
        %1482 = vmatpush2.bf16.msra.mxu0 0
        %1483 = vmatprep.subr.bf16.mxu0 0
        %1484 = vmatpush2.bf16.msra.mxu0 0
        %1485 = vmatprep.mubr.bf16.mxu0 0
        %1486 = vmatmul.mubr.bf16.gmra.mxu0 %v433
        %v1487 = vpop.f32.mrf.mxu0
        %v1488 = vadd.f32 %v1447, %v1487
        %v1489 = vpop.f32.mrf.mxu0
        %v1490 = vadd.f32 %v1449, %v1489
        %v1491 = vpop.f32.mrf.mxu0
        %v1492 = vpop.f32.mrf.mxu0
        %1493 = vdwg.mxu0
        %v1498 = vcombine.low %v1365, %v1367
        %v1499 = vcombine.low %v1488, %v1490
        %v1501 = vunpack.c.l.s4 1983009808
        %v1502 = vunpack.c.0.s8 %v1501
        %v1503 = vlaneseq
        %v1504 = vshrl.u32 %v1503, 7
        %v1505 = vsub.s32 %v1502, %v1504
        %v1506 = vrot.slane %v1498, %v1505
        %v1508 = vunpack.c.l.s4 1983009808
        %v1509 = vunpack.c.0.s8 %v1508
        %v1510 = vlaneseq
        %v1511 = vshrl.u32 %v1510, 7
        %v1512 = vsub.s32 %v1509, %v1511
        %v1513 = vrot.slane %v1499, %v1512
        %v1514 = vcombine.low %v1506, %v1513
        %v1516 = vadd.f32 %v241, %v1514
        %1517 = vst [vmem:[#allocation2] sm:$0xff] %v1516
        %p1518 = scmp.eq.s32.totalorder %s17, 4
        // Predicated region
        $region45: #{dqn_forward.7} parent=39 // pred_check
          %p1519 = pneg %p1518
        $region46: #{dqn_forward.7} parent=39 // pred_check_branch
          %1521 = sbr.rel (%p1519) target = $region48
        $region47: #{dqn_forward.7} parent=39 // pred_region
          %v1522 = vld [vmem:[#allocation2] sm:$0xff]
          %v1523 = vld [vmem:[%s2] sm:$0xf]
          %v1525 = vlaneseq
          %v1526 = vshrl.u32 %v1525, 7
          %v1527 = vsub.s32 0, %v1526
          %v1528 = vrot.slane %v1523, %v1527
          %v1529 = vlaneseq
          %v1530 = vshrl.u32 %v1529, 7
          %v1531 = vsub.s32 1, %v1530
          %v1532 = vrot.slane %v1523, %v1531
          %v1533 = vlaneseq
          %v1534 = vshrl.u32 %v1533, 7
          %v1535 = vsub.s32 2, %v1534
          %v1536 = vrot.slane %v1523, %v1535
          %v1537 = vlaneseq
          %v1538 = vshrl.u32 %v1537, 7
          %v1539 = vsub.s32 3, %v1538
          %v1540 = vrot.slane %v1523, %v1539
          %v1541 = vcombine.low %v1528, %v1532
          %v1542 = vcombine.low %v1536, %v1540
          %v1544 = vunpack.c.l.s4 1983009808
          %v1545 = vunpack.c.0.s8 %v1544
          %v1546 = vlaneseq
          %v1547 = vshrl.u32 %v1546, 7
          %v1548 = vsub.s32 %v1545, %v1547
          %v1549 = vrot.slane %v1541, %v1548
          %v1551 = vunpack.c.l.s4 1983009808
          %v1552 = vunpack.c.0.s8 %v1551
          %v1553 = vlaneseq
          %v1554 = vshrl.u32 %v1553, 7
          %v1555 = vsub.s32 %v1552, %v1554
          %v1556 = vrot.slane %v1542, %v1555
          %v1557 = vcombine.low %v1549, %v1556
          %v1559 = vadd.f32 %v1522, %v1557
          %v1560 = vmax.f32 %v1559, 0.0
          %v1562 = vcombine.high %v1560, %v1560
          %v1564 = vunpack.c.l.s4 1983009808
          %v1565 = vunpack.c.0.s8 %v1564
          %v1566 = vlaneseq
          %v1567 = vshrl.u32 %v1566, 7
          %v1568 = vsub.s32 %v1565, %v1567
          %v1569 = vrot.slane %v1560, %v1568
          %v1571 = vunpack.c.l.s4 1983009808
          %v1572 = vunpack.c.0.s8 %v1571
          %v1573 = vlaneseq
          %v1574 = vshrl.u32 %v1573, 7
          %v1575 = vsub.s32 %v1572, %v1574
          %v1576 = vrot.slane %v1562, %v1575
          %v1577 = vcombine.high %v1569, %v1569
          %v1578 = vcombine.high %v1576, %v1576
          %v1583 = vpack.c.bf16 %v1569, %v1569
          %v1584 = vpack.c.bf16 %v1577, %v1577
          %v1585 = vpack.c.bf16 %v1576, %v1576
          %v1586 = vpack.c.bf16 %v1578, %v1578
          %v1587 = vld [vmem:[%s3] sm:$0xf]
          %v1588 = vld [vmem:[%s3 + $0x4] sm:$0xf]
          %v1589 = vld [vmem:[%s3 + $0x8] sm:$0xf]
          %v1590 = vld [vmem:[%s3 + $0xc] sm:$0xf]
          %v1591 = vld [vmem:[%s3 + $0x10] sm:$0xf]
          %v1592 = vld [vmem:[%s3 + $0x14] sm:$0xf]
          %v1593 = vld [vmem:[%s3 + $0x18] sm:$0xf]
          %v1594 = vld [vmem:[%s3 + $0x1c] sm:$0xf]
          %v1595 = vld [vmem:[%s3 + $0x20] sm:$0xf]
          %v1596 = vld [vmem:[%s3 + $0x24] sm:$0xf]
          %v1597 = vld [vmem:[%s3 + $0x28] sm:$0xf]
          %v1598 = vld [vmem:[%s3 + $0x2c] sm:$0xf]
          %v1599 = vld [vmem:[%s3 + $0x30] sm:$0xf]
          %v1600 = vld [vmem:[%s3 + $0x34] sm:$0xf]
          %v1601 = vld [vmem:[%s3 + $0x38] sm:$0xf]
          %v1602 = vld [vmem:[%s3 + $0x3c] sm:$0xf]
          %v1603 = vld [vmem:[%s3 + $0x40] sm:$0xf]
          %v1604 = vld [vmem:[%s3 + $0x44] sm:$0xf]
          %v1605 = vld [vmem:[%s3 + $0x48] sm:$0xf]
          %v1606 = vld [vmem:[%s3 + $0x4c] sm:$0xf]
          %v1607 = vld [vmem:[%s3 + $0x50] sm:$0xf]
          %v1608 = vld [vmem:[%s3 + $0x54] sm:$0xf]
          %v1609 = vld [vmem:[%s3 + $0x58] sm:$0xf]
          %v1610 = vld [vmem:[%s3 + $0x5c] sm:$0xf]
          %v1611 = vld [vmem:[%s3 + $0x60] sm:$0xf]
          %v1612 = vld [vmem:[%s3 + $0x64] sm:$0xf]
          %v1613 = vld [vmem:[%s3 + $0x68] sm:$0xf]
          %v1614 = vld [vmem:[%s3 + $0x6c] sm:$0xf]
          %v1615 = vld [vmem:[%s3 + $0x70] sm:$0xf]
          %v1616 = vld [vmem:[%s3 + $0x74] sm:$0xf]
          %v1617 = vld [vmem:[%s3 + $0x78] sm:$0xf]
          %v1618 = vld [vmem:[%s3 + $0x7c] sm:$0xf]
          %v1619 = vld [vmem:[%s3 + $0x80] sm:$0xf]
          %v1620 = vld [vmem:[%s3 + $0x84] sm:$0xf]
          %v1621 = vld [vmem:[%s3 + $0x88] sm:$0xf]
          %v1622 = vld [vmem:[%s3 + $0x8c] sm:$0xf]
          %v1623 = vld [vmem:[%s3 + $0x90] sm:$0xf]
          %v1624 = vld [vmem:[%s3 + $0x94] sm:$0xf]
          %v1625 = vld [vmem:[%s3 + $0x98] sm:$0xf]
          %v1626 = vld [vmem:[%s3 + $0x9c] sm:$0xf]
          %v1627 = vld [vmem:[%s3 + $0xa0] sm:$0xf]
          %v1628 = vld [vmem:[%s3 + $0xa4] sm:$0xf]
          %v1629 = vld [vmem:[%s3 + $0xa8] sm:$0xf]
          %v1630 = vld [vmem:[%s3 + $0xac] sm:$0xf]
          %v1631 = vld [vmem:[%s3 + $0xb0] sm:$0xf]
          %v1632 = vld [vmem:[%s3 + $0xb4] sm:$0xf]
          %v1633 = vld [vmem:[%s3 + $0xb8] sm:$0xf]
          %v1634 = vld [vmem:[%s3 + $0xbc] sm:$0xf]
          %v1635 = vld [vmem:[%s3 + $0xc0] sm:$0xf]
          %v1636 = vld [vmem:[%s3 + $0xc4] sm:$0xf]
          %v1637 = vld [vmem:[%s3 + $0xc8] sm:$0xf]
          %v1638 = vld [vmem:[%s3 + $0xcc] sm:$0xf]
          %v1639 = vld [vmem:[%s3 + $0xd0] sm:$0xf]
          %v1640 = vld [vmem:[%s3 + $0xd4] sm:$0xf]
          %v1641 = vld [vmem:[%s3 + $0xd8] sm:$0xf]
          %v1642 = vld [vmem:[%s3 + $0xdc] sm:$0xf]
          %v1643 = vld [vmem:[%s3 + $0xe0] sm:$0xf]
          %v1644 = vld [vmem:[%s3 + $0xe4] sm:$0xf]
          %v1645 = vld [vmem:[%s3 + $0xe8] sm:$0xf]
          %v1646 = vld [vmem:[%s3 + $0xec] sm:$0xf]
          %v1647 = vld [vmem:[%s3 + $0xf0] sm:$0xf]
          %v1648 = vld [vmem:[%s3 + $0xf4] sm:$0xf]
          %v1649 = vld [vmem:[%s3 + $0xf8] sm:$0xf]
          %v1650 = vld [vmem:[%s3 + $0xfc] sm:$0xf]
          %v1651 = vld [vmem:[%s4] sm:$0x1]
          %v1653 = vlaneseq
          %v1654 = vshrl.u32 %v1653, 7
          %v1655 = vsub.s32 0, %v1654
          %v1656 = vrot.slane %v1651, %v1655
          %v1722 = vunpack.c.l.b16 %v1587
          %v1723 = vunpack.c.l.b16 %v1588
          %v1724 = vunpack.c.l.b16 %v1589
          %v1725 = vunpack.c.l.b16 %v1590
          %v1726 = vunpack.c.l.b16 %v1591
          %v1727 = vunpack.c.l.b16 %v1592
          %v1728 = vunpack.c.l.b16 %v1593
          %v1729 = vunpack.c.l.b16 %v1594
          %v1730 = vunpack.c.l.b16 %v1595
          %v1731 = vunpack.c.l.b16 %v1596
          %v1732 = vunpack.c.l.b16 %v1597
          %v1733 = vunpack.c.l.b16 %v1598
          %v1734 = vunpack.c.l.b16 %v1599
          %v1735 = vunpack.c.l.b16 %v1600
          %v1736 = vunpack.c.l.b16 %v1601
          %v1737 = vunpack.c.l.b16 %v1602
          %v1738 = vunpack.c.l.b16 %v1603
          %v1739 = vunpack.c.l.b16 %v1604
          %v1740 = vunpack.c.l.b16 %v1605
          %v1741 = vunpack.c.l.b16 %v1606
          %v1742 = vunpack.c.l.b16 %v1607
          %v1743 = vunpack.c.l.b16 %v1608
          %v1744 = vunpack.c.l.b16 %v1609
          %v1745 = vunpack.c.l.b16 %v1610
          %v1746 = vunpack.c.l.b16 %v1611
          %v1747 = vunpack.c.l.b16 %v1612
          %v1748 = vunpack.c.l.b16 %v1613
          %v1749 = vunpack.c.l.b16 %v1614
          %v1750 = vunpack.c.l.b16 %v1615
          %v1751 = vunpack.c.l.b16 %v1616
          %v1752 = vunpack.c.l.b16 %v1617
          %v1753 = vunpack.c.l.b16 %v1618
          %v1754 = vunpack.c.l.b16 %v1619
          %v1755 = vunpack.c.l.b16 %v1620
          %v1756 = vunpack.c.l.b16 %v1621
          %v1757 = vunpack.c.l.b16 %v1622
          %v1758 = vunpack.c.l.b16 %v1623
          %v1759 = vunpack.c.l.b16 %v1624
          %v1760 = vunpack.c.l.b16 %v1625
          %v1761 = vunpack.c.l.b16 %v1626
          %v1762 = vunpack.c.l.b16 %v1627
          %v1763 = vunpack.c.l.b16 %v1628
          %v1764 = vunpack.c.l.b16 %v1629
          %v1765 = vunpack.c.l.b16 %v1630
          %v1766 = vunpack.c.l.b16 %v1631
          %v1767 = vunpack.c.l.b16 %v1632
          %v1768 = vunpack.c.l.b16 %v1633
          %v1769 = vunpack.c.l.b16 %v1634
          %v1770 = vunpack.c.l.b16 %v1635
          %v1771 = vunpack.c.l.b16 %v1636
          %v1772 = vunpack.c.l.b16 %v1637
          %v1773 = vunpack.c.l.b16 %v1638
          %v1774 = vunpack.c.l.b16 %v1639
          %v1775 = vunpack.c.l.b16 %v1640
          %v1776 = vunpack.c.l.b16 %v1641
          %v1777 = vunpack.c.l.b16 %v1642
          %v1778 = vunpack.c.l.b16 %v1643
          %v1779 = vunpack.c.l.b16 %v1644
          %v1780 = vunpack.c.l.b16 %v1645
          %v1781 = vunpack.c.l.b16 %v1646
          %v1782 = vunpack.c.l.b16 %v1647
          %v1783 = vunpack.c.l.b16 %v1648
          %v1784 = vunpack.c.l.b16 %v1649
          %v1785 = vunpack.c.l.b16 %v1650
          %v1786 = vpack.c.b16 %v1723, %v1722
          %v1787 = vpack.c.b16 %v1725, %v1724
          %v1788 = vpack.c.b16 %v1727, %v1726
          %v1789 = vpack.c.b16 %v1729, %v1728
          %v1790 = vpack.c.b16 %v1731, %v1730
          %v1791 = vpack.c.b16 %v1733, %v1732
          %v1792 = vpack.c.b16 %v1735, %v1734
          %v1793 = vpack.c.b16 %v1737, %v1736
          %v1794 = vpack.c.b16 %v1739, %v1738
          %v1795 = vpack.c.b16 %v1741, %v1740
          %v1796 = vpack.c.b16 %v1743, %v1742
          %v1797 = vpack.c.b16 %v1745, %v1744
          %v1798 = vpack.c.b16 %v1747, %v1746
          %v1799 = vpack.c.b16 %v1749, %v1748
          %v1800 = vpack.c.b16 %v1751, %v1750
          %v1801 = vpack.c.b16 %v1753, %v1752
          %v1802 = vpack.c.b16 %v1755, %v1754
          %v1803 = vpack.c.b16 %v1757, %v1756
          %v1804 = vpack.c.b16 %v1759, %v1758
          %v1805 = vpack.c.b16 %v1761, %v1760
          %v1806 = vpack.c.b16 %v1763, %v1762
          %v1807 = vpack.c.b16 %v1765, %v1764
          %v1808 = vpack.c.b16 %v1767, %v1766
          %v1809 = vpack.c.b16 %v1769, %v1768
          %v1810 = vpack.c.b16 %v1771, %v1770
          %v1811 = vpack.c.b16 %v1773, %v1772
          %v1812 = vpack.c.b16 %v1775, %v1774
          %v1813 = vpack.c.b16 %v1777, %v1776
          %v1814 = vpack.c.b16 %v1779, %v1778
          %v1815 = vpack.c.b16 %v1781, %v1780
          %v1816 = vpack.c.b16 %v1783, %v1782
          %v1817 = vpack.c.b16 %v1785, %v1784
          %1850 = vmatprep.subr.bf16.mxu0 0
          %1851 = vmatpush1.bf16.msra.mxu0 %v1793
          %1852 = vmatprep.subr.bf16.mxu0 0
          %1853 = vmatpush1.bf16.msra.mxu0 %v1792
          %1854 = vmatprep.subr.bf16.mxu0 0
          %1855 = vmatpush1.bf16.msra.mxu0 %v1791
          %1856 = vmatprep.subr.bf16.mxu0 0
          %1857 = vmatpush1.bf16.msra.mxu0 %v1790
          %1858 = vmatprep.subr.bf16.mxu0 0
          %1859 = vmatpush1.bf16.msra.mxu0 %v1789
          %1860 = vmatprep.subr.bf16.mxu0 0
          %1861 = vmatpush1.bf16.msra.mxu0 %v1788
          %1862 = vmatprep.subr.bf16.mxu0 0
          %1863 = vmatpush1.bf16.msra.mxu0 %v1787
          %1864 = vmatprep.subr.bf16.mxu0 0
          %1865 = vmatpush1.bf16.msra.mxu0 %v1786
          %1866 = vmatprep.subr.bf16.mxu0 0
          %1867 = vmatpush2.bf16.msra.mxu0 %v1801
          %1868 = vmatprep.subr.bf16.mxu0 0
          %1869 = vmatpush2.bf16.msra.mxu0 %v1800
          %1870 = vmatprep.subr.bf16.mxu0 0
          %1871 = vmatpush2.bf16.msra.mxu0 %v1799
          %1872 = vmatprep.subr.bf16.mxu0 0
          %1873 = vmatpush2.bf16.msra.mxu0 %v1798
          %1874 = vmatprep.subr.bf16.mxu0 0
          %1875 = vmatpush2.bf16.msra.mxu0 %v1797
          %1876 = vmatprep.subr.bf16.mxu0 0
          %1877 = vmatpush2.bf16.msra.mxu0 %v1796
          %1878 = vmatprep.subr.bf16.mxu0 0
          %1879 = vmatpush2.bf16.msra.mxu0 %v1795
          %1880 = vmatprep.subr.bf16.mxu0 0
          %1881 = vmatpush2.bf16.msra.mxu0 %v1794
          %1882 = vmatprep.mubr.bf16.mxu0 %v1584
          %1883 = vmatmul.mubr.bf16.gmra.mxu0 %v1583
          %v1884 = vpop.f32.mrf.mxu0
          %v1885 = vadd.f32 %v1656, %v1884
          %v1886 = vpop.f32.mrf.mxu0
          %v1887 = vpop.f32.mrf.mxu0
          %v1888 = vpop.f32.mrf.mxu0
          %1889 = vdwg.mxu0
          %1890 = vmatprep.subr.bf16.mxu0 0
          %1891 = vmatpush1.bf16.msra.mxu0 %v1809
          %1892 = vmatprep.subr.bf16.mxu0 0
          %1893 = vmatpush1.bf16.msra.mxu0 %v1808
          %1894 = vmatprep.subr.bf16.mxu0 0
          %1895 = vmatpush1.bf16.msra.mxu0 %v1807
          %1896 = vmatprep.subr.bf16.mxu0 0
          %1897 = vmatpush1.bf16.msra.mxu0 %v1806
          %1898 = vmatprep.subr.bf16.mxu0 0
          %1899 = vmatpush1.bf16.msra.mxu0 %v1805
          %1900 = vmatprep.subr.bf16.mxu0 0
          %1901 = vmatpush1.bf16.msra.mxu0 %v1804
          %1902 = vmatprep.subr.bf16.mxu0 0
          %1903 = vmatpush1.bf16.msra.mxu0 %v1803
          %1904 = vmatprep.subr.bf16.mxu0 0
          %1905 = vmatpush1.bf16.msra.mxu0 %v1802
          %1906 = vmatprep.subr.bf16.mxu0 0
          %1907 = vmatpush2.bf16.msra.mxu0 %v1817
          %1908 = vmatprep.subr.bf16.mxu0 0
          %1909 = vmatpush2.bf16.msra.mxu0 %v1816
          %1910 = vmatprep.subr.bf16.mxu0 0
          %1911 = vmatpush2.bf16.msra.mxu0 %v1815
          %1912 = vmatprep.subr.bf16.mxu0 0
          %1913 = vmatpush2.bf16.msra.mxu0 %v1814
          %1914 = vmatprep.subr.bf16.mxu0 0
          %1915 = vmatpush2.bf16.msra.mxu0 %v1813
          %1916 = vmatprep.subr.bf16.mxu0 0
          %1917 = vmatpush2.bf16.msra.mxu0 %v1812
          %1918 = vmatprep.subr.bf16.mxu0 0
          %1919 = vmatpush2.bf16.msra.mxu0 %v1811
          %1920 = vmatprep.subr.bf16.mxu0 0
          %1921 = vmatpush2.bf16.msra.mxu0 %v1810
          %1922 = vmatprep.mubr.bf16.mxu0 %v1586
          %1923 = vmatmul.mubr.bf16.gmra.mxu0 %v1585
          %v1924 = vpop.f32.mrf.mxu0
          %v1925 = vadd.f32 %v1885, %v1924
          %v1926 = vpop.f32.mrf.mxu0
          %v1927 = vpop.f32.mrf.mxu0
          %v1928 = vpop.f32.mrf.mxu0
          %1929 = vdwg.mxu0
          %1930 = vst [vmem:[#allocation3] sm:$0x3] %v1925
        $region48: #{dqn_forward.7} parent=39 // pred_fallthru
          _
        // Predicated region
        $region49: #{dqn_forward.7} parent=39 // pred_check
          %p1931 = pneg %p145
        $region50: #{dqn_forward.7} parent=39 // pred_check_branch
          %1933 = sbr.rel (%p1931) target = $region52
        $region51: #{dqn_forward.7} parent=39 // pred_region
          %s1935 = ssub.s32 32, 32
          %1936 = vsyncadd [#allocation4], %s1935
          %s1938 = sshll.u32 [#allocation3], 4
          %s1939 = int_to_ptr.vmem [resolvable:$true] %s1938
          %1941 = dma.vmem_to_hbm [thread:$0]  %s1939, 32, %s5, [#allocation4]
        $region52: #{dqn_forward.7} parent=39 // pred_fallthru
          _
        // Predicated region
        $region53: #{dqn_forward.7} parent=39 // pred_check
          %p1942 = pneg %p145
        $region54: #{dqn_forward.7} parent=39 // pred_check_branch
          %1944 = sbr.rel (%p1942) target = $region56
        $region55: #{dqn_forward.7} parent=39 // pred_region
          %1945 = dma.done [#allocation4], 32
        $region56: #{dqn_forward.7} parent=39 // pred_fallthru
          _
      $region40: #{dqn_forward.7} parent=5 // pred_fallthru
        _
      %p1946 = scmp.le.s32.totalorder 2, %s12
      // Predicated region
      $region57: #{dqn_forward.7} parent=5 // pred_check
        %p1947 = pneg %p1946
      $region58: #{dqn_forward.7} parent=5 // pred_check_branch
        %1949 = sbr.rel (%p1947) target = $region60
      $region59: #{dqn_forward.7} parent=5 // pred_region
        %s1950 = ssub.s32 %s12, 2
      $region60: #{dqn_forward.7} parent=5 // pred_fallthru
        _
    $region6: #{dqn_forward.7} parent=1 // loop_footer
      %s16 = sadd.s32 1, %s12
    $region7: #{dqn_forward.7} parent=1 // loop_footer_branch
      %11 = sbr.rel target = $region3
    $region8: #{dqn_forward.7} parent=1 // loop_exit
      _
    %1951 = vsyncpa [#allocation4], 1
    %s1952 = scalar_lea.sflag [#allocation4], 1
    %1953 = vsyncpa %s1952, 1

</llo_original>
